<compile_context>
chip_gen: v6e
topology: v6e:2x2x1
jax: 0.10.0
libtpu: 0.0.40
codegen_flags: <defaults>
</compile_context>

<pallas_src>
import functools

import jax
import jax.numpy as jnp
from jax.experimental import pallas as pl
from jax.experimental.pallas import tpu as pltpu


def chief_kernel(gated_dtype,
                 n_ref,                                        # scalar prefetch (SMEM)
                 h_ref, w1_ref, b1_ref, wab_ref, bab_ref, wc_ref, bc_ref,
                 scores_ref, tiles_ref, slide_ref, wsi_t_ref,
                 acc_h_ref, acc_h1_ref, m_ref, l_ref):
    i = pl.program_id(0)
    tm = h_ref.shape[0]

    @pl.when(i == 0)
    def _init():
        m_ref[...] = jnp.full(m_ref.shape, -jnp.inf, m_ref.dtype)
        l_ref[...] = jnp.zeros(l_ref.shape, l_ref.dtype)
        acc_h_ref[...] = jnp.zeros(acc_h_ref.shape, acc_h_ref.dtype)
        acc_h1_ref[...] = jnp.zeros(acc_h1_ref.shape, acc_h1_ref.dtype)

    h_bf = h_ref[...]                                          # (tm, F) bf16

    # attention_net fc: Linear + ReLU (Dropout == identity at inference).
    h1 = jnp.dot(h_bf, w1_ref[...],
                 preferred_element_type=jnp.float32) + b1_ref[...]
    h1_bf = jnp.maximum(h1, 0.0).astype(jnp.bfloat16)          # single live copy (tm, L)

    # Attn_Net_Gated: a/b branches fused into one (L, 2D) matmul; gate in
    # bf16 on v6e/v7x (bf16 EUP/VPU), f32 on v5e.
    ab = (jnp.dot(h1_bf, wab_ref[...], preferred_element_type=jnp.float32)
          + bab_ref[...]).astype(gated_dtype)                  # (tm, 2D)
    d = wc_ref.shape[-1]
    gated = jnp.tanh(ab[:, :d]) * jax.nn.sigmoid(ab[:, d:])    # (tm, D)

    # attention_c: Linear(D, 1) as a lane reduction with f32 accumulation
    # (no 1-wide MXU matmul).
    scores = (jnp.sum(gated * wc_ref[...].astype(gated_dtype), axis=-1,
                      keepdims=True, dtype=jnp.float32)
              + bc_ref[0])                                     # (tm, 1) f32

    # Per-block outputs (A_raw transpose happens outside the kernel).
    scores_ref[...] = scores                                   # (tm, 1) f32
    tiles_ref[...] = h1_bf                                     # (tm, L) bf16

    # Mask padded rows out of the softmax / pooling.
    row = i * tm + jax.lax.broadcasted_iota(jnp.int32, (tm, 1), 0)
    s_m = jnp.where(row < n_ref[0], scores, -jnp.inf)

    # Online (flash-style) softmax accumulation over the tile axis.
    m_old = m_ref[...]                                         # (1, 1)
    m_new = jnp.maximum(m_old, jnp.max(s_m, axis=0, keepdims=True))
    alpha = jnp.exp(m_old - m_new)                             # (1, 1)
    p = jnp.exp(s_m - m_new)                                   # (tm, 1) f32
    p_bf = p.astype(jnp.bfloat16)
    m_ref[...] = m_new
    l_ref[...] = alpha * l_ref[...] + jnp.sum(p, axis=0, keepdims=True)

    # MXU contraction over the row axis: (tm,1)^T @ (tm,F) -> (1,F); keeps the
    # VPU/XLU free and avoids any f32 copy of h / h1.
    dim_nums = (((0,), (0,)), ((), ()))
    acc_h_ref[...] = alpha * acc_h_ref[...] + jax.lax.dot_general(
        p_bf, h_bf, dim_nums, preferred_element_type=jnp.float32)
    acc_h1_ref[...] = alpha * acc_h1_ref[...] + jax.lax.dot_general(
        p_bf, h1_bf, dim_nums, preferred_element_type=jnp.float32)

    @pl.when(i == pl.num_programs(0) - 1)
    def _finalize():
        inv_l = pl.reciprocal(l_ref[...], approx=False)
        slide_ref[...] = acc_h_ref[...] * inv_l                # (1, F)
        wsi_t_ref[...] = acc_h1_ref[...] * inv_l               # (1, L)


def _round_up(x, m):
    return (x + m - 1) // m * m


def _default_gated_dtype():
    """bf16 gate on chips with bf16 VPU/EUP (v6e, v7x); f32 on v5e and older."""
    try:
        kind = jax.devices()[0].device_kind.lower()
    except Exception:
        return jnp.float32
    return jnp.bfloat16 if ("v6" in kind or "v7" in kind) else jnp.float32


def _default_vmem_limit_bytes():
    """~75% of physical VMEM, capped at 64 MiB (48 MiB on 64-MiB v7x)."""
    try:
        cap = pltpu.get_tpu_info().vmem_capacity_bytes
    except Exception:
        cap = 128 << 20
    return int(min(64 << 20, cap * 3 // 4))


def chief_forward(h, params, *, block_rows=1024, bucket_blocks=True,
                  gated_dtype=None, vmem_limit_bytes=None):
    """CHIEFModel.forward. `h` is (N, FEATURE_DIM) f32 (cast to bf16 at the
    boundary); `params` is the dict from `prepare_params`.
    Note: tile_features_transformed is returned in bf16."""
    n, f = h.shape
    l = params["w1"].shape[1]
    d = params["wc"].shape[1]

    if gated_dtype is None:
        gated_dtype = _default_gated_dtype()
    if vmem_limit_bytes is None:
        vmem_limit_bytes = _default_vmem_limit_bytes()

    tm = _round_up(min(block_rows, n), 16)
    nb = pl.cdiv(n, tm)
    if bucket_blocks:
        nb = pl.next_power_of_2(nb)      # one compile serves a range of slide sizes
    n_pad = nb * tm

    h_bf = h.astype(jnp.bfloat16)
    if n_pad != n:
        h_bf = jnp.pad(h_bf, ((0, n_pad - n), (0, 0)))

    grid_spec = pltpu.PrefetchScalarGridSpec(
        num_scalar_prefetch=1,                              # n_valid (SMEM scalar)
        grid=(nb,),
        in_specs=[
            pl.BlockSpec((tm, f), lambda i, n_: (i, 0)),    # h row block (bf16)
            pl.BlockSpec((f, l), lambda i, n_: (0, 0)),     # W1   (resident)
            pl.BlockSpec((1, l), lambda i, n_: (0, 0)),     # b1
            pl.BlockSpec((l, 2 * d), lambda i, n_: (0, 0)), # [Wa | Wb] (resident)
            pl.BlockSpec((1, 2 * d), lambda i, n_: (0, 0)), # [ba | bb]
            pl.BlockSpec((1, d), lambda i, n_: (0, 0)),     # Wc row
            pl.BlockSpec(memory_space=pltpu.MemorySpace.SMEM),  # bc scalar
        ],
        out_specs=[
            pl.BlockSpec((tm, 1), lambda i, n_: (i, 0)),    # attention logits (N,1)
            pl.BlockSpec((tm, l), lambda i, n_: (i, 0)),    # tile features (N,L) bf16
            pl.BlockSpec((1, f), lambda i, n_: (0, 0)),     # P @ h   (resident acc)
            pl.BlockSpec((1, l), lambda i, n_: (0, 0)),     # P @ h1  (resident acc)
        ],
        scratch_shapes=[
            pltpu.VMEM((1, f), jnp.float32),    # running sum of p * h
            pltpu.VMEM((1, l), jnp.float32),    # running sum of p * h1
            pltpu.VMEM((1, 1), jnp.float32),    # running max
            pltpu.VMEM((1, 1), jnp.float32),    # running denom
        ],
    )

    out_shapes = (
        jax.ShapeDtypeStruct((n_pad, 1), jnp.float32),
        jax.ShapeDtypeStruct((n_pad, l), jnp.bfloat16),     # bf16: dominant HBM stream
        jax.ShapeDtypeStruct((1, f), jnp.float32),
        jax.ShapeDtypeStruct((1, l), jnp.float32),
    )

    n_valid = jnp.asarray([n], dtype=jnp.int32)

    scores, tiles, slide, wsi_t = pl.pallas_call(
        functools.partial(chief_kernel, gated_dtype),
        out_shape=out_shapes,
        grid_spec=grid_spec,
        compiler_params=pltpu.CompilerParams(
            dimension_semantics=("arbitrary",),   # online-softmax accumulation axis
            vmem_limit_bytes=vmem_limit_bytes,
        ),
    )(n_valid, h_bf, params["w1"], params["b1"], params["wab"], params["bab"],
      params["wc"], params["bc"])

    return {
        "attention_raw": scores[:n].T,             # (1, N) — transpose done by XLA
        "WSI_feature": slide,                      # (1, F) slide embeddings
        "WSI_feature_transformed": wsi_t,          # (1, L)
        "tile_features_transformed": tiles[:n],    # (N, L) bf16
    }


def init_params(key, feature_dim, hidden_dim, att_dim):
    """xavier_normal weights / zero biases (matches initialize_weights), stored (in, out)."""
    def xavier(k, fan_in, fan_out):
        std = (2.0 / (fan_in + fan_out)) ** 0.5
        return std * jax.random.normal(k, (fan_in, fan_out), dtype=jnp.float32)

    k1, ka, kb, kc = jax.random.split(key, 4)
    return {
        "w1": xavier(k1, feature_dim, hidden_dim),
        "b1": jnp.zeros((1, hidden_dim), jnp.float32),
        "wa": xavier(ka, hidden_dim, att_dim),
        "ba": jnp.zeros((1, att_dim), jnp.float32),
        "wb": xavier(kb, hidden_dim, att_dim),
        "bb": jnp.zeros((1, att_dim), jnp.float32),
        "wc": xavier(kc, att_dim, 1).T,            # (1, D)
        "bc": jnp.zeros((1,), jnp.float32),
    }


def prepare_params(p):
    """Fuse Wa|Wb and cast MXU operands to bf16 (accumulation stays f32)."""
    return {
        "w1": p["w1"].astype(jnp.bfloat16),
        "b1": p["b1"],
        "wab": jnp.concatenate([p["wa"], p["wb"]], axis=1).astype(jnp.bfloat16),
        "bab": jnp.concatenate([p["ba"], p["bb"]], axis=1),
        "wc": p["wc"],
        "bc": p["bc"],
    }


def chief_reference(h, params, *, gated_dtype=jnp.float32):
    """Pure-JAX reference with the same bf16-operand / f32-accumulate policy."""
    hb = h.astype(jnp.bfloat16)
    h1 = jnp.dot(hb, params["w1"], preferred_element_type=jnp.float32) + params["b1"]
    h1_bf = jnp.maximum(h1, 0.0).astype(jnp.bfloat16)
    ab = (jnp.dot(h1_bf, params["wab"], preferred_element_type=jnp.float32)
          + params["bab"]).astype(gated_dtype)
    d = params["wc"].shape[1]
    gated = jnp.tanh(ab[:, :d]) * jax.nn.sigmoid(ab[:, d:])
    scores = (jnp.sum(gated * params["wc"].astype(gated_dtype), axis=-1,
                      keepdims=True, dtype=jnp.float32) + params["bc"][0])
    a_raw = scores.T
    prob = jax.nn.softmax(a_raw, axis=1)
    return {
        "attention_raw": a_raw,
        "WSI_feature": prob @ hb.astype(jnp.float32),
        "WSI_feature_transformed": prob @ h1_bf.astype(jnp.float32),
        "tile_features_transformed": h1_bf,
    }


if __name__ == "__main__":
    # size_arg='xs' -> [FEATURE_DIM, HIDDEN, ATT] = [384, 256, 256]
    FEATURE_DIM, HIDDEN_DIM, ATT_DIM = 384, 256, 256

    key = jax.random.PRNGKey(0)
    k_h, k_p = jax.random.split(key)
    raw = init_params(k_p, FEATURE_DIM, HIDDEN_DIM, ATT_DIM)
    # Perturb biases so the bias code paths are exercised (initialize_weights
    # zeros them, which would make bias bugs invisible to the check).
    kb1, kba, kbb, kbc = jax.random.split(jax.random.fold_in(k_p, 1), 4)
    raw["b1"] = 0.05 * jax.random.normal(kb1, raw["b1"].shape, jnp.float32)
    raw["ba"] = 0.05 * jax.random.normal(kba, raw["ba"].shape, jnp.float32)
    raw["bb"] = 0.05 * jax.random.normal(kbb, raw["bb"].shape, jnp.float32)
    raw["bc"] = 0.05 * jax.random.normal(kbc, raw["bc"].shape, jnp.float32)
    params = prepare_params(raw)

    gd = _default_gated_dtype()

    # (1024, 256): exercises a multi-block grid + online softmax across blocks.
    # (1000, 1024): exercises the padded / masked last block at the default
    #               (perf-optimal) block size.
    for n_tiles, block_rows in ((1024, 256), (1000, 1024)):
        h = jax.random.normal(jax.random.fold_in(k_h, n_tiles),
                              (n_tiles, FEATURE_DIM), dtype=jnp.float32)
        out = chief_forward(h, params, block_rows=block_rows, gated_dtype=gd)
        jax.block_until_ready(out)

        ref = chief_reference(h, params, gated_dtype=gd)
        for name in out:
            assert out[name].shape == ref[name].shape, (name, out[name].shape, ref[name].shape)
            assert jnp.allclose(out[name], ref[name], atol=1e-2, rtol=1e-2), name

    print("KERNEL_OK")
</pallas_src>

<mosaic_0001>
module attributes {stable_mosaic.version = 11 : i64} {
  func.func @chief_kernel(%arg0: i32, %arg1: memref<1xi32, #tpu.memory_space<smem>>, %arg2: memref<256x384xbf16, #tpu.memory_space<vmem>>, %arg3: memref<384x256xbf16, #tpu.memory_space<vmem>>, %arg4: memref<1x256xf32, #tpu.memory_space<vmem>>, %arg5: memref<256x512xbf16, #tpu.memory_space<vmem>>, %arg6: memref<1x512xf32, #tpu.memory_space<vmem>>, %arg7: memref<1x256xf32, #tpu.memory_space<vmem>>, %arg8: memref<1xf32, #tpu.memory_space<smem>>, %arg9: memref<256x1xf32, #tpu.memory_space<vmem>>, %arg10: memref<256x256xbf16, #tpu.memory_space<vmem>>, %arg11: memref<1x384xf32, #tpu.memory_space<vmem>>, %arg12: memref<1x256xf32, #tpu.memory_space<vmem>>, %arg13: memref<1x384xf32, #tpu.memory_space<vmem>>, %arg14: memref<1x256xf32, #tpu.memory_space<vmem>>, %arg15: memref<1x1xf32, #tpu.memory_space<vmem>>, %arg16: memref<1x1xf32, #tpu.memory_space<vmem>>) attributes {dimension_semantics = [#tpu.dimension_semantics<arbitrary>], iteration_bounds = array<i64: 4>, scalar_prefetch = 1 : i64, scratch_operands = 4 : i64, tpu.core_type = #tpu.core_type<tc>, window_params = [{transform_indices = @transform_0, window_bounds = array<i64: 256, 384>}, {pipeline_mode = #tpu.pipeline_mode<synchronous>, transform_indices = @transform_1, window_bounds = array<i64: 384, 256>}, {pipeline_mode = #tpu.pipeline_mode<synchronous>, transform_indices = @transform_2, window_bounds = array<i64: 1, 256>}, {pipeline_mode = #tpu.pipeline_mode<synchronous>, transform_indices = @transform_3, window_bounds = array<i64: 256, 512>}, {pipeline_mode = #tpu.pipeline_mode<synchronous>, transform_indices = @transform_4, window_bounds = array<i64: 1, 512>}, {pipeline_mode = #tpu.pipeline_mode<synchronous>, transform_indices = @transform_5, window_bounds = array<i64: 1, 256>}, {transform_indices = @transform_6, window_bounds = array<i64: 1>}, {transform_indices = @transform_7, window_bounds = array<i64: 256, 1>}, {transform_indices = @transform_8, window_bounds = array<i64: 256, 256>}, {pipeline_mode = #tpu.pipeline_mode<synchronous>, transform_indices = @transform_9, window_bounds = array<i64: 1, 384>}, {pipeline_mode = #tpu.pipeline_mode<synchronous>, transform_indices = @transform_10, window_bounds = array<i64: 1, 256>}]} {
    %c0_i32 = arith.constant 0 : i32
    %0 = arith.cmpi eq, %arg0, %c0_i32 : i32
    %1 = arith.extui %0 : i1 to i32
    %c0_i32_0 = arith.constant 0 : i32
    %2 = arith.cmpi ne, %1, %c0_i32_0 : i32
    scf.if %2 {
      %cst_44 = arith.constant 0xFF800000 : f32
      %77 = vector.broadcast %cst_44 : f32 to vector<1x1xf32>
      %c0_45 = arith.constant 0 : index
      %c0_46 = arith.constant 0 : index
      %78 = vector.load %arg15[%c0_45, %c0_46] : memref<1x1xf32, #tpu.memory_space<vmem>>, vector<1x1xf32>
      tpu.vector_store %arg15[%c0_45, %c0_46], %77 {strides = array<i32>} : memref<1x1xf32, #tpu.memory_space<vmem>>, vector<1x1xf32>,
      %cst_47 = arith.constant 0.000000e+00 : f32
      %79 = vector.broadcast %cst_47 : f32 to vector<1x1xf32>
      %c0_48 = arith.constant 0 : index
      %c0_49 = arith.constant 0 : index
      %80 = vector.load %arg16[%c0_48, %c0_49] : memref<1x1xf32, #tpu.memory_space<vmem>>, vector<1x1xf32>
      tpu.vector_store %arg16[%c0_48, %c0_49], %79 {strides = array<i32>} : memref<1x1xf32, #tpu.memory_space<vmem>>, vector<1x1xf32>,
      %cst_50 = arith.constant 0.000000e+00 : f32
      %81 = vector.broadcast %cst_50 : f32 to vector<1x384xf32>
      %c0_51 = arith.constant 0 : index
      %c0_52 = arith.constant 0 : index
      %82 = vector.load %arg13[%c0_51, %c0_52] : memref<1x384xf32, #tpu.memory_space<vmem>>, vector<1x384xf32>
      tpu.vector_store %arg13[%c0_51, %c0_52], %81 {strides = array<i32>} : memref<1x384xf32, #tpu.memory_space<vmem>>, vector<1x384xf32>,
      %cst_53 = arith.constant 0.000000e+00 : f32
      %83 = vector.broadcast %cst_53 : f32 to vector<1x256xf32>
      %c0_54 = arith.constant 0 : index
      %c0_55 = arith.constant 0 : index
      %84 = vector.load %arg14[%c0_54, %c0_55] : memref<1x256xf32, #tpu.memory_space<vmem>>, vector<1x256xf32>
      tpu.vector_store %arg14[%c0_54, %c0_55], %83 {strides = array<i32>} : memref<1x256xf32, #tpu.memory_space<vmem>>, vector<1x256xf32>,
    } else {
    }
    %c0 = arith.constant 0 : index
    %c0_1 = arith.constant 0 : index
    %3 = vector.load %arg2[%c0, %c0_1] : memref<256x384xbf16, #tpu.memory_space<vmem>>, vector<256x384xbf16>
    %c0_2 = arith.constant 0 : index
    %c0_3 = arith.constant 0 : index
    %4 = vector.load %arg3[%c0_2, %c0_3] : memref<384x256xbf16, #tpu.memory_space<vmem>>, vector<384x256xbf16>
    %cst = arith.constant dense<0.000000e+00> : vector<256x256xf32>
    %5 = tpu.matmul %3, %4, %cst {dimension_numbers = #tpu.dot_dimension_numbers<[1], [0], [0], [1], [0, 0, 1, 1], [], []>} : vector<256x384xbf16>, vector<384x256xbf16>, vector<256x256xf32> -> vector<256x256xf32>
    %c0_4 = arith.constant 0 : index
    %c0_5 = arith.constant 0 : index
    %6 = vector.load %arg4[%c0_4, %c0_5] : memref<1x256xf32, #tpu.memory_space<vmem>>, vector<1x256xf32>
    %7 = vector.broadcast %6 : vector<1x256xf32> to vector<256x256xf32>
    %8 = arith.addf %5, %7 : vector<256x256xf32>
    %cst_6 = arith.constant 0.000000e+00 : f32
    %9 = vector.broadcast %cst_6 : f32 to vector<256x256xf32>
    %10 = arith.maximumf %8, %9 : vector<256x256xf32>
    %11 = arith.truncf %10 : vector<256x256xf32> to vector<256x256xbf16>
    %c0_7 = arith.constant 0 : index
    %c0_8 = arith.constant 0 : index
    %12 = vector.load %arg5[%c0_7, %c0_8] : memref<256x512xbf16, #tpu.memory_space<vmem>>, vector<256x512xbf16>
    %cst_9 = arith.constant dense<0.000000e+00> : vector<256x512xf32>
    %13 = tpu.matmul %11, %12, %cst_9 {dimension_numbers = #tpu.dot_dimension_numbers<[1], [0], [0], [1], [0, 0, 1, 1], [], []>} : vector<256x256xbf16>, vector<256x512xbf16>, vector<256x512xf32> -> vector<256x512xf32>
    %c0_10 = arith.constant 0 : index
    %c0_11 = arith.constant 0 : index
    %14 = vector.load %arg6[%c0_10, %c0_11] : memref<1x512xf32, #tpu.memory_space<vmem>>, vector<1x512xf32>
    %15 = vector.broadcast %14 : vector<1x512xf32> to vector<256x512xf32>
    %16 = arith.addf %13, %15 : vector<256x512xf32>
    %17 = vector.extract_strided_slice %16 {offsets = [0, 0], sizes = [256, 256], strides = [1, 1]} : vector<256x512xf32> to vector<256x256xf32>
    %18 = math.tanh %17 : vector<256x256xf32>
    %19 = vector.extract_strided_slice %16 {offsets = [0, 256], sizes = [256, 256], strides = [1, 1]} : vector<256x512xf32> to vector<256x256xf32>
    %20 = arith.negf %19 : vector<256x256xf32>
    %21 = math.exp %20 : vector<256x256xf32>
    %cst_12 = arith.constant 1.000000e+00 : f32
    %22 = vector.broadcast %cst_12 : f32 to vector<256x256xf32>
    %23 = arith.addf %22, %21 : vector<256x256xf32>
    %24 = arith.divf %22, %23 : vector<256x256xf32>
    %25 = arith.mulf %18, %24 : vector<256x256xf32>
    %c0_13 = arith.constant 0 : index
    %c0_14 = arith.constant 0 : index
    %26 = vector.load %arg7[%c0_13, %c0_14] : memref<1x256xf32, #tpu.memory_space<vmem>>, vector<1x256xf32>
    %27 = vector.broadcast %26 : vector<1x256xf32> to vector<256x256xf32>
    %28 = arith.mulf %25, %27 : vector<256x256xf32>
    %cst_15 = arith.constant dense<0.000000e+00> : vector<256xf32>
    %29 = vector.multi_reduction <add>, %28, %cst_15 [1] : vector<256x256xf32> to vector<256xf32>
    %30 = vector.shape_cast %29 : vector<256xf32> to vector<256x1xf32>
    %c0_16 = arith.constant 0 : index
    %31 = memref.load %arg8[%c0_16] : memref<1xf32, #tpu.memory_space<smem>>
    %32 = vector.broadcast %31 : f32 to vector<256x1xf32>
    %33 = arith.addf %30, %32 : vector<256x1xf32>
    %c0_17 = arith.constant 0 : index
    %c0_18 = arith.constant 0 : index
    %34 = vector.load %arg9[%c0_17, %c0_18] : memref<256x1xf32, #tpu.memory_space<vmem>>, vector<256x1xf32>
    tpu.vector_store %arg9[%c0_17, %c0_18], %33 {strides = array<i32>} : memref<256x1xf32, #tpu.memory_space<vmem>>, vector<256x1xf32>,
    %c0_19 = arith.constant 0 : index
    %c0_20 = arith.constant 0 : index
    %35 = vector.load %arg10[%c0_19, %c0_20] : memref<256x256xbf16, #tpu.memory_space<vmem>>, vector<256x256xbf16>
    tpu.vector_store %arg10[%c0_19, %c0_20], %11 {strides = array<i32>} : memref<256x256xbf16, #tpu.memory_space<vmem>>, vector<256x256xbf16>,
    %c256_i32 = arith.constant 256 : i32
    %36 = arith.muli %arg0, %c256_i32 : i32
    %37 = tpu.iota {dimensions = array<i32: 0>} : vector<256x1xi32>
    %38 = vector.broadcast %36 : i32 to vector<256x1xi32>
    %39 = arith.addi %38, %37 : vector<256x1xi32>
    %c0_21 = arith.constant 0 : index
    %40 = memref.load %arg1[%c0_21] : memref<1xi32, #tpu.memory_space<smem>>
    %41 = vector.broadcast %40 : i32 to vector<256x1xi32>
    %42 = arith.cmpi slt, %39, %41 : vector<256x1xi32>
    %cst_22 = arith.constant 0xFF800000 : f32
    %43 = vector.broadcast %cst_22 : f32 to vector<256x1xf32>
    %44 = arith.select %42, %33, %43 : vector<256x1xi1>, vector<256x1xf32>
    %c0_23 = arith.constant 0 : index
    %c0_24 = arith.constant 0 : index
    %45 = vector.load %arg15[%c0_23, %c0_24] : memref<1x1xf32, #tpu.memory_space<vmem>>, vector<1x1xf32>
    %cst_25 = arith.constant dense<0xFF800000> : vector<1xf32>
    %46 = vector.multi_reduction <maximumf>, %44, %cst_25 [0] : vector<256x1xf32> to vector<1xf32>
    %47 = vector.shape_cast %46 : vector<1xf32> to vector<1x1xf32>
    %48 = arith.maximumf %45, %47 : vector<1x1xf32>
    %49 = arith.subf %45, %48 : vector<1x1xf32>
    %50 = math.exp %49 : vector<1x1xf32>
    %51 = vector.broadcast %48 : vector<1x1xf32> to vector<256x1xf32>
    %52 = arith.subf %44, %51 : vector<256x1xf32>
    %53 = math.exp %52 : vector<256x1xf32>
    %54 = arith.truncf %53 : vector<256x1xf32> to vector<256x1xbf16>
    %c0_26 = arith.constant 0 : index
    %c0_27 = arith.constant 0 : index
    %55 = vector.load %arg15[%c0_26, %c0_27] : memref<1x1xf32, #tpu.memory_space<vmem>>, vector<1x1xf32>
    tpu.vector_store %arg15[%c0_26, %c0_27], %48 {strides = array<i32>} : memref<1x1xf32, #tpu.memory_space<vmem>>, vector<1x1xf32>,
    %c0_28 = arith.constant 0 : index
    %c0_29 = arith.constant 0 : index
    %56 = vector.load %arg16[%c0_28, %c0_29] : memref<1x1xf32, #tpu.memory_space<vmem>>, vector<1x1xf32>
    %57 = arith.mulf %50, %56 : vector<1x1xf32>
    %cst_30 = arith.constant dense<0.000000e+00> : vector<1xf32>
    %58 = vector.multi_reduction <add>, %53, %cst_30 [0] : vector<256x1xf32> to vector<1xf32>
    %59 = vector.shape_cast %58 : vector<1xf32> to vector<1x1xf32>
    %60 = arith.addf %57, %59 : vector<1x1xf32>
    %c0_31 = arith.constant 0 : index
    %c0_32 = arith.constant 0 : index
    %61 = vector.load %arg16[%c0_31, %c0_32] : memref<1x1xf32, #tpu.memory_space<vmem>>, vector<1x1xf32>
    tpu.vector_store %arg16[%c0_31, %c0_32], %60 {strides = array<i32>} : memref<1x1xf32, #tpu.memory_space<vmem>>, vector<1x1xf32>,
    %c0_33 = arith.constant 0 : index
    %c0_34 = arith.constant 0 : index
    %62 = vector.load %arg13[%c0_33, %c0_34] : memref<1x384xf32, #tpu.memory_space<vmem>>, vector<1x384xf32>
    %63 = vector.broadcast %50 : vector<1x1xf32> to vector<1x384xf32>
    %64 = arith.mulf %63, %62 : vector<1x384xf32>
    %cst_35 = arith.constant dense<0.000000e+00> : vector<1x384xf32>
    %65 = tpu.matmul %54, %3, %cst_35 {dimension_numbers = #tpu.dot_dimension_numbers<[0], [0], [1], [1], [0, 1, 1, 1], [], []>} : vector<256x1xbf16>, vector<256x384xbf16>, vector<1x384xf32> -> vector<1x384xf32>
    %66 = arith.addf %64, %65 : vector<1x384xf32>
    %c0_36 = arith.constant 0 : index
    %c0_37 = arith.constant 0 : index
    %67 = vector.load %arg13[%c0_36, %c0_37] : memref<1x384xf32, #tpu.memory_space<vmem>>, vector<1x384xf32>
    tpu.vector_store %arg13[%c0_36, %c0_37], %66 {strides = array<i32>} : memref<1x384xf32, #tpu.memory_space<vmem>>, vector<1x384xf32>,
    %c0_38 = arith.constant 0 : index
    %c0_39 = arith.constant 0 : index
    %68 = vector.load %arg14[%c0_38, %c0_39] : memref<1x256xf32, #tpu.memory_space<vmem>>, vector<1x256xf32>
    %69 = vector.broadcast %50 : vector<1x1xf32> to vector<1x256xf32>
    %70 = arith.mulf %69, %68 : vector<1x256xf32>
    %cst_40 = arith.constant dense<0.000000e+00> : vector<1x256xf32>
    %71 = tpu.matmul %54, %11, %cst_40 {dimension_numbers = #tpu.dot_dimension_numbers<[0], [0], [1], [1], [0, 1, 1, 1], [], []>} : vector<256x1xbf16>, vector<256x256xbf16>, vector<1x256xf32> -> vector<1x256xf32>
    %72 = arith.addf %70, %71 : vector<1x256xf32>
    %c0_41 = arith.constant 0 : index
    %c0_42 = arith.constant 0 : index
    %73 = vector.load %arg14[%c0_41, %c0_42] : memref<1x256xf32, #tpu.memory_space<vmem>>, vector<1x256xf32>
    tpu.vector_store %arg14[%c0_41, %c0_42], %72 {strides = array<i32>} : memref<1x256xf32, #tpu.memory_space<vmem>>, vector<1x256xf32>,
    %c3_i32 = arith.constant 3 : i32
    %74 = arith.cmpi eq, %arg0, %c3_i32 : i32
    %75 = arith.extui %74 : i1 to i32
    %c0_i32_43 = arith.constant 0 : i32
    %76 = arith.cmpi ne, %75, %c0_i32_43 : i32
    scf.if %76 {
      %c0_44 = arith.constant 0 : index
      %c0_45 = arith.constant 0 : index
      %77 = vector.load %arg16[%c0_44, %c0_45] : memref<1x1xf32, #tpu.memory_space<vmem>>, vector<1x1xf32>
      %78 = tpu.reciprocal %77 : vector<1x1xf32> -> vector<1x1xf32>
      %c0_46 = arith.constant 0 : index
      %c0_47 = arith.constant 0 : index
      %79 = vector.load %arg13[%c0_46, %c0_47] : memref<1x384xf32, #tpu.memory_space<vmem>>, vector<1x384xf32>
      %80 = vector.broadcast %78 : vector<1x1xf32> to vector<1x384xf32>
      %81 = arith.mulf %79, %80 : vector<1x384xf32>
      %c0_48 = arith.constant 0 : index
      %c0_49 = arith.constant 0 : index
      %82 = vector.load %arg11[%c0_48, %c0_49] : memref<1x384xf32, #tpu.memory_space<vmem>>, vector<1x384xf32>
      tpu.vector_store %arg11[%c0_48, %c0_49], %81 {strides = array<i32>} : memref<1x384xf32, #tpu.memory_space<vmem>>, vector<1x384xf32>,
      %c0_50 = arith.constant 0 : index
      %c0_51 = arith.constant 0 : index
      %83 = vector.load %arg14[%c0_50, %c0_51] : memref<1x256xf32, #tpu.memory_space<vmem>>, vector<1x256xf32>
      %84 = vector.broadcast %78 : vector<1x1xf32> to vector<1x256xf32>
      %85 = arith.mulf %83, %84 : vector<1x256xf32>
      %c0_52 = arith.constant 0 : index
      %c0_53 = arith.constant 0 : index
      %86 = vector.load %arg12[%c0_52, %c0_53] : memref<1x256xf32, #tpu.memory_space<vmem>>, vector<1x256xf32>
      tpu.vector_store %arg12[%c0_52, %c0_53], %85 {strides = array<i32>} : memref<1x256xf32, #tpu.memory_space<vmem>>, vector<1x256xf32>,
    } else {
    }
    return
  }
  func.func @transform_0(%arg0: i32, %arg1: memref<1xi32, #tpu.memory_space<smem>>) -> (i32, i32) {
    %c0_i32 = arith.constant 0 : i32
    %c0_i32_0 = arith.constant 0 : i32
    return %arg0, %c0_i32 : i32, i32
  }
  func.func @transform_1(%arg0: i32, %arg1: memref<1xi32, #tpu.memory_space<smem>>) -> (i32, i32) {
    %c0_i32 = arith.constant 0 : i32
    %c0_i32_0 = arith.constant 0 : i32
    %c0_i32_1 = arith.constant 0 : i32
    return %c0_i32, %c0_i32_0 : i32, i32
  }
  func.func @transform_2(%arg0: i32, %arg1: memref<1xi32, #tpu.memory_space<smem>>) -> (i32, i32) {
    %c0_i32 = arith.constant 0 : i32
    %c0_i32_0 = arith.constant 0 : i32
    %c0_i32_1 = arith.constant 0 : i32
    return %c0_i32, %c0_i32_0 : i32, i32
  }
  func.func @transform_3(%arg0: i32, %arg1: memref<1xi32, #tpu.memory_space<smem>>) -> (i32, i32) {
    %c0_i32 = arith.constant 0 : i32
    %c0_i32_0 = arith.constant 0 : i32
    %c0_i32_1 = arith.constant 0 : i32
    return %c0_i32, %c0_i32_0 : i32, i32
  }
  func.func @transform_4(%arg0: i32, %arg1: memref<1xi32, #tpu.memory_space<smem>>) -> (i32, i32) {
    %c0_i32 = arith.constant 0 : i32
    %c0_i32_0 = arith.constant 0 : i32
    %c0_i32_1 = arith.constant 0 : i32
    return %c0_i32, %c0_i32_0 : i32, i32
  }
  func.func @transform_5(%arg0: i32, %arg1: memref<1xi32, #tpu.memory_space<smem>>) -> (i32, i32) {
    %c0_i32 = arith.constant 0 : i32
    %c0_i32_0 = arith.constant 0 : i32
    %c0_i32_1 = arith.constant 0 : i32
    return %c0_i32, %c0_i32_0 : i32, i32
  }
  func.func @transform_6(%arg0: i32, %arg1: memref<1xi32, #tpu.memory_space<smem>>) -> i32 {
    %c0_i32 = arith.constant 0 : i32
    %c0_i32_0 = arith.constant 0 : i32
    return %c0_i32 : i32
  }
  func.func @transform_7(%arg0: i32, %arg1: memref<1xi32, #tpu.memory_space<smem>>) -> (i32, i32) {
    %c0_i32 = arith.constant 0 : i32
    %c0_i32_0 = arith.constant 0 : i32
    return %arg0, %c0_i32 : i32, i32
  }
  func.func @transform_8(%arg0: i32, %arg1: memref<1xi32, #tpu.memory_space<smem>>) -> (i32, i32) {
    %c0_i32 = arith.constant 0 : i32
    %c0_i32_0 = arith.constant 0 : i32
    return %arg0, %c0_i32 : i32, i32
  }
  func.func @transform_9(%arg0: i32, %arg1: memref<1xi32, #tpu.memory_space<smem>>) -> (i32, i32) {
    %c0_i32 = arith.constant 0 : i32
    %c0_i32_0 = arith.constant 0 : i32
    %c0_i32_1 = arith.constant 0 : i32
    return %c0_i32, %c0_i32_0 : i32, i32
  }
  func.func @transform_10(%arg0: i32, %arg1: memref<1xi32, #tpu.memory_space<smem>>) -> (i32, i32) {
    %c0_i32 = arith.constant 0 : i32
    %c0_i32_0 = arith.constant 0 : i32
    %c0_i32_1 = arith.constant 0 : i32
    return %c0_i32, %c0_i32_0 : i32, i32
  }
}

</mosaic_0001>

<llo_original>
// kernel: tpu_custom_call.1
$region0: #{tpu_custom_call.1}
  #allocation0 [shape = 'u32[]', space=smem, size = 0x4, offset = 0x4, fixed_abs, tag = 'smem constant byte address 0x4 - core index']
  #allocation1 [shape = 'u32[144,128]{1,0:T(1,128)}', space=vmem, size = 0x12000, scoped, tag = 'internal scratch']
  #allocation2 [shape = 'f32[1,384]{1,0:T(1,128)}', space=vmem, size = 0x600, scoped, tag = 'scratch operand']
  #allocation3 [shape = 'f32[1,256]{1,0:T(1,128)}', space=vmem, size = 0x400, scoped, tag = 'scratch operand']
  #allocation4 [shape = 'f32[1,1]{1,0:T(1,128)}', space=vmem, size = 0x200, scoped, tag = 'scratch operand']
  #allocation5 [shape = 'f32[1,1]{1,0:T(1,128)}', space=vmem, size = 0x200, scoped, tag = 'scratch operand']
  #allocation6 [shape = 's32[1]{0}', space=sflag, size = 0x4, scoped, tag = 'scoped memory for tpu_custom_call.1']
  #allocation7 [shape = 's32[1]{0:T(128)S(6)}', space=smem, size = 0x200, scoped, tag = 'prefetched SMEM operand 0']
  #allocation8 [shape = 'f32[1]{0:T(128)S(6)}', space=smem, size = 0x200, scoped, tag = 'scoped memory for tpu_custom_call.1']
  %s0 = inlined_call_operand.<no memory space> [shape: s32[1], index: 0, kind: input, shape index: {}]
  %s1 = inlined_call_operand.hbm [shape: bf16[1024,384], index: 1, kind: input, shape index: {}]
  %s2 = inlined_call_operand.hbm [shape: bf16[384,256], index: 2, kind: input, shape index: {}]
  %s3 = inlined_call_operand.vmem [shape: f32[1,256], index: 3, kind: input, shape index: {}]
  %s4 = inlined_call_operand.hbm [shape: bf16[256,512], index: 4, kind: input, shape index: {}]
  %s5 = inlined_call_operand.vmem [shape: f32[1,512], index: 5, kind: input, shape index: {}]
  %s6 = inlined_call_operand.vmem [shape: f32[1,256], index: 6, kind: input, shape index: {}]
  %s7 = inlined_call_operand.<no memory space> [shape: f32[1], index: 7, kind: input, shape index: {}]
  %s8 = inlined_call_operand.vmem [shape: f32[1024,1], index: 8, kind: output, shape index: {0}]
  %s9 = inlined_call_operand.hbm [shape: bf16[1024,256], index: 9, kind: output, shape index: {1}]
  %s10 = inlined_call_operand.hbm [shape: f32[1,384], index: 10, kind: output, shape index: {2}]
  %s11 = inlined_call_operand.hbm [shape: f32[1,256], index: 11, kind: output, shape index: {3}]
  %12 = xla_tuple %s8, %s9, %s10, %s11
  %s13 = sld [smem:[#allocation0]]
  $region105: #{tpu_custom_call.1} parent=0
    _
  %s15 = ssub.s32 1, %s13
  %s16 = scalar_select 0, %s15, %s13
  %17 = sst [smem:[#allocation7]] %s0
  %18 = sst [smem:[#allocation8]] %s7
  $region1: #{tpu_custom_call.1} parent=0
    #allocation9 [shape = 'u8[393216]{0}', space=vmem, size = 0x60000, scoped, tag = 'input window, operand 1']
    #allocation10 [shape = 's32[2]{0}', space=sflag, size = 0x8, scoped, tag = 'scoped memory for tpu_custom_call.1']
    #allocation11 [shape = 's32[2]{0}', space=sflag, size = 0x8, scoped, tag = 'scoped memory for tpu_custom_call.1']
    #allocation12 [shape = 'u8[196608]{0}', space=vmem, size = 0x30000, scoped, tag = 'input window, operand 2, single buffered']
    #allocation13 [shape = 's32[1]{0}', space=sflag, size = 0x4, scoped, tag = 'scoped memory for tpu_custom_call.1']
    #allocation14 [shape = 'u8[262144]{0}', space=vmem, size = 0x40000, scoped, tag = 'input window, operand 4, single buffered']
    #allocation15 [shape = 'u8[262144]{0}', space=vmem, size = 0x40000, scoped, tag = 'output window, operand 1']
    #allocation16 [shape = 'u8[1536]{0}', space=vmem, size = 0x800, scoped, tag = 'output window, operand 2, single buffered']
    #allocation17 [shape = 's32[1]{0}', space=sflag, size = 0x4, scoped, tag = 'scoped memory for tpu_custom_call.1']
    #allocation18 [shape = 'u8[1024]{0}', space=vmem, size = 0x400, scoped, tag = 'output window, operand 3, single buffered']
    %19 = vsyncpa [#allocation10], 0
    %s20 = scalar_lea.sflag [#allocation10], 1
    %21 = vsyncpa %s20, 0
    %22 = vsyncpa [#allocation13], 0
    %23 = vsyncpa [#allocation11], 0
    %s24 = scalar_lea.sflag [#allocation11], 1
    %25 = vsyncpa %s24, 0
    %26 = vsyncpa [#allocation17], 0
    loop: start=0, step=1, limit=6
    $region2: #{tpu_custom_call.1} parent=1 // loop_pre_header
      _
    $region3: #{tpu_custom_call.1} parent=1 // loop_header
      %s28 = sphi 0, %s32
      %p29 = scmp.ge.s32.totalorder %s28, 6
      %s38 = sphi 0, %s40
      %s41 = sphi 0, %s38
      %s42 = sphi 0, %s41
      %s58 = sphi 0, %s42
      %s62 = sphi 0, %s62
      %s64 = sphi 0, %s62
      %s65 = sphi 0, %s64
      %s79 = sphi 0, %s65
      %s83 = sphi 0, %s83
      %s85 = sphi 0, %s83
      %s86 = sphi 0, %s85
      %s100 = sphi 0, %s86
      %s104 = sphi 0, %s104
      %s106 = sphi 0, %s104
      %s107 = sphi 0, %s106
      %s121 = sphi 0, %s107
      %s125 = sphi 0, %s125
      %s127 = sphi 0, %s125
      %s128 = sphi 0, %s127
      %s142 = sphi 0, %s128
      %s146 = sphi 0, %s146
      %s148 = sphi 0, %s146
      %s149 = sphi 0, %s148
      %s163 = sphi 0, %s149
      %s167 = sphi 0, %s167
      %s169 = sphi 0, %s167
      %s170 = sphi 0, %s169
      %s184 = sphi 0, %s170
      %s190 = sphi 0, %s192
      %s193 = sphi 0, %s190
      %s194 = sphi 0, %s193
      %s210 = sphi 0, %s194
      %s216 = sphi 0, %s218
      %s219 = sphi 0, %s216
      %s220 = sphi 0, %s219
      %s236 = sphi 0, %s220
      %s240 = sphi 0, %s240
      %s242 = sphi 0, %s240
      %s243 = sphi 0, %s242
      %s257 = sphi 0, %s243
      %s261 = sphi 0, %s261
      %s263 = sphi 0, %s261
      %s264 = sphi 0, %s263
      %s278 = sphi 0, %s264
    $region4: #{tpu_custom_call.1} parent=1 // loop_header_branch
      %31 = sbr.rel (%p29) target = $region8
    $region5: #{tpu_custom_call.1} parent=1 // loop_body
      %s33 = ssub.s32 %s28, 1
      %s34 = ssub.s32 %s28, 2
      %s35 = sadd.s32 %s28, 1
      %s36 = ssub.s32 %s28, %s35
      %p37 = scmp.eq.s32.totalorder %s36, 0
      %s39 = sadd.s32 %s38, 1
      %s40 = scalar_select %p37, %s38, %s39
      %p43 = pneg %p37
      %p44 = scmp.eq.s32.totalorder %s28, 3
      %p45 = por %p43, %p44
      %p46 = scmp.ne.s32.totalorder %s38, %s41
      %p47 = scmp.eq.s32.totalorder %s28, 0
      %p48 = por %p46, %p47
      %p49 = scmp.ne.s32.totalorder %s38, %s41
      %p50 = scmp.eq.s32.totalorder %s33, 3
      %p51 = por %p49, %p50
      %p52 = scmp.ne.s32.totalorder %s41, %s42
      %p53 = scmp.eq.s32.totalorder %s33, 0
      %p54 = por %p52, %p53
      %p55 = scmp.ne.s32.totalorder %s41, %s42
      %p56 = scmp.eq.s32.totalorder %s34, 3
      %p57 = por %p55, %p56
      %p59 = scmp.ne.s32.totalorder %s42, %s58
      %p60 = scmp.eq.s32.totalorder %s34, 0
      %p61 = por %p59, %p60
      %s63 = sadd.s32 %s62, 1
      %p66 = scmp.eq.s32.totalorder %s28, 3
      %p67 = scmp.ne.s32.totalorder %s62, %s64
      %p68 = scmp.eq.s32.totalorder %s28, 0
      %p69 = por %p67, %p68
      %p70 = scmp.ne.s32.totalorder %s62, %s64
      %p71 = scmp.eq.s32.totalorder %s33, 3
      %p72 = por %p70, %p71
      %p73 = scmp.ne.s32.totalorder %s64, %s65
      %p74 = scmp.eq.s32.totalorder %s33, 0
      %p75 = por %p73, %p74
      %p76 = scmp.ne.s32.totalorder %s64, %s65
      %p77 = scmp.eq.s32.totalorder %s34, 3
      %p78 = por %p76, %p77
      %p80 = scmp.ne.s32.totalorder %s65, %s79
      %p81 = scmp.eq.s32.totalorder %s34, 0
      %p82 = por %p80, %p81
      %s84 = sadd.s32 %s83, 1
      %p87 = scmp.eq.s32.totalorder %s28, 3
      %p88 = scmp.ne.s32.totalorder %s83, %s85
      %p89 = scmp.eq.s32.totalorder %s28, 0
      %p90 = por %p88, %p89
      %p91 = scmp.ne.s32.totalorder %s83, %s85
      %p92 = scmp.eq.s32.totalorder %s33, 3
      %p93 = por %p91, %p92
      %p94 = scmp.ne.s32.totalorder %s85, %s86
      %p95 = scmp.eq.s32.totalorder %s33, 0
      %p96 = por %p94, %p95
      %p97 = scmp.ne.s32.totalorder %s85, %s86
      %p98 = scmp.eq.s32.totalorder %s34, 3
      %p99 = por %p97, %p98
      %p101 = scmp.ne.s32.totalorder %s86, %s100
      %p102 = scmp.eq.s32.totalorder %s34, 0
      %p103 = por %p101, %p102
      %s105 = sadd.s32 %s104, 1
      %p108 = scmp.eq.s32.totalorder %s28, 3
      %p109 = scmp.ne.s32.totalorder %s104, %s106
      %p110 = scmp.eq.s32.totalorder %s28, 0
      %p111 = por %p109, %p110
      %p112 = scmp.ne.s32.totalorder %s104, %s106
      %p113 = scmp.eq.s32.totalorder %s33, 3
      %p114 = por %p112, %p113
      %p115 = scmp.ne.s32.totalorder %s106, %s107
      %p116 = scmp.eq.s32.totalorder %s33, 0
      %p117 = por %p115, %p116
      %p118 = scmp.ne.s32.totalorder %s106, %s107
      %p119 = scmp.eq.s32.totalorder %s34, 3
      %p120 = por %p118, %p119
      %p122 = scmp.ne.s32.totalorder %s107, %s121
      %p123 = scmp.eq.s32.totalorder %s34, 0
      %p124 = por %p122, %p123
      %s126 = sadd.s32 %s125, 1
      %p129 = scmp.eq.s32.totalorder %s28, 3
      %p130 = scmp.ne.s32.totalorder %s125, %s127
      %p131 = scmp.eq.s32.totalorder %s28, 0
      %p132 = por %p130, %p131
      %p133 = scmp.ne.s32.totalorder %s125, %s127
      %p134 = scmp.eq.s32.totalorder %s33, 3
      %p135 = por %p133, %p134
      %p136 = scmp.ne.s32.totalorder %s127, %s128
      %p137 = scmp.eq.s32.totalorder %s33, 0
      %p138 = por %p136, %p137
      %p139 = scmp.ne.s32.totalorder %s127, %s128
      %p140 = scmp.eq.s32.totalorder %s34, 3
      %p141 = por %p139, %p140
      %p143 = scmp.ne.s32.totalorder %s128, %s142
      %p144 = scmp.eq.s32.totalorder %s34, 0
      %p145 = por %p143, %p144
      %s147 = sadd.s32 %s146, 1
      %p150 = scmp.eq.s32.totalorder %s28, 3
      %p151 = scmp.ne.s32.totalorder %s146, %s148
      %p152 = scmp.eq.s32.totalorder %s28, 0
      %p153 = por %p151, %p152
      %p154 = scmp.ne.s32.totalorder %s146, %s148
      %p155 = scmp.eq.s32.totalorder %s33, 3
      %p156 = por %p154, %p155
      %p157 = scmp.ne.s32.totalorder %s148, %s149
      %p158 = scmp.eq.s32.totalorder %s33, 0
      %p159 = por %p157, %p158
      %p160 = scmp.ne.s32.totalorder %s148, %s149
      %p161 = scmp.eq.s32.totalorder %s34, 3
      %p162 = por %p160, %p161
      %p164 = scmp.ne.s32.totalorder %s149, %s163
      %p165 = scmp.eq.s32.totalorder %s34, 0
      %p166 = por %p164, %p165
      %s168 = sadd.s32 %s167, 1
      %p171 = scmp.eq.s32.totalorder %s28, 3
      %p172 = scmp.ne.s32.totalorder %s167, %s169
      %p173 = scmp.eq.s32.totalorder %s28, 0
      %p174 = por %p172, %p173
      %p175 = scmp.ne.s32.totalorder %s167, %s169
      %p176 = scmp.eq.s32.totalorder %s33, 3
      %p177 = por %p175, %p176
      %p178 = scmp.ne.s32.totalorder %s169, %s170
      %p179 = scmp.eq.s32.totalorder %s33, 0
      %p180 = por %p178, %p179
      %p181 = scmp.ne.s32.totalorder %s169, %s170
      %p182 = scmp.eq.s32.totalorder %s34, 3
      %p183 = por %p181, %p182
      %p185 = scmp.ne.s32.totalorder %s170, %s184
      %p186 = scmp.eq.s32.totalorder %s34, 0
      %p187 = por %p185, %p186
      %s188 = ssub.s32 %s28, %s35
      %p189 = scmp.eq.s32.totalorder %s188, 0
      %s191 = sadd.s32 %s190, 1
      %s192 = scalar_select %p189, %s190, %s191
      %p195 = pneg %p189
      %p196 = scmp.eq.s32.totalorder %s28, 3
      %p197 = por %p195, %p196
      %p198 = scmp.ne.s32.totalorder %s190, %s193
      %p199 = scmp.eq.s32.totalorder %s28, 0
      %p200 = por %p198, %p199
      %p201 = scmp.ne.s32.totalorder %s190, %s193
      %p202 = scmp.eq.s32.totalorder %s33, 3
      %p203 = por %p201, %p202
      %p204 = scmp.ne.s32.totalorder %s193, %s194
      %p205 = scmp.eq.s32.totalorder %s33, 0
      %p206 = por %p204, %p205
      %p207 = scmp.ne.s32.totalorder %s193, %s194
      %p208 = scmp.eq.s32.totalorder %s34, 3
      %p209 = por %p207, %p208
      %p211 = scmp.ne.s32.totalorder %s194, %s210
      %p212 = scmp.eq.s32.totalorder %s34, 0
      %p213 = por %p211, %p212
      %s214 = ssub.s32 %s28, %s35
      %p215 = scmp.eq.s32.totalorder %s214, 0
      %s217 = sadd.s32 %s216, 1
      %s218 = scalar_select %p215, %s216, %s217
      %p221 = pneg %p215
      %p222 = scmp.eq.s32.totalorder %s28, 3
      %p223 = por %p221, %p222
      %p224 = scmp.ne.s32.totalorder %s216, %s219
      %p225 = scmp.eq.s32.totalorder %s28, 0
      %p226 = por %p224, %p225
      %p227 = scmp.ne.s32.totalorder %s216, %s219
      %p228 = scmp.eq.s32.totalorder %s33, 3
      %p229 = por %p227, %p228
      %p230 = scmp.ne.s32.totalorder %s219, %s220
      %p231 = scmp.eq.s32.totalorder %s33, 0
      %p232 = por %p230, %p231
      %p233 = scmp.ne.s32.totalorder %s219, %s220
      %p234 = scmp.eq.s32.totalorder %s34, 3
      %p235 = por %p233, %p234
      %p237 = scmp.ne.s32.totalorder %s220, %s236
      %p238 = scmp.eq.s32.totalorder %s34, 0
      %p239 = por %p237, %p238
      %s241 = sadd.s32 %s240, 1
      %p244 = scmp.eq.s32.totalorder %s28, 3
      %p245 = scmp.ne.s32.totalorder %s240, %s242
      %p246 = scmp.eq.s32.totalorder %s28, 0
      %p247 = por %p245, %p246
      %p248 = scmp.ne.s32.totalorder %s240, %s242
      %p249 = scmp.eq.s32.totalorder %s33, 3
      %p250 = por %p248, %p249
      %p251 = scmp.ne.s32.totalorder %s242, %s243
      %p252 = scmp.eq.s32.totalorder %s33, 0
      %p253 = por %p251, %p252
      %p254 = scmp.ne.s32.totalorder %s242, %s243
      %p255 = scmp.eq.s32.totalorder %s34, 3
      %p256 = por %p254, %p255
      %p258 = scmp.ne.s32.totalorder %s243, %s257
      %p259 = scmp.eq.s32.totalorder %s34, 0
      %p260 = por %p258, %p259
      %s262 = sadd.s32 %s261, 1
      %p265 = scmp.eq.s32.totalorder %s28, 3
      %p266 = scmp.ne.s32.totalorder %s261, %s263
      %p267 = scmp.eq.s32.totalorder %s28, 0
      %p268 = por %p266, %p267
      %p269 = scmp.ne.s32.totalorder %s261, %s263
      %p270 = scmp.eq.s32.totalorder %s33, 3
      %p271 = por %p269, %p270
      %p272 = scmp.ne.s32.totalorder %s263, %s264
      %p273 = scmp.eq.s32.totalorder %s33, 0
      %p274 = por %p272, %p273
      %p275 = scmp.ne.s32.totalorder %s263, %s264
      %p276 = scmp.eq.s32.totalorder %s34, 3
      %p277 = por %p275, %p276
      %p279 = scmp.ne.s32.totalorder %s264, %s278
      %p280 = scmp.eq.s32.totalorder %s34, 0
      %p281 = por %p279, %p280
      %p282 = scmp.le.s32.totalorder 1, %s28
      %p283 = scmp.lt.s32.totalorder %s28, 5
      %p284 = pnand %p282, %p283
      %p285 = pneg %p284
      // Predicated region
      $region9: #{tpu_custom_call.1} parent=5 // pred_check
        _
      $region10: #{tpu_custom_call.1} parent=5 // pred_check_branch
        %287 = sbr.rel (%p284) target = $region12
      $region11: #{tpu_custom_call.1} parent=5 // pred_region
        %s288 = ssub.s32 %s28, 1
        // Predicated region
        $region13: #{tpu_custom_call.1} parent=11 // pred_check
          %p289 = pneg %p75
        $region14: #{tpu_custom_call.1} parent=11 // pred_check_branch
          %291 = sbr.rel (%p289) target = $region16
        $region15: #{tpu_custom_call.1} parent=11 // pred_region
          %s293 = ssub.s32 6144, 6144
          %294 = vsyncadd [#allocation13], %s293
          %s295 = sshll.u32 [#allocation12], 4
          %s296 = int_to_ptr.vmem [resolvable:$true] %s295
          %301 = dma.hbm_to_vmem [thread:$0]  %s2, 6144, %s296, [#allocation13], 128, 128, 8
        $region16: #{tpu_custom_call.1} parent=11 // pred_fallthru
          _
        // Predicated region
        $region17: #{tpu_custom_call.1} parent=11 // pred_check
          %p302 = pneg %p96
        $region18: #{tpu_custom_call.1} parent=11 // pred_check_branch
          %304 = sbr.rel (%p302) target = $region20
        $region19: #{tpu_custom_call.1} parent=11 // pred_region
          _
        $region20: #{tpu_custom_call.1} parent=11 // pred_fallthru
          _
        // Predicated region
        $region21: #{tpu_custom_call.1} parent=11 // pred_check
          %p305 = pneg %p117
        $region22: #{tpu_custom_call.1} parent=11 // pred_check_branch
          %307 = sbr.rel (%p305) target = $region24
        $region23: #{tpu_custom_call.1} parent=11 // pred_region
          %s309 = ssub.s32 8192, 8192
          %310 = vsyncadd [#allocation13], %s309
          %s311 = sshll.u32 [#allocation14], 4
          %s312 = int_to_ptr.vmem [resolvable:$true] %s311
          %317 = dma.hbm_to_vmem [thread:$0]  %s4, 8192, %s312, [#allocation13], 256, 256, 16
        $region24: #{tpu_custom_call.1} parent=11 // pred_fallthru
          _
        // Predicated region
        $region25: #{tpu_custom_call.1} parent=11 // pred_check
          %p318 = pneg %p138
        $region26: #{tpu_custom_call.1} parent=11 // pred_check_branch
          %320 = sbr.rel (%p318) target = $region28
        $region27: #{tpu_custom_call.1} parent=11 // pred_region
          _
        $region28: #{tpu_custom_call.1} parent=11 // pred_fallthru
          _
        // Predicated region
        $region29: #{tpu_custom_call.1} parent=11 // pred_check
          %p321 = pneg %p159
        $region30: #{tpu_custom_call.1} parent=11 // pred_check_branch
          %323 = sbr.rel (%p321) target = $region32
        $region31: #{tpu_custom_call.1} parent=11 // pred_region
          _
        $region32: #{tpu_custom_call.1} parent=11 // pred_fallthru
          _
        // Predicated region
        $region33: #{tpu_custom_call.1} parent=11 // pred_check
          %p324 = pneg %p180
        $region34: #{tpu_custom_call.1} parent=11 // pred_check_branch
          %326 = sbr.rel (%p324) target = $region36
        $region35: #{tpu_custom_call.1} parent=11 // pred_region
          _
        $region36: #{tpu_custom_call.1} parent=11 // pred_fallthru
          _
      $region12: #{tpu_custom_call.1} parent=5 // pred_fallthru
        _
      %p327 = scmp.lt.s32.totalorder %s28, 4
      // Predicated region
      $region37: #{tpu_custom_call.1} parent=5 // pred_check
        %p328 = pneg %p327
      $region38: #{tpu_custom_call.1} parent=5 // pred_check_branch
        %330 = sbr.rel (%p328) target = $region40
      $region39: #{tpu_custom_call.1} parent=5 // pred_region
        // Predicated region
        $region41: #{tpu_custom_call.1} parent=39 // pred_check
          %p331 = pneg %p48
        $region42: #{tpu_custom_call.1} parent=39 // pred_check_branch
          %333 = sbr.rel (%p331) target = $region44
        $region43: #{tpu_custom_call.1} parent=39 // pred_region
          %s334 = sand.u32 %s38, 1
          %s335 = scalar_lea.sflag [#allocation10], %s334
          %s336 = sand.u32 %s38, 1
          %s337 = smul.addr %s336, 384
          %s338 = scalar_lea.vmem [#allocation9], %s337
          %s339 = smul.u32 32, %s28
          %s341 = ssub.s32 6144, 6144
          %342 = vsyncadd %s335, %s341
          %s343 = smul.addr %s339, 3
          %s344 = smul.addr %s343, 64
          %s345 = scalar_lea.hbm %s1, %s344
          %s346 = sshll.u32 %s338, 4
          %s347 = int_to_ptr.vmem [resolvable:$true] %s346
          %352 = dma.hbm_to_vmem [thread:$0]  %s345, 6144, %s347, %s335, 192, 192, 12
        $region44: #{tpu_custom_call.1} parent=39 // pred_fallthru
          _
      $region40: #{tpu_custom_call.1} parent=5 // pred_fallthru
        _
      %p353 = scmp.le.s32.totalorder 1, %s28
      %p354 = scmp.lt.s32.totalorder %s28, 5
      %p355 = pnand %p353, %p354
      %p356 = pneg %p355
      // Predicated region
      $region45: #{tpu_custom_call.1} parent=5 // pred_check
        _
      $region46: #{tpu_custom_call.1} parent=5 // pred_check_branch
        %358 = sbr.rel (%p355) target = $region48
      $region47: #{tpu_custom_call.1} parent=5 // pred_region
        %s359 = ssub.s32 %s28, 1
        %s360 = sand.u32 %s41, 1
        %s361 = scalar_lea.sflag [#allocation10], %s360
        %s362 = sand.u32 %s41, 1
        %s363 = smul.addr %s362, 384
        %s364 = scalar_lea.vmem [#allocation9], %s363
        // Predicated region
        $region49: #{tpu_custom_call.1} parent=47 // pred_check
          %p365 = pneg %p54
        $region50: #{tpu_custom_call.1} parent=47 // pred_check_branch
          %367 = sbr.rel (%p365) target = $region52
        $region51: #{tpu_custom_call.1} parent=47 // pred_region
          %368 = dma.done %s361, 6144
        $region52: #{tpu_custom_call.1} parent=47 // pred_fallthru
          _
        // Predicated region
        $region53: #{tpu_custom_call.1} parent=47 // pred_check
          %p369 = pneg %p75
        $region54: #{tpu_custom_call.1} parent=47 // pred_check_branch
          %371 = sbr.rel (%p369) target = $region56
        $region55: #{tpu_custom_call.1} parent=47 // pred_region
          %372 = dma.done [#allocation13], 6144
        $region56: #{tpu_custom_call.1} parent=47 // pred_fallthru
          _
        // Predicated region
        $region57: #{tpu_custom_call.1} parent=47 // pred_check
          %p373 = pneg %p117
        $region58: #{tpu_custom_call.1} parent=47 // pred_check_branch
          %375 = sbr.rel (%p373) target = $region60
        $region59: #{tpu_custom_call.1} parent=47 // pred_region
          %376 = dma.done [#allocation13], 8192
        $region60: #{tpu_custom_call.1} parent=47 // pred_fallthru
          _
        %s377 = sand.u32 %s41, 1
        %s378 = scalar_lea.sflag [#allocation10], %s377
        %s379 = sand.u32 %s41, 1
        %s380 = smul.addr %s379, 384
        %s381 = scalar_lea.vmem [#allocation9], %s380
        %p382 = pneg %p54
        %p383 = pneg %p51
        %p384 = pneg %p75
        %p385 = pneg %p72
        %p386 = pneg %p96
        %p387 = pneg %p93
        %p388 = pneg %p117
        %p389 = pneg %p114
        %p390 = pneg %p138
        %p391 = pneg %p135
        %p392 = pneg %p159
        %p393 = pneg %p156
        %p394 = pneg %p180
        %p395 = pneg %p177
        %p396 = pneg %p206
        %p397 = pneg %p203
        %s398 = smul.u32 32, %s33
        %p399 = scmp.lt.s32.totalorder %s398, 127
        %s400 = scalar_select %p399, %s398, 127
        %s401 = smul.addr %s400, 8
        %s402 = scalar_lea.vmem %s8, %s401
        %p403 = pneg %p232
        %p404 = pneg %p229
        %s405 = sand.u32 %s219, 1
        %s406 = scalar_lea.sflag [#allocation11], %s405
        %s407 = sand.u32 %s219, 1
        %s408 = smul.addr %s407, 256
        %s409 = scalar_lea.vmem [#allocation15], %s408
        %p410 = pneg %p253
        %p411 = pneg %p250
        %p412 = pneg %p274
        %p413 = pneg %p271
        %s414 = smul.u32 32, %s33
        %s415 = smul.u32 32, %s33
        %p416 = scmp.lt.s32.totalorder %s415, 127
        %s417 = scalar_select %p416, %s415, 127
        %s418 = smul.addr %s417, 8
        %s419 = scalar_lea.vmem %s8, %s418
        %s420 = smul.u32 32, %s33
        %s421 = smul.u32 32, %s33
        %p423 = scmp.eq.s32.totalorder %s33, 0
        // Predicated region
        $region61: #{tpu_custom_call.1} parent=47 // pred_check
          %p424 = pneg %p423
        $region62: #{tpu_custom_call.1} parent=47 // pred_check_branch
          %426 = sbr.rel (%p424) target = $region64
        $region63: #{tpu_custom_call.1} parent=47 // pred_region
          %vm427 = vcmask 0
          %428 = vst.msk [vmem:[#allocation4] sm:$0x1] %vm427, -inf
          %429 = vst.msk [vmem:[#allocation5] sm:$0x1] %vm427, 0.0
          %v430 = vlaneseq
          %vm431 = vcmp.ge.s32.totalorder %v430, 0
          %vm432 = vcmp.lt.s32.totalorder %v430, 384
          %vm433 = vmand %vm431, %vm432
          %434 = vst.msk [vmem:[#allocation2] sm:$0x7] %vm433, 0.0
          %vm435 = vcmp.lt.s32.totalorder %v430, 256
          %vm436 = vmand %vm431, %vm435
          %437 = vst.msk [vmem:[#allocation3] sm:$0x3] %vm436, 0.0
        $region64: #{tpu_custom_call.1} parent=47 // pred_fallthru
          _
        %v438 = vld [vmem:[%s364] sm:$0xff]
        %v439 = vld [vmem:[%s364 + $0x8] sm:$0xf]
        %v440 = vld [vmem:[%s364 + $0xc] sm:$0xff]
        %v441 = vld [vmem:[%s364 + $0x14] sm:$0xf]
        %v442 = vld [vmem:[%s364 + $0x18] sm:$0xff]
        %v443 = vld [vmem:[%s364 + $0x20] sm:$0xf]
        %v444 = vld [vmem:[%s364 + $0x24] sm:$0xff]
        %v445 = vld [vmem:[%s364 + $0x2c] sm:$0xf]
        %v446 = vld [vmem:[%s364 + $0x30] sm:$0xff]
        %v447 = vld [vmem:[%s364 + $0x38] sm:$0xf]
        %v448 = vld [vmem:[%s364 + $0x3c] sm:$0xff]
        %v449 = vld [vmem:[%s364 + $0x44] sm:$0xf]
        %v450 = vld [vmem:[%s364 + $0x48] sm:$0xff]
        %v451 = vld [vmem:[%s364 + $0x50] sm:$0xf]
        %v452 = vld [vmem:[%s364 + $0x54] sm:$0xff]
        %v453 = vld [vmem:[%s364 + $0x5c] sm:$0xf]
        %v454 = vld [vmem:[%s364 + $0x60] sm:$0xff]
        %v455 = vld [vmem:[%s364 + $0x68] sm:$0xf]
        %v456 = vld [vmem:[%s364 + $0x6c] sm:$0xff]
        %v457 = vld [vmem:[%s364 + $0x74] sm:$0xf]
        %v458 = vld [vmem:[%s364 + $0x78] sm:$0xff]
        %v459 = vld [vmem:[%s364 + $0x80] sm:$0xf]
        %v460 = vld [vmem:[%s364 + $0x84] sm:$0xff]
        %v461 = vld [vmem:[%s364 + $0x8c] sm:$0xf]
        %v462 = vld [vmem:[%s364 + $0x90] sm:$0xff]
        %v463 = vld [vmem:[%s364 + $0x98] sm:$0xf]
        %v464 = vld [vmem:[%s364 + $0x9c] sm:$0xff]
        %v465 = vld [vmem:[%s364 + $0xa4] sm:$0xf]
        %v466 = vld [vmem:[%s364 + $0xa8] sm:$0xff]
        %v467 = vld [vmem:[%s364 + $0xb0] sm:$0xf]
        %v468 = vld [vmem:[%s364 + $0xb4] sm:$0xff]
        %v469 = vld [vmem:[%s364 + $0xbc] sm:$0xf]
        %v470 = vld [vmem:[%s364 + $0xc0] sm:$0xff]
        %v471 = vld [vmem:[%s364 + $0xc8] sm:$0xf]
        %v472 = vld [vmem:[%s364 + $0xcc] sm:$0xff]
        %v473 = vld [vmem:[%s364 + $0xd4] sm:$0xf]
        %v474 = vld [vmem:[%s364 + $0xd8] sm:$0xff]
        %v475 = vld [vmem:[%s364 + $0xe0] sm:$0xf]
        %v476 = vld [vmem:[%s364 + $0xe4] sm:$0xff]
        %v477 = vld [vmem:[%s364 + $0xec] sm:$0xf]
        %v478 = vld [vmem:[%s364 + $0xf0] sm:$0xff]
        %v479 = vld [vmem:[%s364 + $0xf8] sm:$0xf]
        %v480 = vld [vmem:[%s364 + $0xfc] sm:$0xff]
        %v481 = vld [vmem:[%s364 + $0x104] sm:$0xf]
        %v482 = vld [vmem:[%s364 + $0x108] sm:$0xff]
        %v483 = vld [vmem:[%s364 + $0x110] sm:$0xf]
        %v484 = vld [vmem:[%s364 + $0x114] sm:$0xff]
        %v485 = vld [vmem:[%s364 + $0x11c] sm:$0xf]
        %v486 = vld [vmem:[%s364 + $0x120] sm:$0xff]
        %v487 = vld [vmem:[%s364 + $0x128] sm:$0xf]
        %v488 = vld [vmem:[%s364 + $0x12c] sm:$0xff]
        %v489 = vld [vmem:[%s364 + $0x134] sm:$0xf]
        %v490 = vld [vmem:[%s364 + $0x138] sm:$0xff]
        %v491 = vld [vmem:[%s364 + $0x140] sm:$0xf]
        %v492 = vld [vmem:[%s364 + $0x144] sm:$0xff]
        %v493 = vld [vmem:[%s364 + $0x14c] sm:$0xf]
        %v494 = vld [vmem:[%s364 + $0x150] sm:$0xff]
        %v495 = vld [vmem:[%s364 + $0x158] sm:$0xf]
        %v496 = vld [vmem:[%s364 + $0x15c] sm:$0xff]
        %v497 = vld [vmem:[%s364 + $0x164] sm:$0xf]
        %v498 = vld [vmem:[%s364 + $0x168] sm:$0xff]
        %v499 = vld [vmem:[%s364 + $0x170] sm:$0xf]
        %v500 = vld [vmem:[%s364 + $0x174] sm:$0xff]
        %v501 = vld [vmem:[%s364 + $0x17c] sm:$0xf]
        %v502 = vld [vmem:[#allocation12] sm:$0xff]
        %v503 = vld [vmem:[#allocation12 + $0x8] sm:$0xff]
        %v504 = vld [vmem:[#allocation12 + $0x10] sm:$0xff]
        %v505 = vld [vmem:[#allocation12 + $0x18] sm:$0xff]
        %v506 = vld [vmem:[#allocation12 + $0x20] sm:$0xff]
        %v507 = vld [vmem:[#allocation12 + $0x28] sm:$0xff]
        %v508 = vld [vmem:[#allocation12 + $0x30] sm:$0xff]
        %v509 = vld [vmem:[#allocation12 + $0x38] sm:$0xff]
        %v510 = vld [vmem:[#allocation12 + $0x40] sm:$0xff]
        %v511 = vld [vmem:[#allocation12 + $0x48] sm:$0xff]
        %v512 = vld [vmem:[#allocation12 + $0x50] sm:$0xff]
        %v513 = vld [vmem:[#allocation12 + $0x58] sm:$0xff]
        %v514 = vld [vmem:[#allocation12 + $0x60] sm:$0xff]
        %v515 = vld [vmem:[#allocation12 + $0x68] sm:$0xff]
        %v516 = vld [vmem:[#allocation12 + $0x70] sm:$0xff]
        %v517 = vld [vmem:[#allocation12 + $0x78] sm:$0xff]
        %v518 = vld [vmem:[#allocation12 + $0x80] sm:$0xff]
        %v519 = vld [vmem:[#allocation12 + $0x88] sm:$0xff]
        %v520 = vld [vmem:[#allocation12 + $0x90] sm:$0xff]
        %v521 = vld [vmem:[#allocation12 + $0x98] sm:$0xff]
        %v522 = vld [vmem:[#allocation12 + $0xa0] sm:$0xff]
        %v523 = vld [vmem:[#allocation12 + $0xa8] sm:$0xff]
        %v524 = vld [vmem:[#allocation12 + $0xb0] sm:$0xff]
        %v525 = vld [vmem:[#allocation12 + $0xb8] sm:$0xff]
        %v526 = vld [vmem:[#allocation12 + $0xc0] sm:$0xff]
        %v527 = vld [vmem:[#allocation12 + $0xc8] sm:$0xff]
        %v528 = vld [vmem:[#allocation12 + $0xd0] sm:$0xff]
        %v529 = vld [vmem:[#allocation12 + $0xd8] sm:$0xff]
        %v530 = vld [vmem:[#allocation12 + $0xe0] sm:$0xff]
        %v531 = vld [vmem:[#allocation12 + $0xe8] sm:$0xff]
        %v532 = vld [vmem:[#allocation12 + $0xf0] sm:$0xff]
        %v533 = vld [vmem:[#allocation12 + $0xf8] sm:$0xff]
        %v534 = vld [vmem:[#allocation12 + $0x100] sm:$0xff]
        %v535 = vld [vmem:[#allocation12 + $0x108] sm:$0xff]
        %v536 = vld [vmem:[#allocation12 + $0x110] sm:$0xff]
        %v537 = vld [vmem:[#allocation12 + $0x118] sm:$0xff]
        %v538 = vld [vmem:[#allocation12 + $0x120] sm:$0xff]
        %v539 = vld [vmem:[#allocation12 + $0x128] sm:$0xff]
        %v540 = vld [vmem:[#allocation12 + $0x130] sm:$0xff]
        %v541 = vld [vmem:[#allocation12 + $0x138] sm:$0xff]
        %v542 = vld [vmem:[#allocation12 + $0x140] sm:$0xff]
        %v543 = vld [vmem:[#allocation12 + $0x148] sm:$0xff]
        %v544 = vld [vmem:[#allocation12 + $0x150] sm:$0xff]
        %v545 = vld [vmem:[#allocation12 + $0x158] sm:$0xff]
        %v546 = vld [vmem:[#allocation12 + $0x160] sm:$0xff]
        %v547 = vld [vmem:[#allocation12 + $0x168] sm:$0xff]
        %v548 = vld [vmem:[#allocation12 + $0x170] sm:$0xff]
        %v549 = vld [vmem:[#allocation12 + $0x178] sm:$0xff]
        %v550 = vld [vmem:[%s3] sm:$0x3]
        %v552 = vlaneseq
        %v553 = vshrl.u32 %v552, 7
        %v554 = vsub.s32 0, %v553
        %v555 = vrot.slane %v550, %v554
        %v556 = vlaneseq
        %v557 = vshrl.u32 %v556, 7
        %v558 = vsub.s32 1, %v557
        %v559 = vrot.slane %v550, %v558
        %v626 = vunpack.c.l.b16 %v438
        %v627 = vunpack.c.h.b16 %v438
        %v628 = vunpack.c.l.b16 %v439
        %v629 = vunpack.c.l.b16 %v440
        %v630 = vunpack.c.h.b16 %v440
        %v631 = vunpack.c.l.b16 %v441
        %v632 = vunpack.c.l.b16 %v442
        %v633 = vunpack.c.h.b16 %v442
        %v634 = vunpack.c.l.b16 %v443
        %v635 = vunpack.c.l.b16 %v444
        %v636 = vunpack.c.h.b16 %v444
        %v637 = vunpack.c.l.b16 %v445
        %v638 = vunpack.c.l.b16 %v446
        %v639 = vunpack.c.h.b16 %v446
        %v640 = vunpack.c.l.b16 %v447
        %v641 = vunpack.c.l.b16 %v448
        %v642 = vunpack.c.h.b16 %v448
        %v643 = vunpack.c.l.b16 %v449
        %v644 = vunpack.c.l.b16 %v450
        %v645 = vunpack.c.h.b16 %v450
        %v646 = vunpack.c.l.b16 %v451
        %v647 = vunpack.c.l.b16 %v452
        %v648 = vunpack.c.h.b16 %v452
        %v649 = vunpack.c.l.b16 %v453
        %v650 = vunpack.c.l.b16 %v454
        %v651 = vunpack.c.h.b16 %v454
        %v652 = vunpack.c.l.b16 %v455
        %v653 = vunpack.c.l.b16 %v456
        %v654 = vunpack.c.h.b16 %v456
        %v655 = vunpack.c.l.b16 %v457
        %v656 = vunpack.c.l.b16 %v458
        %v657 = vunpack.c.h.b16 %v458
        %v658 = vunpack.c.l.b16 %v459
        %v659 = vunpack.c.l.b16 %v460
        %v660 = vunpack.c.h.b16 %v460
        %v661 = vunpack.c.l.b16 %v461
        %v662 = vunpack.c.l.b16 %v462
        %v663 = vunpack.c.h.b16 %v462
        %v664 = vunpack.c.l.b16 %v463
        %v665 = vunpack.c.l.b16 %v464
        %v666 = vunpack.c.h.b16 %v464
        %v667 = vunpack.c.l.b16 %v465
        %v668 = vunpack.c.l.b16 %v466
        %v669 = vunpack.c.h.b16 %v466
        %v670 = vunpack.c.l.b16 %v467
        %v671 = vunpack.c.l.b16 %v468
        %v672 = vunpack.c.h.b16 %v468
        %v673 = vunpack.c.l.b16 %v469
        %v674 = vunpack.c.l.b16 %v470
        %v675 = vunpack.c.h.b16 %v470
        %v676 = vunpack.c.l.b16 %v471
        %v677 = vunpack.c.l.b16 %v472
        %v678 = vunpack.c.h.b16 %v472
        %v679 = vunpack.c.l.b16 %v473
        %v680 = vunpack.c.l.b16 %v474
        %v681 = vunpack.c.h.b16 %v474
        %v682 = vunpack.c.l.b16 %v475
        %v683 = vunpack.c.l.b16 %v476
        %v684 = vunpack.c.h.b16 %v476
        %v685 = vunpack.c.l.b16 %v477
        %v686 = vunpack.c.l.b16 %v478
        %v687 = vunpack.c.h.b16 %v478
        %v688 = vunpack.c.l.b16 %v479
        %v689 = vunpack.c.l.b16 %v480
        %v690 = vunpack.c.h.b16 %v480
        %v691 = vunpack.c.l.b16 %v481
        %v692 = vunpack.c.l.b16 %v482
        %v693 = vunpack.c.h.b16 %v482
        %v694 = vunpack.c.l.b16 %v483
        %v695 = vunpack.c.l.b16 %v484
        %v696 = vunpack.c.h.b16 %v484
        %v697 = vunpack.c.l.b16 %v485
        %v698 = vunpack.c.l.b16 %v486
        %v699 = vunpack.c.h.b16 %v486
        %v700 = vunpack.c.l.b16 %v487
        %v701 = vunpack.c.l.b16 %v488
        %v702 = vunpack.c.h.b16 %v488
        %v703 = vunpack.c.l.b16 %v489
        %v704 = vunpack.c.l.b16 %v490
        %v705 = vunpack.c.h.b16 %v490
        %v706 = vunpack.c.l.b16 %v491
        %v707 = vunpack.c.l.b16 %v492
        %v708 = vunpack.c.h.b16 %v492
        %v709 = vunpack.c.l.b16 %v493
        %v710 = vunpack.c.l.b16 %v494
        %v711 = vunpack.c.h.b16 %v494
        %v712 = vunpack.c.l.b16 %v495
        %v713 = vunpack.c.l.b16 %v496
        %v714 = vunpack.c.h.b16 %v496
        %v715 = vunpack.c.l.b16 %v497
        %v716 = vunpack.c.l.b16 %v498
        %v717 = vunpack.c.h.b16 %v498
        %v718 = vunpack.c.l.b16 %v499
        %v719 = vunpack.c.l.b16 %v500
        %v720 = vunpack.c.h.b16 %v500
        %v721 = vunpack.c.l.b16 %v501
        %v722 = vpack.c.b16 %v629, %v626
        %v723 = vpack.c.b16 %v630, %v627
        %v724 = vpack.c.b16 %v631, %v628
        %v725 = vpack.c.b16 %v635, %v632
        %v726 = vpack.c.b16 %v636, %v633
        %v727 = vpack.c.b16 %v637, %v634
        %v728 = vpack.c.b16 %v641, %v638
        %v729 = vpack.c.b16 %v642, %v639
        %v730 = vpack.c.b16 %v643, %v640
        %v731 = vpack.c.b16 %v647, %v644
        %v732 = vpack.c.b16 %v648, %v645
        %v733 = vpack.c.b16 %v649, %v646
        %v734 = vpack.c.b16 %v653, %v650
        %v735 = vpack.c.b16 %v654, %v651
        %v736 = vpack.c.b16 %v655, %v652
        %v737 = vpack.c.b16 %v659, %v656
        %v738 = vpack.c.b16 %v660, %v657
        %v739 = vpack.c.b16 %v661, %v658
        %v740 = vpack.c.b16 %v665, %v662
        %v741 = vpack.c.b16 %v666, %v663
        %v742 = vpack.c.b16 %v667, %v664
        %v743 = vpack.c.b16 %v671, %v668
        %v744 = vpack.c.b16 %v672, %v669
        %v745 = vpack.c.b16 %v673, %v670
        %v746 = vpack.c.b16 %v677, %v674
        %v747 = vpack.c.b16 %v678, %v675
        %v748 = vpack.c.b16 %v679, %v676
        %v749 = vpack.c.b16 %v683, %v680
        %v750 = vpack.c.b16 %v684, %v681
        %v751 = vpack.c.b16 %v685, %v682
        %v752 = vpack.c.b16 %v689, %v686
        %v753 = vpack.c.b16 %v690, %v687
        %v754 = vpack.c.b16 %v691, %v688
        %v755 = vpack.c.b16 %v695, %v692
        %v756 = vpack.c.b16 %v696, %v693
        %v757 = vpack.c.b16 %v697, %v694
        %v758 = vpack.c.b16 %v701, %v698
        %v759 = vpack.c.b16 %v702, %v699
        %v760 = vpack.c.b16 %v703, %v700
        %v761 = vpack.c.b16 %v707, %v704
        %v762 = vpack.c.b16 %v708, %v705
        %v763 = vpack.c.b16 %v709, %v706
        %v764 = vpack.c.b16 %v713, %v710
        %v765 = vpack.c.b16 %v714, %v711
        %v766 = vpack.c.b16 %v715, %v712
        %v767 = vpack.c.b16 %v719, %v716
        %v768 = vpack.c.b16 %v720, %v717
        %v769 = vpack.c.b16 %v721, %v718
        %v866 = vunpack.c.l.b16 %v502
        %v867 = vunpack.c.h.b16 %v502
        %v868 = vunpack.c.l.b16 %v503
        %v869 = vunpack.c.h.b16 %v503
        %v870 = vunpack.c.l.b16 %v504
        %v871 = vunpack.c.h.b16 %v504
        %v872 = vunpack.c.l.b16 %v505
        %v873 = vunpack.c.h.b16 %v505
        %v874 = vunpack.c.l.b16 %v506
        %v875 = vunpack.c.h.b16 %v506
        %v876 = vunpack.c.l.b16 %v507
        %v877 = vunpack.c.h.b16 %v507
        %v878 = vunpack.c.l.b16 %v508
        %v879 = vunpack.c.h.b16 %v508
        %v880 = vunpack.c.l.b16 %v509
        %v881 = vunpack.c.h.b16 %v509
        %v882 = vunpack.c.l.b16 %v510
        %v883 = vunpack.c.h.b16 %v510
        %v884 = vunpack.c.l.b16 %v511
        %v885 = vunpack.c.h.b16 %v511
        %v886 = vunpack.c.l.b16 %v512
        %v887 = vunpack.c.h.b16 %v512
        %v888 = vunpack.c.l.b16 %v513
        %v889 = vunpack.c.h.b16 %v513
        %v890 = vunpack.c.l.b16 %v514
        %v891 = vunpack.c.h.b16 %v514
        %v892 = vunpack.c.l.b16 %v515
        %v893 = vunpack.c.h.b16 %v515
        %v894 = vunpack.c.l.b16 %v516
        %v895 = vunpack.c.h.b16 %v516
        %v896 = vunpack.c.l.b16 %v517
        %v897 = vunpack.c.h.b16 %v517
        %v898 = vunpack.c.l.b16 %v518
        %v899 = vunpack.c.h.b16 %v518
        %v900 = vunpack.c.l.b16 %v519
        %v901 = vunpack.c.h.b16 %v519
        %v902 = vunpack.c.l.b16 %v520
        %v903 = vunpack.c.h.b16 %v520
        %v904 = vunpack.c.l.b16 %v521
        %v905 = vunpack.c.h.b16 %v521
        %v906 = vunpack.c.l.b16 %v522
        %v907 = vunpack.c.h.b16 %v522
        %v908 = vunpack.c.l.b16 %v523
        %v909 = vunpack.c.h.b16 %v523
        %v910 = vunpack.c.l.b16 %v524
        %v911 = vunpack.c.h.b16 %v524
        %v912 = vunpack.c.l.b16 %v525
        %v913 = vunpack.c.h.b16 %v525
        %v914 = vunpack.c.l.b16 %v526
        %v915 = vunpack.c.h.b16 %v526
        %v916 = vunpack.c.l.b16 %v527
        %v917 = vunpack.c.h.b16 %v527
        %v918 = vunpack.c.l.b16 %v528
        %v919 = vunpack.c.h.b16 %v528
        %v920 = vunpack.c.l.b16 %v529
        %v921 = vunpack.c.h.b16 %v529
        %v922 = vunpack.c.l.b16 %v530
        %v923 = vunpack.c.h.b16 %v530
        %v924 = vunpack.c.l.b16 %v531
        %v925 = vunpack.c.h.b16 %v531
        %v926 = vunpack.c.l.b16 %v532
        %v927 = vunpack.c.h.b16 %v532
        %v928 = vunpack.c.l.b16 %v533
        %v929 = vunpack.c.h.b16 %v533
        %v930 = vunpack.c.l.b16 %v534
        %v931 = vunpack.c.h.b16 %v534
        %v932 = vunpack.c.l.b16 %v535
        %v933 = vunpack.c.h.b16 %v535
        %v934 = vunpack.c.l.b16 %v536
        %v935 = vunpack.c.h.b16 %v536
        %v936 = vunpack.c.l.b16 %v537
        %v937 = vunpack.c.h.b16 %v537
        %v938 = vunpack.c.l.b16 %v538
        %v939 = vunpack.c.h.b16 %v538
        %v940 = vunpack.c.l.b16 %v539
        %v941 = vunpack.c.h.b16 %v539
        %v942 = vunpack.c.l.b16 %v540
        %v943 = vunpack.c.h.b16 %v540
        %v944 = vunpack.c.l.b16 %v541
        %v945 = vunpack.c.h.b16 %v541
        %v946 = vunpack.c.l.b16 %v542
        %v947 = vunpack.c.h.b16 %v542
        %v948 = vunpack.c.l.b16 %v543
        %v949 = vunpack.c.h.b16 %v543
        %v950 = vunpack.c.l.b16 %v544
        %v951 = vunpack.c.h.b16 %v544
        %v952 = vunpack.c.l.b16 %v545
        %v953 = vunpack.c.h.b16 %v545
        %v954 = vunpack.c.l.b16 %v546
        %v955 = vunpack.c.h.b16 %v546
        %v956 = vunpack.c.l.b16 %v547
        %v957 = vunpack.c.h.b16 %v547
        %v958 = vunpack.c.l.b16 %v548
        %v959 = vunpack.c.h.b16 %v548
        %v960 = vunpack.c.l.b16 %v549
        %v961 = vunpack.c.h.b16 %v549
        %v962 = vpack.c.b16 %v868, %v866
        %v963 = vpack.c.b16 %v869, %v867
        %v964 = vpack.c.b16 %v872, %v870
        %v965 = vpack.c.b16 %v873, %v871
        %v966 = vpack.c.b16 %v876, %v874
        %v967 = vpack.c.b16 %v877, %v875
        %v968 = vpack.c.b16 %v880, %v878
        %v969 = vpack.c.b16 %v881, %v879
        %v970 = vpack.c.b16 %v884, %v882
        %v971 = vpack.c.b16 %v885, %v883
        %v972 = vpack.c.b16 %v888, %v886
        %v973 = vpack.c.b16 %v889, %v887
        %v974 = vpack.c.b16 %v892, %v890
        %v975 = vpack.c.b16 %v893, %v891
        %v976 = vpack.c.b16 %v896, %v894
        %v977 = vpack.c.b16 %v897, %v895
        %v978 = vpack.c.b16 %v900, %v898
        %v979 = vpack.c.b16 %v901, %v899
        %v980 = vpack.c.b16 %v904, %v902
        %v981 = vpack.c.b16 %v905, %v903
        %v982 = vpack.c.b16 %v908, %v906
        %v983 = vpack.c.b16 %v909, %v907
        %v984 = vpack.c.b16 %v912, %v910
        %v985 = vpack.c.b16 %v913, %v911
        %v986 = vpack.c.b16 %v916, %v914
        %v987 = vpack.c.b16 %v917, %v915
        %v988 = vpack.c.b16 %v920, %v918
        %v989 = vpack.c.b16 %v921, %v919
        %v990 = vpack.c.b16 %v924, %v922
        %v991 = vpack.c.b16 %v925, %v923
        %v992 = vpack.c.b16 %v928, %v926
        %v993 = vpack.c.b16 %v929, %v927
        %v994 = vpack.c.b16 %v932, %v930
        %v995 = vpack.c.b16 %v933, %v931
        %v996 = vpack.c.b16 %v936, %v934
        %v997 = vpack.c.b16 %v937, %v935
        %v998 = vpack.c.b16 %v940, %v938
        %v999 = vpack.c.b16 %v941, %v939
        %v1000 = vpack.c.b16 %v944, %v942
        %v1001 = vpack.c.b16 %v945, %v943
        %v1002 = vpack.c.b16 %v948, %v946
        %v1003 = vpack.c.b16 %v949, %v947
        %v1004 = vpack.c.b16 %v952, %v950
        %v1005 = vpack.c.b16 %v953, %v951
        %v1006 = vpack.c.b16 %v956, %v954
        %v1007 = vpack.c.b16 %v957, %v955
        %v1008 = vpack.c.b16 %v960, %v958
        %v1009 = vpack.c.b16 %v961, %v959
        %1058 = vmatprep.subr.bf16.mxu0 %v977
        %1059 = vmatpush1.bf16.msra.mxu0 %v976
        %1060 = vmatprep.subr.bf16.mxu0 %v975
        %1061 = vmatpush1.bf16.msra.mxu0 %v974
        %1062 = vmatprep.subr.bf16.mxu0 %v973
        %1063 = vmatpush1.bf16.msra.mxu0 %v972
        %1064 = vmatprep.subr.bf16.mxu0 %v971
        %1065 = vmatpush1.bf16.msra.mxu0 %v970
        %1066 = vmatprep.subr.bf16.mxu0 %v969
        %1067 = vmatpush1.bf16.msra.mxu0 %v968
        %1068 = vmatprep.subr.bf16.mxu0 %v967
        %1069 = vmatpush1.bf16.msra.mxu0 %v966
        %1070 = vmatprep.subr.bf16.mxu0 %v965
        %1071 = vmatpush1.bf16.msra.mxu0 %v964
        %1072 = vmatprep.subr.bf16.mxu0 %v963
        %1073 = vmatpush1.bf16.msra.mxu0 %v962
        %1074 = vmatprep.subr.bf16.mxu0 %v993
        %1075 = vmatpush2.bf16.msra.mxu0 %v992
        %1076 = vmatprep.subr.bf16.mxu0 %v991
        %1077 = vmatpush2.bf16.msra.mxu0 %v990
        %1078 = vmatprep.subr.bf16.mxu0 %v989
        %1079 = vmatpush2.bf16.msra.mxu0 %v988
        %1080 = vmatprep.subr.bf16.mxu0 %v987
        %1081 = vmatpush2.bf16.msra.mxu0 %v986
        %1082 = vmatprep.subr.bf16.mxu0 %v985
        %1083 = vmatpush2.bf16.msra.mxu0 %v984
        %1084 = vmatprep.subr.bf16.mxu0 %v983
        %1085 = vmatpush2.bf16.msra.mxu0 %v982
        %1086 = vmatprep.subr.bf16.mxu0 %v981
        %1087 = vmatpush2.bf16.msra.mxu0 %v980
        %1088 = vmatprep.subr.bf16.mxu0 %v979
        %1089 = vmatpush2.bf16.msra.mxu0 %v978
        %1090 = vmatprep.mubr.bf16.mxu0 %v723
        %1091 = vmatmul.mubr.bf16.gmra.mxu0 %v722
        %v1092 = vpop.f32.mrf.mxu0
        %v1093 = vadd.f32 %v555, %v1092
        %v1094 = vpop.f32.mrf.mxu0
        %v1095 = vadd.f32 %v559, %v1094
        %v1096 = vpop.f32.mrf.mxu0
        %v1097 = vadd.f32 %v555, %v1096
        %v1098 = vpop.f32.mrf.mxu0
        %v1099 = vadd.f32 %v559, %v1098
        %1100 = vmatprep.mubr.bf16.mxu0 %v726
        %1101 = vmatmul.mubr.bf16.gmra.mxu0 %v725
        %v1102 = vpop.f32.mrf.mxu0
        %v1103 = vadd.f32 %v555, %v1102
        %v1104 = vpop.f32.mrf.mxu0
        %v1105 = vadd.f32 %v559, %v1104
        %v1106 = vpop.f32.mrf.mxu0
        %v1107 = vadd.f32 %v555, %v1106
        %v1108 = vpop.f32.mrf.mxu0
        %v1109 = vadd.f32 %v559, %v1108
        %1110 = vmatprep.mubr.bf16.mxu0 %v729
        %1111 = vmatmul.mubr.bf16.gmra.mxu0 %v728
        %v1112 = vpop.f32.mrf.mxu0
        %v1113 = vadd.f32 %v555, %v1112
        %v1114 = vpop.f32.mrf.mxu0
        %v1115 = vadd.f32 %v559, %v1114
        %v1116 = vpop.f32.mrf.mxu0
        %v1117 = vadd.f32 %v555, %v1116
        %v1118 = vpop.f32.mrf.mxu0
        %v1119 = vadd.f32 %v559, %v1118
        %1120 = vmatprep.mubr.bf16.mxu0 %v732
        %1121 = vmatmul.mubr.bf16.gmra.mxu0 %v731
        %v1122 = vpop.f32.mrf.mxu0
        %v1123 = vadd.f32 %v555, %v1122
        %v1124 = vpop.f32.mrf.mxu0
        %v1125 = vadd.f32 %v559, %v1124
        %v1126 = vpop.f32.mrf.mxu0
        %v1127 = vadd.f32 %v555, %v1126
        %v1128 = vpop.f32.mrf.mxu0
        %v1129 = vadd.f32 %v559, %v1128
        %1130 = vmatprep.mubr.bf16.mxu0 %v735
        %1131 = vmatmul.mubr.bf16.gmra.mxu0 %v734
        %v1132 = vpop.f32.mrf.mxu0
        %v1133 = vadd.f32 %v555, %v1132
        %v1134 = vpop.f32.mrf.mxu0
        %v1135 = vadd.f32 %v559, %v1134
        %v1136 = vpop.f32.mrf.mxu0
        %v1137 = vadd.f32 %v555, %v1136
        %v1138 = vpop.f32.mrf.mxu0
        %v1139 = vadd.f32 %v559, %v1138
        %1140 = vmatprep.mubr.bf16.mxu0 %v738
        %1141 = vmatmul.mubr.bf16.gmra.mxu0 %v737
        %v1142 = vpop.f32.mrf.mxu0
        %v1143 = vadd.f32 %v555, %v1142
        %v1144 = vpop.f32.mrf.mxu0
        %v1145 = vadd.f32 %v559, %v1144
        %v1146 = vpop.f32.mrf.mxu0
        %v1147 = vadd.f32 %v555, %v1146
        %v1148 = vpop.f32.mrf.mxu0
        %v1149 = vadd.f32 %v559, %v1148
        %1150 = vmatprep.mubr.bf16.mxu0 %v741
        %1151 = vmatmul.mubr.bf16.gmra.mxu0 %v740
        %v1152 = vpop.f32.mrf.mxu0
        %v1153 = vadd.f32 %v555, %v1152
        %v1154 = vpop.f32.mrf.mxu0
        %v1155 = vadd.f32 %v559, %v1154
        %v1156 = vpop.f32.mrf.mxu0
        %v1157 = vadd.f32 %v555, %v1156
        %v1158 = vpop.f32.mrf.mxu0
        %v1159 = vadd.f32 %v559, %v1158
        %1160 = vmatprep.mubr.bf16.mxu0 %v744
        %1161 = vmatmul.mubr.bf16.gmra.mxu0 %v743
        %v1162 = vpop.f32.mrf.mxu0
        %v1163 = vadd.f32 %v555, %v1162
        %v1164 = vpop.f32.mrf.mxu0
        %v1165 = vadd.f32 %v559, %v1164
        %v1166 = vpop.f32.mrf.mxu0
        %v1167 = vadd.f32 %v555, %v1166
        %v1168 = vpop.f32.mrf.mxu0
        %v1169 = vadd.f32 %v559, %v1168
        %1170 = vmatprep.mubr.bf16.mxu0 %v747
        %1171 = vmatmul.mubr.bf16.gmra.mxu0 %v746
        %v1172 = vpop.f32.mrf.mxu0
        %v1173 = vadd.f32 %v555, %v1172
        %v1174 = vpop.f32.mrf.mxu0
        %v1175 = vadd.f32 %v559, %v1174
        %v1176 = vpop.f32.mrf.mxu0
        %v1177 = vadd.f32 %v555, %v1176
        %v1178 = vpop.f32.mrf.mxu0
        %v1179 = vadd.f32 %v559, %v1178
        %1180 = vmatprep.mubr.bf16.mxu0 %v750
        %1181 = vmatmul.mubr.bf16.gmra.mxu0 %v749
        %v1182 = vpop.f32.mrf.mxu0
        %v1183 = vadd.f32 %v555, %v1182
        %v1184 = vpop.f32.mrf.mxu0
        %v1185 = vadd.f32 %v559, %v1184
        %v1186 = vpop.f32.mrf.mxu0
        %v1187 = vadd.f32 %v555, %v1186
        %v1188 = vpop.f32.mrf.mxu0
        %v1189 = vadd.f32 %v559, %v1188
        %1190 = vmatprep.mubr.bf16.mxu0 %v753
        %1191 = vmatmul.mubr.bf16.gmra.mxu0 %v752
        %v1192 = vpop.f32.mrf.mxu0
        %v1193 = vadd.f32 %v555, %v1192
        %v1194 = vpop.f32.mrf.mxu0
        %v1195 = vadd.f32 %v559, %v1194
        %v1196 = vpop.f32.mrf.mxu0
        %v1197 = vadd.f32 %v555, %v1196
        %v1198 = vpop.f32.mrf.mxu0
        %v1199 = vadd.f32 %v559, %v1198
        %1200 = vmatprep.mubr.bf16.mxu0 %v756
        %1201 = vmatmul.mubr.bf16.gmra.mxu0 %v755
        %v1202 = vpop.f32.mrf.mxu0
        %v1203 = vadd.f32 %v555, %v1202
        %v1204 = vpop.f32.mrf.mxu0
        %v1205 = vadd.f32 %v559, %v1204
        %v1206 = vpop.f32.mrf.mxu0
        %v1207 = vadd.f32 %v555, %v1206
        %v1208 = vpop.f32.mrf.mxu0
        %v1209 = vadd.f32 %v559, %v1208
        %1210 = vmatprep.mubr.bf16.mxu0 %v759
        %1211 = vmatmul.mubr.bf16.gmra.mxu0 %v758
        %v1212 = vpop.f32.mrf.mxu0
        %v1213 = vadd.f32 %v555, %v1212
        %v1214 = vpop.f32.mrf.mxu0
        %v1215 = vadd.f32 %v559, %v1214
        %v1216 = vpop.f32.mrf.mxu0
        %v1217 = vadd.f32 %v555, %v1216
        %v1218 = vpop.f32.mrf.mxu0
        %v1219 = vadd.f32 %v559, %v1218
        %1220 = vmatprep.mubr.bf16.mxu0 %v762
        %1221 = vmatmul.mubr.bf16.gmra.mxu0 %v761
        %v1222 = vpop.f32.mrf.mxu0
        %v1223 = vadd.f32 %v555, %v1222
        %v1224 = vpop.f32.mrf.mxu0
        %v1225 = vadd.f32 %v559, %v1224
        %v1226 = vpop.f32.mrf.mxu0
        %v1227 = vadd.f32 %v555, %v1226
        %v1228 = vpop.f32.mrf.mxu0
        %v1229 = vadd.f32 %v559, %v1228
        %1230 = vmatprep.mubr.bf16.mxu0 %v765
        %1231 = vmatmul.mubr.bf16.gmra.mxu0 %v764
        %v1232 = vpop.f32.mrf.mxu0
        %v1233 = vadd.f32 %v555, %v1232
        %v1234 = vpop.f32.mrf.mxu0
        %v1235 = vadd.f32 %v559, %v1234
        %v1236 = vpop.f32.mrf.mxu0
        %v1237 = vadd.f32 %v555, %v1236
        %v1238 = vpop.f32.mrf.mxu0
        %v1239 = vadd.f32 %v559, %v1238
        %1240 = vmatprep.mubr.bf16.mxu0 %v768
        %1241 = vmatmul.mubr.bf16.gmra.mxu0 %v767
        %v1242 = vpop.f32.mrf.mxu0
        %v1243 = vadd.f32 %v555, %v1242
        %v1244 = vpop.f32.mrf.mxu0
        %v1245 = vadd.f32 %v559, %v1244
        %v1246 = vpop.f32.mrf.mxu0
        %v1247 = vadd.f32 %v555, %v1246
        %v1248 = vpop.f32.mrf.mxu0
        %v1249 = vadd.f32 %v559, %v1248
        %1250 = vdwg.mxu0
        %1251 = vmatprep.subr.bf16.mxu0 %v1009
        %1252 = vmatpush1.bf16.msra.mxu0 %v1008
        %1253 = vmatprep.subr.bf16.mxu0 %v1007
        %1254 = vmatpush1.bf16.msra.mxu0 %v1006
        %1255 = vmatprep.subr.bf16.mxu0 %v1005
        %1256 = vmatpush1.bf16.msra.mxu0 %v1004
        %1257 = vmatprep.subr.bf16.mxu0 %v1003
        %1258 = vmatpush1.bf16.msra.mxu0 %v1002
        %1259 = vmatprep.subr.bf16.mxu0 %v1001
        %1260 = vmatpush1.bf16.msra.mxu0 %v1000
        %1261 = vmatprep.subr.bf16.mxu0 %v999
        %1262 = vmatpush1.bf16.msra.mxu0 %v998
        %1263 = vmatprep.subr.bf16.mxu0 %v997
        %1264 = vmatpush1.bf16.msra.mxu0 %v996
        %1265 = vmatprep.subr.bf16.mxu0 %v995
        %1266 = vmatpush1.bf16.msra.mxu0 %v994
        %1267 = vmatprep.subr.bf16.mxu0 0
        %1268 = vmatpush2.bf16.msra.mxu0 0
        %1269 = vmatprep.subr.bf16.mxu0 0
        %1270 = vmatpush2.bf16.msra.mxu0 0
        %1271 = vmatprep.subr.bf16.mxu0 0
        %1272 = vmatpush2.bf16.msra.mxu0 0
        %1273 = vmatprep.subr.bf16.mxu0 0
        %1274 = vmatpush2.bf16.msra.mxu0 0
        %1275 = vmatprep.subr.bf16.mxu0 0
        %1276 = vmatpush2.bf16.msra.mxu0 0
        %1277 = vmatprep.subr.bf16.mxu0 0
        %1278 = vmatpush2.bf16.msra.mxu0 0
        %1279 = vmatprep.subr.bf16.mxu0 0
        %1280 = vmatpush2.bf16.msra.mxu0 0
        %1281 = vmatprep.subr.bf16.mxu0 0
        %1282 = vmatpush2.bf16.msra.mxu0 0
        %1283 = vmatprep.mubr.bf16.mxu0 0
        %1284 = vmatmul.mubr.bf16.gmra.mxu0 %v724
        %v1285 = vpop.f32.mrf.mxu0
        %v1286 = vadd.f32 %v1093, %v1285
        %v1287 = vpop.f32.mrf.mxu0
        %v1288 = vadd.f32 %v1095, %v1287
        %v1289 = vpop.f32.mrf.mxu0
        %v1290 = vadd.f32 %v1097, %v1289
        %v1291 = vpop.f32.mrf.mxu0
        %v1292 = vadd.f32 %v1099, %v1291
        %1293 = vmatprep.mubr.bf16.mxu0 0
        %1294 = vmatmul.mubr.bf16.gmra.mxu0 %v727
        %v1295 = vpop.f32.mrf.mxu0
        %v1296 = vadd.f32 %v1103, %v1295
        %v1297 = vpop.f32.mrf.mxu0
        %v1298 = vadd.f32 %v1105, %v1297
        %v1299 = vpop.f32.mrf.mxu0
        %v1300 = vadd.f32 %v1107, %v1299
        %v1301 = vpop.f32.mrf.mxu0
        %v1302 = vadd.f32 %v1109, %v1301
        %1303 = vmatprep.mubr.bf16.mxu0 0
        %1304 = vmatmul.mubr.bf16.gmra.mxu0 %v730
        %v1305 = vpop.f32.mrf.mxu0
        %v1306 = vadd.f32 %v1113, %v1305
        %v1307 = vpop.f32.mrf.mxu0
        %v1308 = vadd.f32 %v1115, %v1307
        %v1309 = vpop.f32.mrf.mxu0
        %v1310 = vadd.f32 %v1117, %v1309
        %v1311 = vpop.f32.mrf.mxu0
        %v1312 = vadd.f32 %v1119, %v1311
        %1313 = vmatprep.mubr.bf16.mxu0 0
        %1314 = vmatmul.mubr.bf16.gmra.mxu0 %v733
        %v1315 = vpop.f32.mrf.mxu0
        %v1316 = vadd.f32 %v1123, %v1315
        %v1317 = vpop.f32.mrf.mxu0
        %v1318 = vadd.f32 %v1125, %v1317
        %v1319 = vpop.f32.mrf.mxu0
        %v1320 = vadd.f32 %v1127, %v1319
        %v1321 = vpop.f32.mrf.mxu0
        %v1322 = vadd.f32 %v1129, %v1321
        %1323 = vmatprep.mubr.bf16.mxu0 0
        %1324 = vmatmul.mubr.bf16.gmra.mxu0 %v736
        %v1325 = vpop.f32.mrf.mxu0
        %v1326 = vadd.f32 %v1133, %v1325
        %v1327 = vpop.f32.mrf.mxu0
        %v1328 = vadd.f32 %v1135, %v1327
        %v1329 = vpop.f32.mrf.mxu0
        %v1330 = vadd.f32 %v1137, %v1329
        %v1331 = vpop.f32.mrf.mxu0
        %v1332 = vadd.f32 %v1139, %v1331
        %1333 = vmatprep.mubr.bf16.mxu0 0
        %1334 = vmatmul.mubr.bf16.gmra.mxu0 %v739
        %v1335 = vpop.f32.mrf.mxu0
        %v1336 = vadd.f32 %v1143, %v1335
        %v1337 = vpop.f32.mrf.mxu0
        %v1338 = vadd.f32 %v1145, %v1337
        %v1339 = vpop.f32.mrf.mxu0
        %v1340 = vadd.f32 %v1147, %v1339
        %v1341 = vpop.f32.mrf.mxu0
        %v1342 = vadd.f32 %v1149, %v1341
        %1343 = vmatprep.mubr.bf16.mxu0 0
        %1344 = vmatmul.mubr.bf16.gmra.mxu0 %v742
        %v1345 = vpop.f32.mrf.mxu0
        %v1346 = vadd.f32 %v1153, %v1345
        %v1347 = vpop.f32.mrf.mxu0
        %v1348 = vadd.f32 %v1155, %v1347
        %v1349 = vpop.f32.mrf.mxu0
        %v1350 = vadd.f32 %v1157, %v1349
        %v1351 = vpop.f32.mrf.mxu0
        %v1352 = vadd.f32 %v1159, %v1351
        %1353 = vmatprep.mubr.bf16.mxu0 0
        %1354 = vmatmul.mubr.bf16.gmra.mxu0 %v745
        %v1355 = vpop.f32.mrf.mxu0
        %v1356 = vadd.f32 %v1163, %v1355
        %v1357 = vpop.f32.mrf.mxu0
        %v1358 = vadd.f32 %v1165, %v1357
        %v1359 = vpop.f32.mrf.mxu0
        %v1360 = vadd.f32 %v1167, %v1359
        %v1361 = vpop.f32.mrf.mxu0
        %v1362 = vadd.f32 %v1169, %v1361
        %1363 = vmatprep.mubr.bf16.mxu0 0
        %1364 = vmatmul.mubr.bf16.gmra.mxu0 %v748
        %v1365 = vpop.f32.mrf.mxu0
        %v1366 = vadd.f32 %v1173, %v1365
        %v1367 = vpop.f32.mrf.mxu0
        %v1368 = vadd.f32 %v1175, %v1367
        %v1369 = vpop.f32.mrf.mxu0
        %v1370 = vadd.f32 %v1177, %v1369
        %v1371 = vpop.f32.mrf.mxu0
        %v1372 = vadd.f32 %v1179, %v1371
        %1373 = vmatprep.mubr.bf16.mxu0 0
        %1374 = vmatmul.mubr.bf16.gmra.mxu0 %v751
        %v1375 = vpop.f32.mrf.mxu0
        %v1376 = vadd.f32 %v1183, %v1375
        %v1377 = vpop.f32.mrf.mxu0
        %v1378 = vadd.f32 %v1185, %v1377
        %v1379 = vpop.f32.mrf.mxu0
        %v1380 = vadd.f32 %v1187, %v1379
        %v1381 = vpop.f32.mrf.mxu0
        %v1382 = vadd.f32 %v1189, %v1381
        %1383 = vmatprep.mubr.bf16.mxu0 0
        %1384 = vmatmul.mubr.bf16.gmra.mxu0 %v754
        %v1385 = vpop.f32.mrf.mxu0
        %v1386 = vadd.f32 %v1193, %v1385
        %v1387 = vpop.f32.mrf.mxu0
        %v1388 = vadd.f32 %v1195, %v1387
        %v1389 = vpop.f32.mrf.mxu0
        %v1390 = vadd.f32 %v1197, %v1389
        %v1391 = vpop.f32.mrf.mxu0
        %v1392 = vadd.f32 %v1199, %v1391
        %1393 = vmatprep.mubr.bf16.mxu0 0
        %1394 = vmatmul.mubr.bf16.gmra.mxu0 %v757
        %v1395 = vpop.f32.mrf.mxu0
        %v1396 = vadd.f32 %v1203, %v1395
        %v1397 = vpop.f32.mrf.mxu0
        %v1398 = vadd.f32 %v1205, %v1397
        %v1399 = vpop.f32.mrf.mxu0
        %v1400 = vadd.f32 %v1207, %v1399
        %v1401 = vpop.f32.mrf.mxu0
        %v1402 = vadd.f32 %v1209, %v1401
        %1403 = vmatprep.mubr.bf16.mxu0 0
        %1404 = vmatmul.mubr.bf16.gmra.mxu0 %v760
        %v1405 = vpop.f32.mrf.mxu0
        %v1406 = vadd.f32 %v1213, %v1405
        %v1407 = vpop.f32.mrf.mxu0
        %v1408 = vadd.f32 %v1215, %v1407
        %v1409 = vpop.f32.mrf.mxu0
        %v1410 = vadd.f32 %v1217, %v1409
        %v1411 = vpop.f32.mrf.mxu0
        %v1412 = vadd.f32 %v1219, %v1411
        %1413 = vmatprep.mubr.bf16.mxu0 0
        %1414 = vmatmul.mubr.bf16.gmra.mxu0 %v763
        %v1415 = vpop.f32.mrf.mxu0
        %v1416 = vadd.f32 %v1223, %v1415
        %v1417 = vpop.f32.mrf.mxu0
        %v1418 = vadd.f32 %v1225, %v1417
        %v1419 = vpop.f32.mrf.mxu0
        %v1420 = vadd.f32 %v1227, %v1419
        %v1421 = vpop.f32.mrf.mxu0
        %v1422 = vadd.f32 %v1229, %v1421
        %1423 = vmatprep.mubr.bf16.mxu0 0
        %1424 = vmatmul.mubr.bf16.gmra.mxu0 %v766
        %v1425 = vpop.f32.mrf.mxu0
        %v1426 = vadd.f32 %v1233, %v1425
        %v1427 = vpop.f32.mrf.mxu0
        %v1428 = vadd.f32 %v1235, %v1427
        %v1429 = vpop.f32.mrf.mxu0
        %v1430 = vadd.f32 %v1237, %v1429
        %v1431 = vpop.f32.mrf.mxu0
        %v1432 = vadd.f32 %v1239, %v1431
        %1433 = vmatprep.mubr.bf16.mxu0 0
        %1434 = vmatmul.mubr.bf16.gmra.mxu0 %v769
        %v1435 = vpop.f32.mrf.mxu0
        %v1436 = vadd.f32 %v1243, %v1435
        %v1437 = vpop.f32.mrf.mxu0
        %v1438 = vadd.f32 %v1245, %v1437
        %v1439 = vpop.f32.mrf.mxu0
        %v1440 = vadd.f32 %v1247, %v1439
        %v1441 = vpop.f32.mrf.mxu0
        %v1442 = vadd.f32 %v1249, %v1441
        %1443 = vdwg.mxu0
        %v1444 = vmax.f32 %v1286, 0.0
        %v1445 = vmax.f32 %v1288, 0.0
        %v1446 = vmax.f32 %v1290, 0.0
        %v1447 = vmax.f32 %v1292, 0.0
        %v1448 = vmax.f32 %v1296, 0.0
        %v1449 = vmax.f32 %v1298, 0.0
        %v1450 = vmax.f32 %v1300, 0.0
        %v1451 = vmax.f32 %v1302, 0.0
        %v1452 = vmax.f32 %v1306, 0.0
        %v1453 = vmax.f32 %v1308, 0.0
        %v1454 = vmax.f32 %v1310, 0.0
        %v1455 = vmax.f32 %v1312, 0.0
        %v1456 = vmax.f32 %v1316, 0.0
        %v1457 = vmax.f32 %v1318, 0.0
        %v1458 = vmax.f32 %v1320, 0.0
        %v1459 = vmax.f32 %v1322, 0.0
        %v1460 = vmax.f32 %v1326, 0.0
        %v1461 = vmax.f32 %v1328, 0.0
        %v1462 = vmax.f32 %v1330, 0.0
        %v1463 = vmax.f32 %v1332, 0.0
        %v1464 = vmax.f32 %v1336, 0.0
        %v1465 = vmax.f32 %v1338, 0.0
        %v1466 = vmax.f32 %v1340, 0.0
        %v1467 = vmax.f32 %v1342, 0.0
        %v1468 = vmax.f32 %v1346, 0.0
        %v1469 = vmax.f32 %v1348, 0.0
        %v1470 = vmax.f32 %v1350, 0.0
        %v1471 = vmax.f32 %v1352, 0.0
        %v1472 = vmax.f32 %v1356, 0.0
        %v1473 = vmax.f32 %v1358, 0.0
        %v1474 = vmax.f32 %v1360, 0.0
        %v1475 = vmax.f32 %v1362, 0.0
        %v1476 = vmax.f32 %v1366, 0.0
        %v1477 = vmax.f32 %v1368, 0.0
        %v1478 = vmax.f32 %v1370, 0.0
        %v1479 = vmax.f32 %v1372, 0.0
        %v1480 = vmax.f32 %v1376, 0.0
        %v1481 = vmax.f32 %v1378, 0.0
        %v1482 = vmax.f32 %v1380, 0.0
        %v1483 = vmax.f32 %v1382, 0.0
        %v1484 = vmax.f32 %v1386, 0.0
        %v1485 = vmax.f32 %v1388, 0.0
        %v1486 = vmax.f32 %v1390, 0.0
        %v1487 = vmax.f32 %v1392, 0.0
        %v1488 = vmax.f32 %v1396, 0.0
        %v1489 = vmax.f32 %v1398, 0.0
        %v1490 = vmax.f32 %v1400, 0.0
        %v1491 = vmax.f32 %v1402, 0.0
        %v1492 = vmax.f32 %v1406, 0.0
        %v1493 = vmax.f32 %v1408, 0.0
        %v1494 = vmax.f32 %v1410, 0.0
        %v1495 = vmax.f32 %v1412, 0.0
        %v1496 = vmax.f32 %v1416, 0.0
        %v1497 = vmax.f32 %v1418, 0.0
        %v1498 = vmax.f32 %v1420, 0.0
        %v1499 = vmax.f32 %v1422, 0.0
        %v1500 = vmax.f32 %v1426, 0.0
        %v1501 = vmax.f32 %v1428, 0.0
        %v1502 = vmax.f32 %v1430, 0.0
        %v1503 = vmax.f32 %v1432, 0.0
        %v1504 = vmax.f32 %v1436, 0.0
        %v1505 = vmax.f32 %v1438, 0.0
        %v1506 = vmax.f32 %v1440, 0.0
        %v1507 = vmax.f32 %v1442, 0.0
        %v1508 = vpack.c.bf16 %v1446, %v1444
        %v1509 = vpack.c.bf16 %v1447, %v1445
        %v1510 = vpack.c.bf16 %v1450, %v1448
        %v1511 = vpack.c.bf16 %v1451, %v1449
        %v1512 = vpack.c.bf16 %v1454, %v1452
        %v1513 = vpack.c.bf16 %v1455, %v1453
        %v1514 = vpack.c.bf16 %v1458, %v1456
        %v1515 = vpack.c.bf16 %v1459, %v1457
        %v1516 = vpack.c.bf16 %v1462, %v1460
        %v1517 = vpack.c.bf16 %v1463, %v1461
        %v1518 = vpack.c.bf16 %v1466, %v1464
        %v1519 = vpack.c.bf16 %v1467, %v1465
        %v1520 = vpack.c.bf16 %v1470, %v1468
        %v1521 = vpack.c.bf16 %v1471, %v1469
        %v1522 = vpack.c.bf16 %v1474, %v1472
        %v1523 = vpack.c.bf16 %v1475, %v1473
        %v1524 = vpack.c.bf16 %v1478, %v1476
        %v1525 = vpack.c.bf16 %v1479, %v1477
        %v1526 = vpack.c.bf16 %v1482, %v1480
        %v1527 = vpack.c.bf16 %v1483, %v1481
        %v1528 = vpack.c.bf16 %v1486, %v1484
        %v1529 = vpack.c.bf16 %v1487, %v1485
        %v1530 = vpack.c.bf16 %v1490, %v1488
        %v1531 = vpack.c.bf16 %v1491, %v1489
        %v1532 = vpack.c.bf16 %v1494, %v1492
        %v1533 = vpack.c.bf16 %v1495, %v1493
        %v1534 = vpack.c.bf16 %v1498, %v1496
        %v1535 = vpack.c.bf16 %v1499, %v1497
        %v1536 = vpack.c.bf16 %v1502, %v1500
        %v1537 = vpack.c.bf16 %v1503, %v1501
        %v1538 = vpack.c.bf16 %v1506, %v1504
        %v1539 = vpack.c.bf16 %v1507, %v1505
        %v1540 = vld [vmem:[#allocation14] sm:$0xff]
        %v1541 = vld [vmem:[#allocation14 + $0x8] sm:$0xff]
        %v1542 = vld [vmem:[#allocation14 + $0x10] sm:$0xff]
        %v1543 = vld [vmem:[#allocation14 + $0x18] sm:$0xff]
        %v1544 = vld [vmem:[#allocation14 + $0x20] sm:$0xff]
        %v1545 = vld [vmem:[#allocation14 + $0x28] sm:$0xff]
        %v1546 = vld [vmem:[#allocation14 + $0x30] sm:$0xff]
        %v1547 = vld [vmem:[#allocation14 + $0x38] sm:$0xff]
        %v1548 = vld [vmem:[#allocation14 + $0x40] sm:$0xff]
        %v1549 = vld [vmem:[#allocation14 + $0x48] sm:$0xff]
        %v1550 = vld [vmem:[#allocation14 + $0x50] sm:$0xff]
        %v1551 = vld [vmem:[#allocation14 + $0x58] sm:$0xff]
        %v1552 = vld [vmem:[#allocation14 + $0x60] sm:$0xff]
        %v1553 = vld [vmem:[#allocation14 + $0x68] sm:$0xff]
        %v1554 = vld [vmem:[#allocation14 + $0x70] sm:$0xff]
        %v1555 = vld [vmem:[#allocation14 + $0x78] sm:$0xff]
        %v1556 = vld [vmem:[#allocation14 + $0x80] sm:$0xff]
        %v1557 = vld [vmem:[#allocation14 + $0x88] sm:$0xff]
        %v1558 = vld [vmem:[#allocation14 + $0x90] sm:$0xff]
        %v1559 = vld [vmem:[#allocation14 + $0x98] sm:$0xff]
        %v1560 = vld [vmem:[#allocation14 + $0xa0] sm:$0xff]
        %v1561 = vld [vmem:[#allocation14 + $0xa8] sm:$0xff]
        %v1562 = vld [vmem:[#allocation14 + $0xb0] sm:$0xff]
        %v1563 = vld [vmem:[#allocation14 + $0xb8] sm:$0xff]
        %v1564 = vld [vmem:[#allocation14 + $0xc0] sm:$0xff]
        %v1565 = vld [vmem:[#allocation14 + $0xc8] sm:$0xff]
        %v1566 = vld [vmem:[#allocation14 + $0xd0] sm:$0xff]
        %v1567 = vld [vmem:[#allocation14 + $0xd8] sm:$0xff]
        %v1568 = vld [vmem:[#allocation14 + $0xe0] sm:$0xff]
        %v1569 = vld [vmem:[#allocation14 + $0xe8] sm:$0xff]
        %v1570 = vld [vmem:[#allocation14 + $0xf0] sm:$0xff]
        %v1571 = vld [vmem:[#allocation14 + $0xf8] sm:$0xff]
        %v1572 = vld [vmem:[#allocation14 + $0x100] sm:$0xff]
        %v1573 = vld [vmem:[#allocation14 + $0x108] sm:$0xff]
        %v1574 = vld [vmem:[#allocation14 + $0x110] sm:$0xff]
        %v1575 = vld [vmem:[#allocation14 + $0x118] sm:$0xff]
        %v1576 = vld [vmem:[#allocation14 + $0x120] sm:$0xff]
        %v1577 = vld [vmem:[#allocation14 + $0x128] sm:$0xff]
        %v1578 = vld [vmem:[#allocation14 + $0x130] sm:$0xff]
        %v1579 = vld [vmem:[#allocation14 + $0x138] sm:$0xff]
        %v1580 = vld [vmem:[#allocation14 + $0x140] sm:$0xff]
        %v1581 = vld [vmem:[#allocation14 + $0x148] sm:$0xff]
        %v1582 = vld [vmem:[#allocation14 + $0x150] sm:$0xff]
        %v1583 = vld [vmem:[#allocation14 + $0x158] sm:$0xff]
        %v1584 = vld [vmem:[#allocation14 + $0x160] sm:$0xff]
        %v1585 = vld [vmem:[#allocation14 + $0x168] sm:$0xff]
        %v1586 = vld [vmem:[#allocation14 + $0x170] sm:$0xff]
        %v1587 = vld [vmem:[#allocation14 + $0x178] sm:$0xff]
        %v1588 = vld [vmem:[#allocation14 + $0x180] sm:$0xff]
        %v1589 = vld [vmem:[#allocation14 + $0x188] sm:$0xff]
        %v1590 = vld [vmem:[#allocation14 + $0x190] sm:$0xff]
        %v1591 = vld [vmem:[#allocation14 + $0x198] sm:$0xff]
        %v1592 = vld [vmem:[#allocation14 + $0x1a0] sm:$0xff]
        %v1593 = vld [vmem:[#allocation14 + $0x1a8] sm:$0xff]
        %v1594 = vld [vmem:[#allocation14 + $0x1b0] sm:$0xff]
        %v1595 = vld [vmem:[#allocation14 + $0x1b8] sm:$0xff]
        %v1596 = vld [vmem:[#allocation14 + $0x1c0] sm:$0xff]
        %v1597 = vld [vmem:[#allocation14 + $0x1c8] sm:$0xff]
        %v1598 = vld [vmem:[#allocation14 + $0x1d0] sm:$0xff]
        %v1599 = vld [vmem:[#allocation14 + $0x1d8] sm:$0xff]
        %v1600 = vld [vmem:[#allocation14 + $0x1e0] sm:$0xff]
        %v1601 = vld [vmem:[#allocation14 + $0x1e8] sm:$0xff]
        %v1602 = vld [vmem:[#allocation14 + $0x1f0] sm:$0xff]
        %v1603 = vld [vmem:[#allocation14 + $0x1f8] sm:$0xff]
        %v1604 = vld [vmem:[%s5] sm:$0xf]
        %v1606 = vlaneseq
        %v1607 = vshrl.u32 %v1606, 7
        %v1608 = vsub.s32 0, %v1607
        %v1609 = vrot.slane %v1604, %v1608
        %v1610 = vlaneseq
        %v1611 = vshrl.u32 %v1610, 7
        %v1612 = vsub.s32 1, %v1611
        %v1613 = vrot.slane %v1604, %v1612
        %v1614 = vlaneseq
        %v1615 = vshrl.u32 %v1614, 7
        %v1616 = vsub.s32 2, %v1615
        %v1617 = vrot.slane %v1604, %v1616
        %v1618 = vlaneseq
        %v1619 = vshrl.u32 %v1618, 7
        %v1620 = vsub.s32 3, %v1619
        %v1621 = vrot.slane %v1604, %v1620
        %v1690 = vunpack.c.l.b16 %v1540
        %v1691 = vunpack.c.h.b16 %v1540
        %v1692 = vunpack.c.l.b16 %v1541
        %v1693 = vunpack.c.h.b16 %v1541
        %v1694 = vunpack.c.l.b16 %v1542
        %v1695 = vunpack.c.h.b16 %v1542
        %v1696 = vunpack.c.l.b16 %v1543
        %v1697 = vunpack.c.h.b16 %v1543
        %v1698 = vunpack.c.l.b16 %v1544
        %v1699 = vunpack.c.h.b16 %v1544
        %v1700 = vunpack.c.l.b16 %v1545
        %v1701 = vunpack.c.h.b16 %v1545
        %v1702 = vunpack.c.l.b16 %v1546
        %v1703 = vunpack.c.h.b16 %v1546
        %v1704 = vunpack.c.l.b16 %v1547
        %v1705 = vunpack.c.h.b16 %v1547
        %v1706 = vunpack.c.l.b16 %v1548
        %v1707 = vunpack.c.h.b16 %v1548
        %v1708 = vunpack.c.l.b16 %v1549
        %v1709 = vunpack.c.h.b16 %v1549
        %v1710 = vunpack.c.l.b16 %v1550
        %v1711 = vunpack.c.h.b16 %v1550
        %v1712 = vunpack.c.l.b16 %v1551
        %v1713 = vunpack.c.h.b16 %v1551
        %v1714 = vunpack.c.l.b16 %v1552
        %v1715 = vunpack.c.h.b16 %v1552
        %v1716 = vunpack.c.l.b16 %v1553
        %v1717 = vunpack.c.h.b16 %v1553
        %v1718 = vunpack.c.l.b16 %v1554
        %v1719 = vunpack.c.h.b16 %v1554
        %v1720 = vunpack.c.l.b16 %v1555
        %v1721 = vunpack.c.h.b16 %v1555
        %v1722 = vunpack.c.l.b16 %v1556
        %v1723 = vunpack.c.h.b16 %v1556
        %v1724 = vunpack.c.l.b16 %v1557
        %v1725 = vunpack.c.h.b16 %v1557
        %v1726 = vunpack.c.l.b16 %v1558
        %v1727 = vunpack.c.h.b16 %v1558
        %v1728 = vunpack.c.l.b16 %v1559
        %v1729 = vunpack.c.h.b16 %v1559
        %v1730 = vunpack.c.l.b16 %v1560
        %v1731 = vunpack.c.h.b16 %v1560
        %v1732 = vunpack.c.l.b16 %v1561
        %v1733 = vunpack.c.h.b16 %v1561
        %v1734 = vunpack.c.l.b16 %v1562
        %v1735 = vunpack.c.h.b16 %v1562
        %v1736 = vunpack.c.l.b16 %v1563
        %v1737 = vunpack.c.h.b16 %v1563
        %v1738 = vunpack.c.l.b16 %v1564
        %v1739 = vunpack.c.h.b16 %v1564
        %v1740 = vunpack.c.l.b16 %v1565
        %v1741 = vunpack.c.h.b16 %v1565
        %v1742 = vunpack.c.l.b16 %v1566
        %v1743 = vunpack.c.h.b16 %v1566
        %v1744 = vunpack.c.l.b16 %v1567
        %v1745 = vunpack.c.h.b16 %v1567
        %v1746 = vunpack.c.l.b16 %v1568
        %v1747 = vunpack.c.h.b16 %v1568
        %v1748 = vunpack.c.l.b16 %v1569
        %v1749 = vunpack.c.h.b16 %v1569
        %v1750 = vunpack.c.l.b16 %v1570
        %v1751 = vunpack.c.h.b16 %v1570
        %v1752 = vunpack.c.l.b16 %v1571
        %v1753 = vunpack.c.h.b16 %v1571
        %v1754 = vunpack.c.l.b16 %v1572
        %v1755 = vunpack.c.h.b16 %v1572
        %v1756 = vunpack.c.l.b16 %v1573
        %v1757 = vunpack.c.h.b16 %v1573
        %v1758 = vunpack.c.l.b16 %v1574
        %v1759 = vunpack.c.h.b16 %v1574
        %v1760 = vunpack.c.l.b16 %v1575
        %v1761 = vunpack.c.h.b16 %v1575
        %v1762 = vunpack.c.l.b16 %v1576
        %v1763 = vunpack.c.h.b16 %v1576
        %v1764 = vunpack.c.l.b16 %v1577
        %v1765 = vunpack.c.h.b16 %v1577
        %v1766 = vunpack.c.l.b16 %v1578
        %v1767 = vunpack.c.h.b16 %v1578
        %v1768 = vunpack.c.l.b16 %v1579
        %v1769 = vunpack.c.h.b16 %v1579
        %v1770 = vunpack.c.l.b16 %v1580
        %v1771 = vunpack.c.h.b16 %v1580
        %v1772 = vunpack.c.l.b16 %v1581
        %v1773 = vunpack.c.h.b16 %v1581
        %v1774 = vunpack.c.l.b16 %v1582
        %v1775 = vunpack.c.h.b16 %v1582
        %v1776 = vunpack.c.l.b16 %v1583
        %v1777 = vunpack.c.h.b16 %v1583
        %v1778 = vunpack.c.l.b16 %v1584
        %v1779 = vunpack.c.h.b16 %v1584
        %v1780 = vunpack.c.l.b16 %v1585
        %v1781 = vunpack.c.h.b16 %v1585
        %v1782 = vunpack.c.l.b16 %v1586
        %v1783 = vunpack.c.h.b16 %v1586
        %v1784 = vunpack.c.l.b16 %v1587
        %v1785 = vunpack.c.h.b16 %v1587
        %v1786 = vunpack.c.l.b16 %v1588
        %v1787 = vunpack.c.h.b16 %v1588
        %v1788 = vunpack.c.l.b16 %v1589
        %v1789 = vunpack.c.h.b16 %v1589
        %v1790 = vunpack.c.l.b16 %v1590
        %v1791 = vunpack.c.h.b16 %v1590
        %v1792 = vunpack.c.l.b16 %v1591
        %v1793 = vunpack.c.h.b16 %v1591
        %v1794 = vunpack.c.l.b16 %v1592
        %v1795 = vunpack.c.h.b16 %v1592
        %v1796 = vunpack.c.l.b16 %v1593
        %v1797 = vunpack.c.h.b16 %v1593
        %v1798 = vunpack.c.l.b16 %v1594
        %v1799 = vunpack.c.h.b16 %v1594
        %v1800 = vunpack.c.l.b16 %v1595
        %v1801 = vunpack.c.h.b16 %v1595
        %v1802 = vunpack.c.l.b16 %v1596
        %v1803 = vunpack.c.h.b16 %v1596
        %v1804 = vunpack.c.l.b16 %v1597
        %v1805 = vunpack.c.h.b16 %v1597
        %v1806 = vunpack.c.l.b16 %v1598
        %v1807 = vunpack.c.h.b16 %v1598
        %v1808 = vunpack.c.l.b16 %v1599
        %v1809 = vunpack.c.h.b16 %v1599
        %v1810 = vunpack.c.l.b16 %v1600
        %v1811 = vunpack.c.h.b16 %v1600
        %v1812 = vunpack.c.l.b16 %v1601
        %v1813 = vunpack.c.h.b16 %v1601
        %v1814 = vunpack.c.l.b16 %v1602
        %v1815 = vunpack.c.h.b16 %v1602
        %v1816 = vunpack.c.l.b16 %v1603
        %v1817 = vunpack.c.h.b16 %v1603
        %v1818 = vpack.c.b16 %v1694, %v1690
        %v1819 = vpack.c.b16 %v1695, %v1691
        %v1820 = vpack.c.b16 %v1696, %v1692
        %v1821 = vpack.c.b16 %v1697, %v1693
        %v1822 = vpack.c.b16 %v1702, %v1698
        %v1823 = vpack.c.b16 %v1703, %v1699
        %v1824 = vpack.c.b16 %v1704, %v1700
        %v1825 = vpack.c.b16 %v1705, %v1701
        %v1826 = vpack.c.b16 %v1710, %v1706
        %v1827 = vpack.c.b16 %v1711, %v1707
        %v1828 = vpack.c.b16 %v1712, %v1708
        %v1829 = vpack.c.b16 %v1713, %v1709
        %v1830 = vpack.c.b16 %v1718, %v1714
        %v1831 = vpack.c.b16 %v1719, %v1715
        %v1832 = vpack.c.b16 %v1720, %v1716
        %v1833 = vpack.c.b16 %v1721, %v1717
        %v1834 = vpack.c.b16 %v1726, %v1722
        %v1835 = vpack.c.b16 %v1727, %v1723
        %v1836 = vpack.c.b16 %v1728, %v1724
        %v1837 = vpack.c.b16 %v1729, %v1725
        %v1838 = vpack.c.b16 %v1734, %v1730
        %v1839 = vpack.c.b16 %v1735, %v1731
        %v1840 = vpack.c.b16 %v1736, %v1732
        %v1841 = vpack.c.b16 %v1737, %v1733
        %v1842 = vpack.c.b16 %v1742, %v1738
        %v1843 = vpack.c.b16 %v1743, %v1739
        %v1844 = vpack.c.b16 %v1744, %v1740
        %v1845 = vpack.c.b16 %v1745, %v1741
        %v1846 = vpack.c.b16 %v1750, %v1746
        %v1847 = vpack.c.b16 %v1751, %v1747
        %v1848 = vpack.c.b16 %v1752, %v1748
        %v1849 = vpack.c.b16 %v1753, %v1749
        %v1850 = vpack.c.b16 %v1758, %v1754
        %v1851 = vpack.c.b16 %v1759, %v1755
        %v1852 = vpack.c.b16 %v1760, %v1756
        %v1853 = vpack.c.b16 %v1761, %v1757
        %v1854 = vpack.c.b16 %v1766, %v1762
        %v1855 = vpack.c.b16 %v1767, %v1763
        %v1856 = vpack.c.b16 %v1768, %v1764
        %v1857 = vpack.c.b16 %v1769, %v1765
        %v1858 = vpack.c.b16 %v1774, %v1770
        %v1859 = vpack.c.b16 %v1775, %v1771
        %v1860 = vpack.c.b16 %v1776, %v1772
        %v1861 = vpack.c.b16 %v1777, %v1773
        %v1862 = vpack.c.b16 %v1782, %v1778
        %v1863 = vpack.c.b16 %v1783, %v1779
        %v1864 = vpack.c.b16 %v1784, %v1780
        %v1865 = vpack.c.b16 %v1785, %v1781
        %v1866 = vpack.c.b16 %v1790, %v1786
        %v1867 = vpack.c.b16 %v1791, %v1787
        %v1868 = vpack.c.b16 %v1792, %v1788
        %v1869 = vpack.c.b16 %v1793, %v1789
        %v1870 = vpack.c.b16 %v1798, %v1794
        %v1871 = vpack.c.b16 %v1799, %v1795
        %v1872 = vpack.c.b16 %v1800, %v1796
        %v1873 = vpack.c.b16 %v1801, %v1797
        %v1874 = vpack.c.b16 %v1806, %v1802
        %v1875 = vpack.c.b16 %v1807, %v1803
        %v1876 = vpack.c.b16 %v1808, %v1804
        %v1877 = vpack.c.b16 %v1809, %v1805
        %v1878 = vpack.c.b16 %v1814, %v1810
        %v1879 = vpack.c.b16 %v1815, %v1811
        %v1880 = vpack.c.b16 %v1816, %v1812
        %v1881 = vpack.c.b16 %v1817, %v1813
        %1946 = vmatprep.subr.bf16.mxu0 %v1847
        %1947 = vmatpush1.bf16.msra.mxu0 %v1846
        %1948 = vmatprep.subr.bf16.mxu0 %v1843
        %1949 = vmatpush1.bf16.msra.mxu0 %v1842
        %1950 = vmatprep.subr.bf16.mxu0 %v1839
        %1951 = vmatpush1.bf16.msra.mxu0 %v1838
        %1952 = vmatprep.subr.bf16.mxu0 %v1835
        %1953 = vmatpush1.bf16.msra.mxu0 %v1834
        %1954 = vmatprep.subr.bf16.mxu0 %v1831
        %1955 = vmatpush1.bf16.msra.mxu0 %v1830
        %1956 = vmatprep.subr.bf16.mxu0 %v1827
        %1957 = vmatpush1.bf16.msra.mxu0 %v1826
        %1958 = vmatprep.subr.bf16.mxu0 %v1823
        %1959 = vmatpush1.bf16.msra.mxu0 %v1822
        %1960 = vmatprep.subr.bf16.mxu0 %v1819
        %1961 = vmatpush1.bf16.msra.mxu0 %v1818
        %1962 = vmatprep.subr.bf16.mxu0 %v1879
        %1963 = vmatpush2.bf16.msra.mxu0 %v1878
        %1964 = vmatprep.subr.bf16.mxu0 %v1875
        %1965 = vmatpush2.bf16.msra.mxu0 %v1874
        %1966 = vmatprep.subr.bf16.mxu0 %v1871
        %1967 = vmatpush2.bf16.msra.mxu0 %v1870
        %1968 = vmatprep.subr.bf16.mxu0 %v1867
        %1969 = vmatpush2.bf16.msra.mxu0 %v1866
        %1970 = vmatprep.subr.bf16.mxu0 %v1863
        %1971 = vmatpush2.bf16.msra.mxu0 %v1862
        %1972 = vmatprep.subr.bf16.mxu0 %v1859
        %1973 = vmatpush2.bf16.msra.mxu0 %v1858
        %1974 = vmatprep.subr.bf16.mxu0 %v1855
        %1975 = vmatpush2.bf16.msra.mxu0 %v1854
        %1976 = vmatprep.subr.bf16.mxu0 %v1851
        %1977 = vmatpush2.bf16.msra.mxu0 %v1850
        %1978 = vmatprep.mubr.bf16.mxu0 %v1509
        %1979 = vmatmul.mubr.bf16.gmra.mxu0 %v1508
        %v1980 = vpop.f32.mrf.mxu0
        %v1981 = vadd.f32 %v1609, %v1980
        %v1982 = vpop.f32.mrf.mxu0
        %v1983 = vadd.f32 %v1613, %v1982
        %v1984 = vpop.f32.mrf.mxu0
        %v1985 = vadd.f32 %v1609, %v1984
        %v1986 = vpop.f32.mrf.mxu0
        %v1987 = vadd.f32 %v1613, %v1986
        %1988 = vmatprep.mubr.bf16.mxu0 %v1511
        %1989 = vmatmul.mubr.bf16.gmra.mxu0 %v1510
        %v1990 = vpop.f32.mrf.mxu0
        %v1991 = vadd.f32 %v1609, %v1990
        %v1992 = vpop.f32.mrf.mxu0
        %v1993 = vadd.f32 %v1613, %v1992
        %v1994 = vpop.f32.mrf.mxu0
        %v1995 = vadd.f32 %v1609, %v1994
        %v1996 = vpop.f32.mrf.mxu0
        %v1997 = vadd.f32 %v1613, %v1996
        %1998 = vmatprep.mubr.bf16.mxu0 %v1513
        %1999 = vmatmul.mubr.bf16.gmra.mxu0 %v1512
        %v2000 = vpop.f32.mrf.mxu0
        %v2001 = vadd.f32 %v1609, %v2000
        %v2002 = vpop.f32.mrf.mxu0
        %v2003 = vadd.f32 %v1613, %v2002
        %v2004 = vpop.f32.mrf.mxu0
        %v2005 = vadd.f32 %v1609, %v2004
        %v2006 = vpop.f32.mrf.mxu0
        %v2007 = vadd.f32 %v1613, %v2006
        %2008 = vmatprep.mubr.bf16.mxu0 %v1515
        %2009 = vmatmul.mubr.bf16.gmra.mxu0 %v1514
        %v2010 = vpop.f32.mrf.mxu0
        %v2011 = vadd.f32 %v1609, %v2010
        %v2012 = vpop.f32.mrf.mxu0
        %v2013 = vadd.f32 %v1613, %v2012
        %v2014 = vpop.f32.mrf.mxu0
        %v2015 = vadd.f32 %v1609, %v2014
        %v2016 = vpop.f32.mrf.mxu0
        %v2017 = vadd.f32 %v1613, %v2016
        %2018 = vmatprep.mubr.bf16.mxu0 %v1517
        %2019 = vmatmul.mubr.bf16.gmra.mxu0 %v1516
        %v2020 = vpop.f32.mrf.mxu0
        %v2021 = vadd.f32 %v1609, %v2020
        %v2022 = vpop.f32.mrf.mxu0
        %v2023 = vadd.f32 %v1613, %v2022
        %v2024 = vpop.f32.mrf.mxu0
        %v2025 = vadd.f32 %v1609, %v2024
        %v2026 = vpop.f32.mrf.mxu0
        %v2027 = vadd.f32 %v1613, %v2026
        %2028 = vmatprep.mubr.bf16.mxu0 %v1519
        %2029 = vmatmul.mubr.bf16.gmra.mxu0 %v1518
        %v2030 = vpop.f32.mrf.mxu0
        %v2031 = vadd.f32 %v1609, %v2030
        %v2032 = vpop.f32.mrf.mxu0
        %v2033 = vadd.f32 %v1613, %v2032
        %v2034 = vpop.f32.mrf.mxu0
        %v2035 = vadd.f32 %v1609, %v2034
        %v2036 = vpop.f32.mrf.mxu0
        %v2037 = vadd.f32 %v1613, %v2036
        %2038 = vmatprep.mubr.bf16.mxu0 %v1521
        %2039 = vmatmul.mubr.bf16.gmra.mxu0 %v1520
        %v2040 = vpop.f32.mrf.mxu0
        %v2041 = vadd.f32 %v1609, %v2040
        %v2042 = vpop.f32.mrf.mxu0
        %v2043 = vadd.f32 %v1613, %v2042
        %v2044 = vpop.f32.mrf.mxu0
        %v2045 = vadd.f32 %v1609, %v2044
        %v2046 = vpop.f32.mrf.mxu0
        %v2047 = vadd.f32 %v1613, %v2046
        %2048 = vmatprep.mubr.bf16.mxu0 %v1523
        %2049 = vmatmul.mubr.bf16.gmra.mxu0 %v1522
        %v2050 = vpop.f32.mrf.mxu0
        %v2051 = vadd.f32 %v1609, %v2050
        %v2052 = vpop.f32.mrf.mxu0
        %v2053 = vadd.f32 %v1613, %v2052
        %v2054 = vpop.f32.mrf.mxu0
        %v2055 = vadd.f32 %v1609, %v2054
        %v2056 = vpop.f32.mrf.mxu0
        %v2057 = vadd.f32 %v1613, %v2056
        %2058 = vmatprep.mubr.bf16.mxu0 %v1525
        %2059 = vmatmul.mubr.bf16.gmra.mxu0 %v1524
        %v2060 = vpop.f32.mrf.mxu0
        %v2061 = vadd.f32 %v1609, %v2060
        %v2062 = vpop.f32.mrf.mxu0
        %v2063 = vadd.f32 %v1613, %v2062
        %v2064 = vpop.f32.mrf.mxu0
        %v2065 = vadd.f32 %v1609, %v2064
        %v2066 = vpop.f32.mrf.mxu0
        %v2067 = vadd.f32 %v1613, %v2066
        %2068 = vmatprep.mubr.bf16.mxu0 %v1527
        %2069 = vmatmul.mubr.bf16.gmra.mxu0 %v1526
        %v2070 = vpop.f32.mrf.mxu0
        %v2071 = vadd.f32 %v1609, %v2070
        %v2072 = vpop.f32.mrf.mxu0
        %v2073 = vadd.f32 %v1613, %v2072
        %v2074 = vpop.f32.mrf.mxu0
        %v2075 = vadd.f32 %v1609, %v2074
        %v2076 = vpop.f32.mrf.mxu0
        %v2077 = vadd.f32 %v1613, %v2076
        %2078 = vmatprep.mubr.bf16.mxu0 %v1529
        %2079 = vmatmul.mubr.bf16.gmra.mxu0 %v1528
        %v2080 = vpop.f32.mrf.mxu0
        %v2081 = vadd.f32 %v1609, %v2080
        %v2082 = vpop.f32.mrf.mxu0
        %v2083 = vadd.f32 %v1613, %v2082
        %v2084 = vpop.f32.mrf.mxu0
        %v2085 = vadd.f32 %v1609, %v2084
        %v2086 = vpop.f32.mrf.mxu0
        %v2087 = vadd.f32 %v1613, %v2086
        %2088 = vmatprep.mubr.bf16.mxu0 %v1531
        %2089 = vmatmul.mubr.bf16.gmra.mxu0 %v1530
        %v2090 = vpop.f32.mrf.mxu0
        %v2091 = vadd.f32 %v1609, %v2090
        %v2092 = vpop.f32.mrf.mxu0
        %v2093 = vadd.f32 %v1613, %v2092
        %v2094 = vpop.f32.mrf.mxu0
        %v2095 = vadd.f32 %v1609, %v2094
        %v2096 = vpop.f32.mrf.mxu0
        %v2097 = vadd.f32 %v1613, %v2096
        %2098 = vmatprep.mubr.bf16.mxu0 %v1533
        %2099 = vmatmul.mubr.bf16.gmra.mxu0 %v1532
        %v2100 = vpop.f32.mrf.mxu0
        %v2101 = vadd.f32 %v1609, %v2100
        %v2102 = vpop.f32.mrf.mxu0
        %v2103 = vadd.f32 %v1613, %v2102
        %v2104 = vpop.f32.mrf.mxu0
        %v2105 = vadd.f32 %v1609, %v2104
        %v2106 = vpop.f32.mrf.mxu0
        %v2107 = vadd.f32 %v1613, %v2106
        %2108 = vmatprep.mubr.bf16.mxu0 %v1535
        %2109 = vmatmul.mubr.bf16.gmra.mxu0 %v1534
        %v2110 = vpop.f32.mrf.mxu0
        %v2111 = vadd.f32 %v1609, %v2110
        %v2112 = vpop.f32.mrf.mxu0
        %v2113 = vadd.f32 %v1613, %v2112
        %v2114 = vpop.f32.mrf.mxu0
        %v2115 = vadd.f32 %v1609, %v2114
        %v2116 = vpop.f32.mrf.mxu0
        %v2117 = vadd.f32 %v1613, %v2116
        %2118 = vmatprep.mubr.bf16.mxu0 %v1537
        %2119 = vmatmul.mubr.bf16.gmra.mxu0 %v1536
        %v2120 = vpop.f32.mrf.mxu0
        %v2121 = vadd.f32 %v1609, %v2120
        %v2122 = vpop.f32.mrf.mxu0
        %v2123 = vadd.f32 %v1613, %v2122
        %v2124 = vpop.f32.mrf.mxu0
        %v2125 = vadd.f32 %v1609, %v2124
        %v2126 = vpop.f32.mrf.mxu0
        %v2127 = vadd.f32 %v1613, %v2126
        %2128 = vmatprep.mubr.bf16.mxu0 %v1539
        %2129 = vmatmul.mubr.bf16.gmra.mxu0 %v1538
        %v2130 = vpop.f32.mrf.mxu0
        %v2131 = vadd.f32 %v1609, %v2130
        %v2132 = vpop.f32.mrf.mxu0
        %v2133 = vadd.f32 %v1613, %v2132
        %v2134 = vpop.f32.mrf.mxu0
        %v2135 = vadd.f32 %v1609, %v2134
        %v2136 = vpop.f32.mrf.mxu0
        %v2137 = vadd.f32 %v1613, %v2136
        %2138 = vdwg.mxu0
        %2139 = vmatprep.subr.bf16.mxu0 %v1849
        %2140 = vmatpush1.bf16.msra.mxu0 %v1848
        %2141 = vmatprep.subr.bf16.mxu0 %v1845
        %2142 = vmatpush1.bf16.msra.mxu0 %v1844
        %2143 = vmatprep.subr.bf16.mxu0 %v1841
        %2144 = vmatpush1.bf16.msra.mxu0 %v1840
        %2145 = vmatprep.subr.bf16.mxu0 %v1837
        %2146 = vmatpush1.bf16.msra.mxu0 %v1836
        %2147 = vmatprep.subr.bf16.mxu0 %v1833
        %2148 = vmatpush1.bf16.msra.mxu0 %v1832
        %2149 = vmatprep.subr.bf16.mxu0 %v1829
        %2150 = vmatpush1.bf16.msra.mxu0 %v1828
        %2151 = vmatprep.subr.bf16.mxu0 %v1825
        %2152 = vmatpush1.bf16.msra.mxu0 %v1824
        %2153 = vmatprep.subr.bf16.mxu0 %v1821
        %2154 = vmatpush1.bf16.msra.mxu0 %v1820
        %2155 = vmatprep.subr.bf16.mxu0 %v1881
        %2156 = vmatpush2.bf16.msra.mxu0 %v1880
        %2157 = vmatprep.subr.bf16.mxu0 %v1877
        %2158 = vmatpush2.bf16.msra.mxu0 %v1876
        %2159 = vmatprep.subr.bf16.mxu0 %v1873
        %2160 = vmatpush2.bf16.msra.mxu0 %v1872
        %2161 = vmatprep.subr.bf16.mxu0 %v1869
        %2162 = vmatpush2.bf16.msra.mxu0 %v1868
        %2163 = vmatprep.subr.bf16.mxu0 %v1865
        %2164 = vmatpush2.bf16.msra.mxu0 %v1864
        %2165 = vmatprep.subr.bf16.mxu0 %v1861
        %2166 = vmatpush2.bf16.msra.mxu0 %v1860
        %2167 = vmatprep.subr.bf16.mxu0 %v1857
        %2168 = vmatpush2.bf16.msra.mxu0 %v1856
        %2169 = vmatprep.subr.bf16.mxu0 %v1853
        %2170 = vmatpush2.bf16.msra.mxu0 %v1852
        %2171 = vmatprep.mubr.bf16.mxu0 %v1509
        %2172 = vmatmul.mubr.bf16.gmra.mxu0 %v1508
        %v2173 = vpop.f32.mrf.mxu0
        %v2174 = vadd.f32 %v1617, %v2173
        %v2175 = vpop.f32.mrf.mxu0
        %v2176 = vadd.f32 %v1621, %v2175
        %v2177 = vpop.f32.mrf.mxu0
        %v2178 = vadd.f32 %v1617, %v2177
        %v2179 = vpop.f32.mrf.mxu0
        %v2180 = vadd.f32 %v1621, %v2179
        %2181 = vmatprep.mubr.bf16.mxu0 %v1511
        %2182 = vmatmul.mubr.bf16.gmra.mxu0 %v1510
        %v2183 = vpop.f32.mrf.mxu0
        %v2184 = vadd.f32 %v1617, %v2183
        %v2185 = vpop.f32.mrf.mxu0
        %v2186 = vadd.f32 %v1621, %v2185
        %v2187 = vpop.f32.mrf.mxu0
        %v2188 = vadd.f32 %v1617, %v2187
        %v2189 = vpop.f32.mrf.mxu0
        %v2190 = vadd.f32 %v1621, %v2189
        %2191 = vmatprep.mubr.bf16.mxu0 %v1513
        %2192 = vmatmul.mubr.bf16.gmra.mxu0 %v1512
        %v2193 = vpop.f32.mrf.mxu0
        %v2194 = vadd.f32 %v1617, %v2193
        %v2195 = vpop.f32.mrf.mxu0
        %v2196 = vadd.f32 %v1621, %v2195
        %v2197 = vpop.f32.mrf.mxu0
        %v2198 = vadd.f32 %v1617, %v2197
        %v2199 = vpop.f32.mrf.mxu0
        %v2200 = vadd.f32 %v1621, %v2199
        %2201 = vmatprep.mubr.bf16.mxu0 %v1515
        %2202 = vmatmul.mubr.bf16.gmra.mxu0 %v1514
        %v2203 = vpop.f32.mrf.mxu0
        %v2204 = vadd.f32 %v1617, %v2203
        %v2205 = vpop.f32.mrf.mxu0
        %v2206 = vadd.f32 %v1621, %v2205
        %v2207 = vpop.f32.mrf.mxu0
        %v2208 = vadd.f32 %v1617, %v2207
        %v2209 = vpop.f32.mrf.mxu0
        %v2210 = vadd.f32 %v1621, %v2209
        %2211 = vmatprep.mubr.bf16.mxu0 %v1517
        %2212 = vmatmul.mubr.bf16.gmra.mxu0 %v1516
        %v2213 = vpop.f32.mrf.mxu0
        %v2214 = vadd.f32 %v1617, %v2213
        %v2215 = vpop.f32.mrf.mxu0
        %v2216 = vadd.f32 %v1621, %v2215
        %v2217 = vpop.f32.mrf.mxu0
        %v2218 = vadd.f32 %v1617, %v2217
        %v2219 = vpop.f32.mrf.mxu0
        %v2220 = vadd.f32 %v1621, %v2219
        %2221 = vmatprep.mubr.bf16.mxu0 %v1519
        %2222 = vmatmul.mubr.bf16.gmra.mxu0 %v1518
        %v2223 = vpop.f32.mrf.mxu0
        %v2224 = vadd.f32 %v1617, %v2223
        %v2225 = vpop.f32.mrf.mxu0
        %v2226 = vadd.f32 %v1621, %v2225
        %v2227 = vpop.f32.mrf.mxu0
        %v2228 = vadd.f32 %v1617, %v2227
        %v2229 = vpop.f32.mrf.mxu0
        %v2230 = vadd.f32 %v1621, %v2229
        %2231 = vmatprep.mubr.bf16.mxu0 %v1521
        %2232 = vmatmul.mubr.bf16.gmra.mxu0 %v1520
        %v2233 = vpop.f32.mrf.mxu0
        %v2234 = vadd.f32 %v1617, %v2233
        %v2235 = vpop.f32.mrf.mxu0
        %v2236 = vadd.f32 %v1621, %v2235
        %v2237 = vpop.f32.mrf.mxu0
        %v2238 = vadd.f32 %v1617, %v2237
        %v2239 = vpop.f32.mrf.mxu0
        %v2240 = vadd.f32 %v1621, %v2239
        %2241 = vmatprep.mubr.bf16.mxu0 %v1523
        %2242 = vmatmul.mubr.bf16.gmra.mxu0 %v1522
        %v2243 = vpop.f32.mrf.mxu0
        %v2244 = vadd.f32 %v1617, %v2243
        %v2245 = vpop.f32.mrf.mxu0
        %v2246 = vadd.f32 %v1621, %v2245
        %v2247 = vpop.f32.mrf.mxu0
        %v2248 = vadd.f32 %v1617, %v2247
        %v2249 = vpop.f32.mrf.mxu0
        %v2250 = vadd.f32 %v1621, %v2249
        %2251 = vmatprep.mubr.bf16.mxu0 %v1525
        %2252 = vmatmul.mubr.bf16.gmra.mxu0 %v1524
        %v2253 = vpop.f32.mrf.mxu0
        %v2254 = vadd.f32 %v1617, %v2253
        %v2255 = vpop.f32.mrf.mxu0
        %v2256 = vadd.f32 %v1621, %v2255
        %v2257 = vpop.f32.mrf.mxu0
        %v2258 = vadd.f32 %v1617, %v2257
        %v2259 = vpop.f32.mrf.mxu0
        %v2260 = vadd.f32 %v1621, %v2259
        %2261 = vmatprep.mubr.bf16.mxu0 %v1527
        %2262 = vmatmul.mubr.bf16.gmra.mxu0 %v1526
        %v2263 = vpop.f32.mrf.mxu0
        %v2264 = vadd.f32 %v1617, %v2263
        %v2265 = vpop.f32.mrf.mxu0
        %v2266 = vadd.f32 %v1621, %v2265
        %v2267 = vpop.f32.mrf.mxu0
        %v2268 = vadd.f32 %v1617, %v2267
        %v2269 = vpop.f32.mrf.mxu0
        %v2270 = vadd.f32 %v1621, %v2269
        %2271 = vmatprep.mubr.bf16.mxu0 %v1529
        %2272 = vmatmul.mubr.bf16.gmra.mxu0 %v1528
        %v2273 = vpop.f32.mrf.mxu0
        %v2274 = vadd.f32 %v1617, %v2273
        %v2275 = vpop.f32.mrf.mxu0
        %v2276 = vadd.f32 %v1621, %v2275
        %v2277 = vpop.f32.mrf.mxu0
        %v2278 = vadd.f32 %v1617, %v2277
        %v2279 = vpop.f32.mrf.mxu0
        %v2280 = vadd.f32 %v1621, %v2279
        %2281 = vmatprep.mubr.bf16.mxu0 %v1531
        %2282 = vmatmul.mubr.bf16.gmra.mxu0 %v1530
        %v2283 = vpop.f32.mrf.mxu0
        %v2284 = vadd.f32 %v1617, %v2283
        %v2285 = vpop.f32.mrf.mxu0
        %v2286 = vadd.f32 %v1621, %v2285
        %v2287 = vpop.f32.mrf.mxu0
        %v2288 = vadd.f32 %v1617, %v2287
        %v2289 = vpop.f32.mrf.mxu0
        %v2290 = vadd.f32 %v1621, %v2289
        %2291 = vmatprep.mubr.bf16.mxu0 %v1533
        %2292 = vmatmul.mubr.bf16.gmra.mxu0 %v1532
        %v2293 = vpop.f32.mrf.mxu0
        %v2294 = vadd.f32 %v1617, %v2293
        %v2295 = vpop.f32.mrf.mxu0
        %v2296 = vadd.f32 %v1621, %v2295
        %v2297 = vpop.f32.mrf.mxu0
        %v2298 = vadd.f32 %v1617, %v2297
        %v2299 = vpop.f32.mrf.mxu0
        %v2300 = vadd.f32 %v1621, %v2299
        %2301 = vmatprep.mubr.bf16.mxu0 %v1535
        %2302 = vmatmul.mubr.bf16.gmra.mxu0 %v1534
        %v2303 = vpop.f32.mrf.mxu0
        %v2304 = vadd.f32 %v1617, %v2303
        %v2305 = vpop.f32.mrf.mxu0
        %v2306 = vadd.f32 %v1621, %v2305
        %v2307 = vpop.f32.mrf.mxu0
        %v2308 = vadd.f32 %v1617, %v2307
        %v2309 = vpop.f32.mrf.mxu0
        %v2310 = vadd.f32 %v1621, %v2309
        %2311 = vmatprep.mubr.bf16.mxu0 %v1537
        %2312 = vmatmul.mubr.bf16.gmra.mxu0 %v1536
        %v2313 = vpop.f32.mrf.mxu0
        %v2314 = vadd.f32 %v1617, %v2313
        %v2315 = vpop.f32.mrf.mxu0
        %v2316 = vadd.f32 %v1621, %v2315
        %v2317 = vpop.f32.mrf.mxu0
        %v2318 = vadd.f32 %v1617, %v2317
        %v2319 = vpop.f32.mrf.mxu0
        %v2320 = vadd.f32 %v1621, %v2319
        %2321 = vmatprep.mubr.bf16.mxu0 %v1539
        %2322 = vmatmul.mubr.bf16.gmra.mxu0 %v1538
        %v2323 = vpop.f32.mrf.mxu0
        %v2324 = vadd.f32 %v1617, %v2323
        %v2325 = vpop.f32.mrf.mxu0
        %v2326 = vadd.f32 %v1621, %v2325
        %v2327 = vpop.f32.mrf.mxu0
        %v2328 = vadd.f32 %v1617, %v2327
        %v2329 = vpop.f32.mrf.mxu0
        %v2330 = vadd.f32 %v1621, %v2329
        %2331 = vdwg.mxu0
        %v2332 = vtanh.pop %v1981
        %v2333 = vtanh.pop %v1983
        %v2334 = vtanh.pop %v1985
        %v2335 = vtanh.pop %v1987
        %v2336 = vtanh.pop %v1991
        %v2337 = vtanh.pop %v1993
        %v2338 = vtanh.pop %v1995
        %v2339 = vtanh.pop %v1997
        %v2340 = vtanh.pop %v2001
        %v2341 = vtanh.pop %v2003
        %v2342 = vtanh.pop %v2005
        %v2343 = vtanh.pop %v2007
        %v2344 = vtanh.pop %v2011
        %v2345 = vtanh.pop %v2013
        %v2346 = vtanh.pop %v2015
        %v2347 = vtanh.pop %v2017
        %v2348 = vtanh.pop %v2021
        %v2349 = vtanh.pop %v2023
        %v2350 = vtanh.pop %v2025
        %v2351 = vtanh.pop %v2027
        %v2352 = vtanh.pop %v2031
        %v2353 = vtanh.pop %v2033
        %v2354 = vtanh.pop %v2035
        %v2355 = vtanh.pop %v2037
        %v2356 = vtanh.pop %v2041
        %v2357 = vtanh.pop %v2043
        %v2358 = vtanh.pop %v2045
        %v2359 = vtanh.pop %v2047
        %v2360 = vtanh.pop %v2051
        %v2361 = vtanh.pop %v2053
        %v2362 = vtanh.pop %v2055
        %v2363 = vtanh.pop %v2057
        %v2364 = vtanh.pop %v2061
        %v2365 = vtanh.pop %v2063
        %v2366 = vtanh.pop %v2065
        %v2367 = vtanh.pop %v2067
        %v2368 = vtanh.pop %v2071
        %v2369 = vtanh.pop %v2073
        %v2370 = vtanh.pop %v2075
        %v2371 = vtanh.pop %v2077
        %v2372 = vtanh.pop %v2081
        %v2373 = vtanh.pop %v2083
        %v2374 = vtanh.pop %v2085
        %v2375 = vtanh.pop %v2087
        %v2376 = vtanh.pop %v2091
        %v2377 = vtanh.pop %v2093
        %v2378 = vtanh.pop %v2095
        %v2379 = vtanh.pop %v2097
        %v2380 = vtanh.pop %v2101
        %v2381 = vtanh.pop %v2103
        %v2382 = vtanh.pop %v2105
        %v2383 = vtanh.pop %v2107
        %v2384 = vtanh.pop %v2111
        %v2385 = vtanh.pop %v2113
        %v2386 = vtanh.pop %v2115
        %v2387 = vtanh.pop %v2117
        %v2388 = vtanh.pop %v2121
        %v2389 = vtanh.pop %v2123
        %v2390 = vtanh.pop %v2125
        %v2391 = vtanh.pop %v2127
        %v2392 = vtanh.pop %v2131
        %v2393 = vtanh.pop %v2133
        %v2394 = vtanh.pop %v2135
        %v2395 = vtanh.pop %v2137
        %v2396 = vxor.u32 %v2174, 2147483648
        %v2397 = vxor.u32 %v2176, 2147483648
        %v2398 = vxor.u32 %v2178, 2147483648
        %v2399 = vxor.u32 %v2180, 2147483648
        %v2400 = vxor.u32 %v2184, 2147483648
        %v2401 = vxor.u32 %v2186, 2147483648
        %v2402 = vxor.u32 %v2188, 2147483648
        %v2403 = vxor.u32 %v2190, 2147483648
        %v2404 = vxor.u32 %v2194, 2147483648
        %v2405 = vxor.u32 %v2196, 2147483648
        %v2406 = vxor.u32 %v2198, 2147483648
        %v2407 = vxor.u32 %v2200, 2147483648
        %v2408 = vxor.u32 %v2204, 2147483648
        %v2409 = vxor.u32 %v2206, 2147483648
        %v2410 = vxor.u32 %v2208, 2147483648
        %v2411 = vxor.u32 %v2210, 2147483648
        %v2412 = vxor.u32 %v2214, 2147483648
        %v2413 = vxor.u32 %v2216, 2147483648
        %v2414 = vxor.u32 %v2218, 2147483648
        %v2415 = vxor.u32 %v2220, 2147483648
        %v2416 = vxor.u32 %v2224, 2147483648
        %v2417 = vxor.u32 %v2226, 2147483648
        %v2418 = vxor.u32 %v2228, 2147483648
        %v2419 = vxor.u32 %v2230, 2147483648
        %v2420 = vxor.u32 %v2234, 2147483648
        %v2421 = vxor.u32 %v2236, 2147483648
        %v2422 = vxor.u32 %v2238, 2147483648
        %v2423 = vxor.u32 %v2240, 2147483648
        %v2424 = vxor.u32 %v2244, 2147483648
        %v2425 = vxor.u32 %v2246, 2147483648
        %v2426 = vxor.u32 %v2248, 2147483648
        %v2427 = vxor.u32 %v2250, 2147483648
        %v2428 = vxor.u32 %v2254, 2147483648
        %v2429 = vxor.u32 %v2256, 2147483648
        %v2430 = vxor.u32 %v2258, 2147483648
        %v2431 = vxor.u32 %v2260, 2147483648
        %v2432 = vxor.u32 %v2264, 2147483648
        %v2433 = vxor.u32 %v2266, 2147483648
        %v2434 = vxor.u32 %v2268, 2147483648
        %v2435 = vxor.u32 %v2270, 2147483648
        %v2436 = vxor.u32 %v2274, 2147483648
        %v2437 = vxor.u32 %v2276, 2147483648
        %v2438 = vxor.u32 %v2278, 2147483648
        %v2439 = vxor.u32 %v2280, 2147483648
        %v2440 = vxor.u32 %v2284, 2147483648
        %v2441 = vxor.u32 %v2286, 2147483648
        %v2442 = vxor.u32 %v2288, 2147483648
        %v2443 = vxor.u32 %v2290, 2147483648
        %v2444 = vxor.u32 %v2294, 2147483648
        %v2445 = vxor.u32 %v2296, 2147483648
        %v2446 = vxor.u32 %v2298, 2147483648
        %v2447 = vxor.u32 %v2300, 2147483648
        %v2448 = vxor.u32 %v2304, 2147483648
        %v2449 = vxor.u32 %v2306, 2147483648
        %v2450 = vxor.u32 %v2308, 2147483648
        %v2451 = vxor.u32 %v2310, 2147483648
        %v2452 = vxor.u32 %v2314, 2147483648
        %v2453 = vxor.u32 %v2316, 2147483648
        %v2454 = vxor.u32 %v2318, 2147483648
        %v2455 = vxor.u32 %v2320, 2147483648
        %v2456 = vxor.u32 %v2324, 2147483648
        %v2457 = vxor.u32 %v2326, 2147483648
        %v2458 = vxor.u32 %v2328, 2147483648
        %v2459 = vxor.u32 %v2330, 2147483648
        %v2460 = vmul.f32 %v2396, 1.442695
        %v2461 = vpow.pop %v2460
        %v2462 = vmul.f32 %v2397, 1.442695
        %v2463 = vpow.pop %v2462
        %v2464 = vmul.f32 %v2398, 1.442695
        %v2465 = vpow.pop %v2464
        %v2466 = vmul.f32 %v2399, 1.442695
        %v2467 = vpow.pop %v2466
        %v2468 = vmul.f32 %v2400, 1.442695
        %v2469 = vpow.pop %v2468
        %v2470 = vmul.f32 %v2401, 1.442695
        %v2471 = vpow.pop %v2470
        %v2472 = vmul.f32 %v2402, 1.442695
        %v2473 = vpow.pop %v2472
        %v2474 = vmul.f32 %v2403, 1.442695
        %v2475 = vpow.pop %v2474
        %v2476 = vmul.f32 %v2404, 1.442695
        %v2477 = vpow.pop %v2476
        %v2478 = vmul.f32 %v2405, 1.442695
        %v2479 = vpow.pop %v2478
        %v2480 = vmul.f32 %v2406, 1.442695
        %v2481 = vpow.pop %v2480
        %v2482 = vmul.f32 %v2407, 1.442695
        %v2483 = vpow.pop %v2482
        %v2484 = vmul.f32 %v2408, 1.442695
        %v2485 = vpow.pop %v2484
        %v2486 = vmul.f32 %v2409, 1.442695
        %v2487 = vpow.pop %v2486
        %v2488 = vmul.f32 %v2410, 1.442695
        %v2489 = vpow.pop %v2488
        %v2490 = vmul.f32 %v2411, 1.442695
        %v2491 = vpow.pop %v2490
        %v2492 = vmul.f32 %v2412, 1.442695
        %v2493 = vpow.pop %v2492
        %v2494 = vmul.f32 %v2413, 1.442695
        %v2495 = vpow.pop %v2494
        %v2496 = vmul.f32 %v2414, 1.442695
        %v2497 = vpow.pop %v2496
        %v2498 = vmul.f32 %v2415, 1.442695
        %v2499 = vpow.pop %v2498
        %v2500 = vmul.f32 %v2416, 1.442695
        %v2501 = vpow.pop %v2500
        %v2502 = vmul.f32 %v2417, 1.442695
        %v2503 = vpow.pop %v2502
        %v2504 = vmul.f32 %v2418, 1.442695
        %v2505 = vpow.pop %v2504
        %v2506 = vmul.f32 %v2419, 1.442695
        %v2507 = vpow.pop %v2506
        %v2508 = vmul.f32 %v2420, 1.442695
        %v2509 = vpow.pop %v2508
        %v2510 = vmul.f32 %v2421, 1.442695
        %v2511 = vpow.pop %v2510
        %v2512 = vmul.f32 %v2422, 1.442695
        %v2513 = vpow.pop %v2512
        %v2514 = vmul.f32 %v2423, 1.442695
        %v2515 = vpow.pop %v2514
        %v2516 = vmul.f32 %v2424, 1.442695
        %v2517 = vpow.pop %v2516
        %v2518 = vmul.f32 %v2425, 1.442695
        %v2519 = vpow.pop %v2518
        %v2520 = vmul.f32 %v2426, 1.442695
        %v2521 = vpow.pop %v2520
        %v2522 = vmul.f32 %v2427, 1.442695
        %v2523 = vpow.pop %v2522
        %v2524 = vmul.f32 %v2428, 1.442695
        %v2525 = vpow.pop %v2524
        %v2526 = vmul.f32 %v2429, 1.442695
        %v2527 = vpow.pop %v2526
        %v2528 = vmul.f32 %v2430, 1.442695
        %v2529 = vpow.pop %v2528
        %v2530 = vmul.f32 %v2431, 1.442695
        %v2531 = vpow.pop %v2530
        %v2532 = vmul.f32 %v2432, 1.442695
        %v2533 = vpow.pop %v2532
        %v2534 = vmul.f32 %v2433, 1.442695
        %v2535 = vpow.pop %v2534
        %v2536 = vmul.f32 %v2434, 1.442695
        %v2537 = vpow.pop %v2536
        %v2538 = vmul.f32 %v2435, 1.442695
        %v2539 = vpow.pop %v2538
        %v2540 = vmul.f32 %v2436, 1.442695
        %v2541 = vpow.pop %v2540
        %v2542 = vmul.f32 %v2437, 1.442695
        %v2543 = vpow.pop %v2542
        %v2544 = vmul.f32 %v2438, 1.442695
        %v2545 = vpow.pop %v2544
        %v2546 = vmul.f32 %v2439, 1.442695
        %v2547 = vpow.pop %v2546
        %v2548 = vmul.f32 %v2440, 1.442695
        %v2549 = vpow.pop %v2548
        %v2550 = vmul.f32 %v2441, 1.442695
        %v2551 = vpow.pop %v2550
        %v2552 = vmul.f32 %v2442, 1.442695
        %v2553 = vpow.pop %v2552
        %v2554 = vmul.f32 %v2443, 1.442695
        %v2555 = vpow.pop %v2554
        %v2556 = vmul.f32 %v2444, 1.442695
        %v2557 = vpow.pop %v2556
        %v2558 = vmul.f32 %v2445, 1.442695
        %v2559 = vpow.pop %v2558
        %v2560 = vmul.f32 %v2446, 1.442695
        %v2561 = vpow.pop %v2560
        %v2562 = vmul.f32 %v2447, 1.442695
        %v2563 = vpow.pop %v2562
        %v2564 = vmul.f32 %v2448, 1.442695
        %v2565 = vpow.pop %v2564
        %v2566 = vmul.f32 %v2449, 1.442695
        %v2567 = vpow.pop %v2566
        %v2568 = vmul.f32 %v2450, 1.442695
        %v2569 = vpow.pop %v2568
        %v2570 = vmul.f32 %v2451, 1.442695
        %v2571 = vpow.pop %v2570
        %v2572 = vmul.f32 %v2452, 1.442695
        %v2573 = vpow.pop %v2572
        %v2574 = vmul.f32 %v2453, 1.442695
        %v2575 = vpow.pop %v2574
        %v2576 = vmul.f32 %v2454, 1.442695
        %v2577 = vpow.pop %v2576
        %v2578 = vmul.f32 %v2455, 1.442695
        %v2579 = vpow.pop %v2578
        %v2580 = vmul.f32 %v2456, 1.442695
        %v2581 = vpow.pop %v2580
        %v2582 = vmul.f32 %v2457, 1.442695
        %v2583 = vpow.pop %v2582
        %v2584 = vmul.f32 %v2458, 1.442695
        %v2585 = vpow.pop %v2584
        %v2586 = vmul.f32 %v2459, 1.442695
        %v2587 = vpow.pop %v2586
        %v2588 = vadd.f32 %v2461, 1.0
        %v2589 = vadd.f32 %v2463, 1.0
        %v2590 = vadd.f32 %v2465, 1.0
        %v2591 = vadd.f32 %v2467, 1.0
        %v2592 = vadd.f32 %v2469, 1.0
        %v2593 = vadd.f32 %v2471, 1.0
        %v2594 = vadd.f32 %v2473, 1.0
        %v2595 = vadd.f32 %v2475, 1.0
        %v2596 = vadd.f32 %v2477, 1.0
        %v2597 = vadd.f32 %v2479, 1.0
        %v2598 = vadd.f32 %v2481, 1.0
        %v2599 = vadd.f32 %v2483, 1.0
        %v2600 = vadd.f32 %v2485, 1.0
        %v2601 = vadd.f32 %v2487, 1.0
        %v2602 = vadd.f32 %v2489, 1.0
        %v2603 = vadd.f32 %v2491, 1.0
        %v2604 = vadd.f32 %v2493, 1.0
        %v2605 = vadd.f32 %v2495, 1.0
        %v2606 = vadd.f32 %v2497, 1.0
        %v2607 = vadd.f32 %v2499, 1.0
        %v2608 = vadd.f32 %v2501, 1.0
        %v2609 = vadd.f32 %v2503, 1.0
        %v2610 = vadd.f32 %v2505, 1.0
        %v2611 = vadd.f32 %v2507, 1.0
        %v2612 = vadd.f32 %v2509, 1.0
        %v2613 = vadd.f32 %v2511, 1.0
        %v2614 = vadd.f32 %v2513, 1.0
        %v2615 = vadd.f32 %v2515, 1.0
        %v2616 = vadd.f32 %v2517, 1.0
        %v2617 = vadd.f32 %v2519, 1.0
        %v2618 = vadd.f32 %v2521, 1.0
        %v2619 = vadd.f32 %v2523, 1.0
        %v2620 = vadd.f32 %v2525, 1.0
        %v2621 = vadd.f32 %v2527, 1.0
        %v2622 = vadd.f32 %v2529, 1.0
        %v2623 = vadd.f32 %v2531, 1.0
        %v2624 = vadd.f32 %v2533, 1.0
        %v2625 = vadd.f32 %v2535, 1.0
        %v2626 = vadd.f32 %v2537, 1.0
        %v2627 = vadd.f32 %v2539, 1.0
        %v2628 = vadd.f32 %v2541, 1.0
        %v2629 = vadd.f32 %v2543, 1.0
        %v2630 = vadd.f32 %v2545, 1.0
        %v2631 = vadd.f32 %v2547, 1.0
        %v2632 = vadd.f32 %v2549, 1.0
        %v2633 = vadd.f32 %v2551, 1.0
        %v2634 = vadd.f32 %v2553, 1.0
        %v2635 = vadd.f32 %v2555, 1.0
        %v2636 = vadd.f32 %v2557, 1.0
        %v2637 = vadd.f32 %v2559, 1.0
        %v2638 = vadd.f32 %v2561, 1.0
        %v2639 = vadd.f32 %v2563, 1.0
        %v2640 = vadd.f32 %v2565, 1.0
        %v2641 = vadd.f32 %v2567, 1.0
        %v2642 = vadd.f32 %v2569, 1.0
        %v2643 = vadd.f32 %v2571, 1.0
        %v2644 = vadd.f32 %v2573, 1.0
        %v2645 = vadd.f32 %v2575, 1.0
        %v2646 = vadd.f32 %v2577, 1.0
        %v2647 = vadd.f32 %v2579, 1.0
        %v2648 = vadd.f32 %v2581, 1.0
        %v2649 = vadd.f32 %v2583, 1.0
        %v2650 = vadd.f32 %v2585, 1.0
        %v2651 = vadd.f32 %v2587, 1.0
        %v2652 = vrcp.pop %v2588
        %v2653 = vmul.f32 1.0, %v2652
        %v2654 = vrcp.pop %v2589
        %v2655 = vmul.f32 1.0, %v2654
        %v2656 = vrcp.pop %v2590
        %v2657 = vmul.f32 1.0, %v2656
        %v2658 = vrcp.pop %v2591
        %v2659 = vmul.f32 1.0, %v2658
        %v2660 = vrcp.pop %v2592
        %v2661 = vmul.f32 1.0, %v2660
        %v2662 = vrcp.pop %v2593
        %v2663 = vmul.f32 1.0, %v2662
        %v2664 = vrcp.pop %v2594
        %v2665 = vmul.f32 1.0, %v2664
        %v2666 = vrcp.pop %v2595
        %v2667 = vmul.f32 1.0, %v2666
        %v2668 = vrcp.pop %v2596
        %v2669 = vmul.f32 1.0, %v2668
        %v2670 = vrcp.pop %v2597
        %v2671 = vmul.f32 1.0, %v2670
        %v2672 = vrcp.pop %v2598
        %v2673 = vmul.f32 1.0, %v2672
        %v2674 = vrcp.pop %v2599
        %v2675 = vmul.f32 1.0, %v2674
        %v2676 = vrcp.pop %v2600
        %v2677 = vmul.f32 1.0, %v2676
        %v2678 = vrcp.pop %v2601
        %v2679 = vmul.f32 1.0, %v2678
        %v2680 = vrcp.pop %v2602
        %v2681 = vmul.f32 1.0, %v2680
        %v2682 = vrcp.pop %v2603
        %v2683 = vmul.f32 1.0, %v2682
        %v2684 = vrcp.pop %v2604
        %v2685 = vmul.f32 1.0, %v2684
        %v2686 = vrcp.pop %v2605
        %v2687 = vmul.f32 1.0, %v2686
        %v2688 = vrcp.pop %v2606
        %v2689 = vmul.f32 1.0, %v2688
        %v2690 = vrcp.pop %v2607
        %v2691 = vmul.f32 1.0, %v2690
        %v2692 = vrcp.pop %v2608
        %v2693 = vmul.f32 1.0, %v2692
        %v2694 = vrcp.pop %v2609
        %v2695 = vmul.f32 1.0, %v2694
        %v2696 = vrcp.pop %v2610
        %v2697 = vmul.f32 1.0, %v2696
        %v2698 = vrcp.pop %v2611
        %v2699 = vmul.f32 1.0, %v2698
        %v2700 = vrcp.pop %v2612
        %v2701 = vmul.f32 1.0, %v2700
        %v2702 = vrcp.pop %v2613
        %v2703 = vmul.f32 1.0, %v2702
        %v2704 = vrcp.pop %v2614
        %v2705 = vmul.f32 1.0, %v2704
        %v2706 = vrcp.pop %v2615
        %v2707 = vmul.f32 1.0, %v2706
        %v2708 = vrcp.pop %v2616
        %v2709 = vmul.f32 1.0, %v2708
        %v2710 = vrcp.pop %v2617
        %v2711 = vmul.f32 1.0, %v2710
        %v2712 = vrcp.pop %v2618
        %v2713 = vmul.f32 1.0, %v2712
        %v2714 = vrcp.pop %v2619
        %v2715 = vmul.f32 1.0, %v2714
        %v2716 = vrcp.pop %v2620
        %v2717 = vmul.f32 1.0, %v2716
        %v2718 = vrcp.pop %v2621
        %v2719 = vmul.f32 1.0, %v2718
        %v2720 = vrcp.pop %v2622
        %v2721 = vmul.f32 1.0, %v2720
        %v2722 = vrcp.pop %v2623
        %v2723 = vmul.f32 1.0, %v2722
        %v2724 = vrcp.pop %v2624
        %v2725 = vmul.f32 1.0, %v2724
        %v2726 = vrcp.pop %v2625
        %v2727 = vmul.f32 1.0, %v2726
        %v2728 = vrcp.pop %v2626
        %v2729 = vmul.f32 1.0, %v2728
        %v2730 = vrcp.pop %v2627
        %v2731 = vmul.f32 1.0, %v2730
        %v2732 = vrcp.pop %v2628
        %v2733 = vmul.f32 1.0, %v2732
        %v2734 = vrcp.pop %v2629
        %v2735 = vmul.f32 1.0, %v2734
        %v2736 = vrcp.pop %v2630
        %v2737 = vmul.f32 1.0, %v2736
        %v2738 = vrcp.pop %v2631
        %v2739 = vmul.f32 1.0, %v2738
        %v2740 = vrcp.pop %v2632
        %v2741 = vmul.f32 1.0, %v2740
        %v2742 = vrcp.pop %v2633
        %v2743 = vmul.f32 1.0, %v2742
        %v2744 = vrcp.pop %v2634
        %v2745 = vmul.f32 1.0, %v2744
        %v2746 = vrcp.pop %v2635
        %v2747 = vmul.f32 1.0, %v2746
        %v2748 = vrcp.pop %v2636
        %v2749 = vmul.f32 1.0, %v2748
        %v2750 = vrcp.pop %v2637
        %v2751 = vmul.f32 1.0, %v2750
        %v2752 = vrcp.pop %v2638
        %v2753 = vmul.f32 1.0, %v2752
        %v2754 = vrcp.pop %v2639
        %v2755 = vmul.f32 1.0, %v2754
        %v2756 = vrcp.pop %v2640
        %v2757 = vmul.f32 1.0, %v2756
        %v2758 = vrcp.pop %v2641
        %v2759 = vmul.f32 1.0, %v2758
        %v2760 = vrcp.pop %v2642
        %v2761 = vmul.f32 1.0, %v2760
        %v2762 = vrcp.pop %v2643
        %v2763 = vmul.f32 1.0, %v2762
        %v2764 = vrcp.pop %v2644
        %v2765 = vmul.f32 1.0, %v2764
        %v2766 = vrcp.pop %v2645
        %v2767 = vmul.f32 1.0, %v2766
        %v2768 = vrcp.pop %v2646
        %v2769 = vmul.f32 1.0, %v2768
        %v2770 = vrcp.pop %v2647
        %v2771 = vmul.f32 1.0, %v2770
        %v2772 = vrcp.pop %v2648
        %v2773 = vmul.f32 1.0, %v2772
        %v2774 = vrcp.pop %v2649
        %v2775 = vmul.f32 1.0, %v2774
        %v2776 = vrcp.pop %v2650
        %v2777 = vmul.f32 1.0, %v2776
        %v2778 = vrcp.pop %v2651
        %v2779 = vmul.f32 1.0, %v2778
        %v2780 = vmul.f32 %v2332, %v2653
        %v2781 = vmul.f32 %v2333, %v2655
        %v2782 = vmul.f32 %v2334, %v2657
        %v2783 = vmul.f32 %v2335, %v2659
        %v2784 = vmul.f32 %v2336, %v2661
        %v2785 = vmul.f32 %v2337, %v2663
        %v2786 = vmul.f32 %v2338, %v2665
        %v2787 = vmul.f32 %v2339, %v2667
        %v2788 = vmul.f32 %v2340, %v2669
        %v2789 = vmul.f32 %v2341, %v2671
        %v2790 = vmul.f32 %v2342, %v2673
        %v2791 = vmul.f32 %v2343, %v2675
        %v2792 = vmul.f32 %v2344, %v2677
        %v2793 = vmul.f32 %v2345, %v2679
        %v2794 = vmul.f32 %v2346, %v2681
        %v2795 = vmul.f32 %v2347, %v2683
        %v2796 = vmul.f32 %v2348, %v2685
        %v2797 = vmul.f32 %v2349, %v2687
        %v2798 = vmul.f32 %v2350, %v2689
        %v2799 = vmul.f32 %v2351, %v2691
        %v2800 = vmul.f32 %v2352, %v2693
        %v2801 = vmul.f32 %v2353, %v2695
        %v2802 = vmul.f32 %v2354, %v2697
        %v2803 = vmul.f32 %v2355, %v2699
        %v2804 = vmul.f32 %v2356, %v2701
        %v2805 = vmul.f32 %v2357, %v2703
        %v2806 = vmul.f32 %v2358, %v2705
        %v2807 = vmul.f32 %v2359, %v2707
        %v2808 = vmul.f32 %v2360, %v2709
        %v2809 = vmul.f32 %v2361, %v2711
        %v2810 = vmul.f32 %v2362, %v2713
        %v2811 = vmul.f32 %v2363, %v2715
        %v2812 = vmul.f32 %v2364, %v2717
        %v2813 = vmul.f32 %v2365, %v2719
        %v2814 = vmul.f32 %v2366, %v2721
        %v2815 = vmul.f32 %v2367, %v2723
        %v2816 = vmul.f32 %v2368, %v2725
        %v2817 = vmul.f32 %v2369, %v2727
        %v2818 = vmul.f32 %v2370, %v2729
        %v2819 = vmul.f32 %v2371, %v2731
        %v2820 = vmul.f32 %v2372, %v2733
        %v2821 = vmul.f32 %v2373, %v2735
        %v2822 = vmul.f32 %v2374, %v2737
        %v2823 = vmul.f32 %v2375, %v2739
        %v2824 = vmul.f32 %v2376, %v2741
        %v2825 = vmul.f32 %v2377, %v2743
        %v2826 = vmul.f32 %v2378, %v2745
        %v2827 = vmul.f32 %v2379, %v2747
        %v2828 = vmul.f32 %v2380, %v2749
        %v2829 = vmul.f32 %v2381, %v2751
        %v2830 = vmul.f32 %v2382, %v2753
        %v2831 = vmul.f32 %v2383, %v2755
        %v2832 = vmul.f32 %v2384, %v2757
        %v2833 = vmul.f32 %v2385, %v2759
        %v2834 = vmul.f32 %v2386, %v2761
        %v2835 = vmul.f32 %v2387, %v2763
        %v2836 = vmul.f32 %v2388, %v2765
        %v2837 = vmul.f32 %v2389, %v2767
        %v2838 = vmul.f32 %v2390, %v2769
        %v2839 = vmul.f32 %v2391, %v2771
        %v2840 = vmul.f32 %v2392, %v2773
        %v2841 = vmul.f32 %v2393, %v2775
        %v2842 = vmul.f32 %v2394, %v2777
        %v2843 = vmul.f32 %v2395, %v2779
        %v2844 = vld [vmem:[%s6] sm:$0x3]
        %v2846 = vlaneseq
        %v2847 = vshrl.u32 %v2846, 7
        %v2848 = vsub.s32 0, %v2847
        %v2849 = vrot.slane %v2844, %v2848
        %v2850 = vlaneseq
        %v2851 = vshrl.u32 %v2850, 7
        %v2852 = vsub.s32 1, %v2851
        %v2853 = vrot.slane %v2844, %v2852
        %v2856 = vmul.f32 %v2780, %v2849
        %v2857 = vmul.f32 %v2781, %v2853
        %v2858 = vmul.f32 %v2782, %v2849
        %v2859 = vmul.f32 %v2783, %v2853
        %v2860 = vmul.f32 %v2784, %v2849
        %v2861 = vmul.f32 %v2785, %v2853
        %v2862 = vmul.f32 %v2786, %v2849
        %v2863 = vmul.f32 %v2787, %v2853
        %v2864 = vmul.f32 %v2788, %v2849
        %v2865 = vmul.f32 %v2789, %v2853
        %v2866 = vmul.f32 %v2790, %v2849
        %v2867 = vmul.f32 %v2791, %v2853
        %v2868 = vmul.f32 %v2792, %v2849
        %v2869 = vmul.f32 %v2793, %v2853
        %v2870 = vmul.f32 %v2794, %v2849
        %v2871 = vmul.f32 %v2795, %v2853
        %v2872 = vmul.f32 %v2796, %v2849
        %v2873 = vmul.f32 %v2797, %v2853
        %v2874 = vmul.f32 %v2798, %v2849
        %v2875 = vmul.f32 %v2799, %v2853
        %v2876 = vmul.f32 %v2800, %v2849
        %v2877 = vmul.f32 %v2801, %v2853
        %v2878 = vmul.f32 %v2802, %v2849
        %v2879 = vmul.f32 %v2803, %v2853
        %v2880 = vmul.f32 %v2804, %v2849
        %v2881 = vmul.f32 %v2805, %v2853
        %v2882 = vmul.f32 %v2806, %v2849
        %v2883 = vmul.f32 %v2807, %v2853
        %v2884 = vmul.f32 %v2808, %v2849
        %v2885 = vmul.f32 %v2809, %v2853
        %v2886 = vmul.f32 %v2810, %v2849
        %v2887 = vmul.f32 %v2811, %v2853
        %v2888 = vmul.f32 %v2812, %v2849
        %v2889 = vmul.f32 %v2813, %v2853
        %v2890 = vmul.f32 %v2814, %v2849
        %v2891 = vmul.f32 %v2815, %v2853
        %v2892 = vmul.f32 %v2816, %v2849
        %v2893 = vmul.f32 %v2817, %v2853
        %v2894 = vmul.f32 %v2818, %v2849
        %v2895 = vmul.f32 %v2819, %v2853
        %v2896 = vmul.f32 %v2820, %v2849
        %v2897 = vmul.f32 %v2821, %v2853
        %v2898 = vmul.f32 %v2822, %v2849
        %v2899 = vmul.f32 %v2823, %v2853
        %v2900 = vmul.f32 %v2824, %v2849
        %v2901 = vmul.f32 %v2825, %v2853
        %v2902 = vmul.f32 %v2826, %v2849
        %v2903 = vmul.f32 %v2827, %v2853
        %v2904 = vmul.f32 %v2828, %v2849
        %v2905 = vmul.f32 %v2829, %v2853
        %v2906 = vmul.f32 %v2830, %v2849
        %v2907 = vmul.f32 %v2831, %v2853
        %v2908 = vmul.f32 %v2832, %v2849
        %v2909 = vmul.f32 %v2833, %v2853
        %v2910 = vmul.f32 %v2834, %v2849
        %v2911 = vmul.f32 %v2835, %v2853
        %v2912 = vmul.f32 %v2836, %v2849
        %v2913 = vmul.f32 %v2837, %v2853
        %v2914 = vmul.f32 %v2838, %v2849
        %v2915 = vmul.f32 %v2839, %v2853
        %v2916 = vmul.f32 %v2840, %v2849
        %v2917 = vmul.f32 %v2841, %v2853
        %v2918 = vmul.f32 %v2842, %v2849
        %v2919 = vmul.f32 %v2843, %v2853
        %v2920 = vadd.f32 %v2856, %v2857
        %2921 = vadd.xlane.f32.xlu0 %v2920
        %v2922 = vpop.xlane.xlu0 %2921
        %v2923 = vadd.f32 %v2858, %v2859
        %2924 = vadd.xlane.f32.xlu0 %v2923
        %v2925 = vpop.xlane.xlu0 %2924
        %v2926 = vadd.f32 %v2860, %v2861
        %2927 = vadd.xlane.f32.xlu0 %v2926
        %v2928 = vpop.xlane.xlu0 %2927
        %v2929 = vadd.f32 %v2862, %v2863
        %2930 = vadd.xlane.f32.xlu0 %v2929
        %v2931 = vpop.xlane.xlu0 %2930
        %v2932 = vadd.f32 %v2864, %v2865
        %2933 = vadd.xlane.f32.xlu0 %v2932
        %v2934 = vpop.xlane.xlu0 %2933
        %v2935 = vadd.f32 %v2866, %v2867
        %2936 = vadd.xlane.f32.xlu0 %v2935
        %v2937 = vpop.xlane.xlu0 %2936
        %v2938 = vadd.f32 %v2868, %v2869
        %2939 = vadd.xlane.f32.xlu0 %v2938
        %v2940 = vpop.xlane.xlu0 %2939
        %v2941 = vadd.f32 %v2870, %v2871
        %2942 = vadd.xlane.f32.xlu0 %v2941
        %v2943 = vpop.xlane.xlu0 %2942
        %v2944 = vadd.f32 %v2872, %v2873
        %2945 = vadd.xlane.f32.xlu0 %v2944
        %v2946 = vpop.xlane.xlu0 %2945
        %v2947 = vadd.f32 %v2874, %v2875
        %2948 = vadd.xlane.f32.xlu0 %v2947
        %v2949 = vpop.xlane.xlu0 %2948
        %v2950 = vadd.f32 %v2876, %v2877
        %2951 = vadd.xlane.f32.xlu0 %v2950
        %v2952 = vpop.xlane.xlu0 %2951
        %v2953 = vadd.f32 %v2878, %v2879
        %2954 = vadd.xlane.f32.xlu0 %v2953
        %v2955 = vpop.xlane.xlu0 %2954
        %v2956 = vadd.f32 %v2880, %v2881
        %2957 = vadd.xlane.f32.xlu0 %v2956
        %v2958 = vpop.xlane.xlu0 %2957
        %v2959 = vadd.f32 %v2882, %v2883
        %2960 = vadd.xlane.f32.xlu0 %v2959
        %v2961 = vpop.xlane.xlu0 %2960
        %v2962 = vadd.f32 %v2884, %v2885
        %2963 = vadd.xlane.f32.xlu0 %v2962
        %v2964 = vpop.xlane.xlu0 %2963
        %v2965 = vadd.f32 %v2886, %v2887
        %2966 = vadd.xlane.f32.xlu0 %v2965
        %v2967 = vpop.xlane.xlu0 %2966
        %v2968 = vadd.f32 %v2888, %v2889
        %2969 = vadd.xlane.f32.xlu0 %v2968
        %v2970 = vpop.xlane.xlu0 %2969
        %v2971 = vadd.f32 %v2890, %v2891
        %2972 = vadd.xlane.f32.xlu0 %v2971
        %v2973 = vpop.xlane.xlu0 %2972
        %v2974 = vadd.f32 %v2892, %v2893
        %2975 = vadd.xlane.f32.xlu0 %v2974
        %v2976 = vpop.xlane.xlu0 %2975
        %v2977 = vadd.f32 %v2894, %v2895
        %2978 = vadd.xlane.f32.xlu0 %v2977
        %v2979 = vpop.xlane.xlu0 %2978
        %v2980 = vadd.f32 %v2896, %v2897
        %2981 = vadd.xlane.f32.xlu0 %v2980
        %v2982 = vpop.xlane.xlu0 %2981
        %v2983 = vadd.f32 %v2898, %v2899
        %2984 = vadd.xlane.f32.xlu0 %v2983
        %v2985 = vpop.xlane.xlu0 %2984
        %v2986 = vadd.f32 %v2900, %v2901
        %2987 = vadd.xlane.f32.xlu0 %v2986
        %v2988 = vpop.xlane.xlu0 %2987
        %v2989 = vadd.f32 %v2902, %v2903
        %2990 = vadd.xlane.f32.xlu0 %v2989
        %v2991 = vpop.xlane.xlu0 %2990
        %v2992 = vadd.f32 %v2904, %v2905
        %2993 = vadd.xlane.f32.xlu0 %v2992
        %v2994 = vpop.xlane.xlu0 %2993
        %v2995 = vadd.f32 %v2906, %v2907
        %2996 = vadd.xlane.f32.xlu0 %v2995
        %v2997 = vpop.xlane.xlu0 %2996
        %v2998 = vadd.f32 %v2908, %v2909
        %2999 = vadd.xlane.f32.xlu0 %v2998
        %v3000 = vpop.xlane.xlu0 %2999
        %v3001 = vadd.f32 %v2910, %v2911
        %3002 = vadd.xlane.f32.xlu0 %v3001
        %v3003 = vpop.xlane.xlu0 %3002
        %v3004 = vadd.f32 %v2912, %v2913
        %3005 = vadd.xlane.f32.xlu0 %v3004
        %v3006 = vpop.xlane.xlu0 %3005
        %v3007 = vadd.f32 %v2914, %v2915
        %3008 = vadd.xlane.f32.xlu0 %v3007
        %v3009 = vpop.xlane.xlu0 %3008
        %v3010 = vadd.f32 %v2916, %v2917
        %3011 = vadd.xlane.f32.xlu0 %v3010
        %v3012 = vpop.xlane.xlu0 %3011
        %v3013 = vadd.f32 %v2918, %v2919
        %3014 = vadd.xlane.f32.xlu0 %v3013
        %v3015 = vpop.xlane.xlu0 %3014
        %s3016 = sld [smem:[#allocation8]]
        %v3017 = vstv %s3016
        %v3018 = vadd.f32 %v2922, %v3017
        %v3019 = vadd.f32 %v2925, %v3017
        %v3020 = vadd.f32 %v2928, %v3017
        %v3021 = vadd.f32 %v2931, %v3017
        %v3022 = vadd.f32 %v2934, %v3017
        %v3023 = vadd.f32 %v2937, %v3017
        %v3024 = vadd.f32 %v2940, %v3017
        %v3025 = vadd.f32 %v2943, %v3017
        %v3026 = vadd.f32 %v2946, %v3017
        %v3027 = vadd.f32 %v2949, %v3017
        %v3028 = vadd.f32 %v2952, %v3017
        %v3029 = vadd.f32 %v2955, %v3017
        %v3030 = vadd.f32 %v2958, %v3017
        %v3031 = vadd.f32 %v2961, %v3017
        %v3032 = vadd.f32 %v2964, %v3017
        %v3033 = vadd.f32 %v2967, %v3017
        %v3034 = vadd.f32 %v2970, %v3017
        %v3035 = vadd.f32 %v2973, %v3017
        %v3036 = vadd.f32 %v2976, %v3017
        %v3037 = vadd.f32 %v2979, %v3017
        %v3038 = vadd.f32 %v2982, %v3017
        %v3039 = vadd.f32 %v2985, %v3017
        %v3040 = vadd.f32 %v2988, %v3017
        %v3041 = vadd.f32 %v2991, %v3017
        %v3042 = vadd.f32 %v2994, %v3017
        %v3043 = vadd.f32 %v2997, %v3017
        %v3044 = vadd.f32 %v3000, %v3017
        %v3045 = vadd.f32 %v3003, %v3017
        %v3046 = vadd.f32 %v3006, %v3017
        %v3047 = vadd.f32 %v3009, %v3017
        %v3048 = vadd.f32 %v3012, %v3017
        %v3049 = vadd.f32 %v3015, %v3017
        %vm3050 = vcmask 7168
        %3051 = vst.msk [vmem:[%s419] sm:$0xff] %vm3050, %v3018
        %3052 = vst.msk [vmem:[%s419 + $0x8] sm:$0xff] %vm3050, %v3019
        %3053 = vst.msk [vmem:[%s419 + $0x10] sm:$0xff] %vm3050, %v3020
        %3054 = vst.msk [vmem:[%s419 + $0x18] sm:$0xff] %vm3050, %v3021
        %3055 = vst.msk [vmem:[%s419 + $0x20] sm:$0xff] %vm3050, %v3022
        %3056 = vst.msk [vmem:[%s419 + $0x28] sm:$0xff] %vm3050, %v3023
        %3057 = vst.msk [vmem:[%s419 + $0x30] sm:$0xff] %vm3050, %v3024
        %3058 = vst.msk [vmem:[%s419 + $0x38] sm:$0xff] %vm3050, %v3025
        %3059 = vst.msk [vmem:[%s419 + $0x40] sm:$0xff] %vm3050, %v3026
        %3060 = vst.msk [vmem:[%s419 + $0x48] sm:$0xff] %vm3050, %v3027
        %3061 = vst.msk [vmem:[%s419 + $0x50] sm:$0xff] %vm3050, %v3028
        %3062 = vst.msk [vmem:[%s419 + $0x58] sm:$0xff] %vm3050, %v3029
        %3063 = vst.msk [vmem:[%s419 + $0x60] sm:$0xff] %vm3050, %v3030
        %3064 = vst.msk [vmem:[%s419 + $0x68] sm:$0xff] %vm3050, %v3031
        %3065 = vst.msk [vmem:[%s419 + $0x70] sm:$0xff] %vm3050, %v3032
        %3066 = vst.msk [vmem:[%s419 + $0x78] sm:$0xff] %vm3050, %v3033
        %3067 = vst.msk [vmem:[%s419 + $0x80] sm:$0xff] %vm3050, %v3034
        %3068 = vst.msk [vmem:[%s419 + $0x88] sm:$0xff] %vm3050, %v3035
        %3069 = vst.msk [vmem:[%s419 + $0x90] sm:$0xff] %vm3050, %v3036
        %3070 = vst.msk [vmem:[%s419 + $0x98] sm:$0xff] %vm3050, %v3037
        %3071 = vst.msk [vmem:[%s419 + $0xa0] sm:$0xff] %vm3050, %v3038
        %3072 = vst.msk [vmem:[%s419 + $0xa8] sm:$0xff] %vm3050, %v3039
        %3073 = vst.msk [vmem:[%s419 + $0xb0] sm:$0xff] %vm3050, %v3040
        %3074 = vst.msk [vmem:[%s419 + $0xb8] sm:$0xff] %vm3050, %v3041
        %3075 = vst.msk [vmem:[%s419 + $0xc0] sm:$0xff] %vm3050, %v3042
        %3076 = vst.msk [vmem:[%s419 + $0xc8] sm:$0xff] %vm3050, %v3043
        %3077 = vst.msk [vmem:[%s419 + $0xd0] sm:$0xff] %vm3050, %v3044
        %3078 = vst.msk [vmem:[%s419 + $0xd8] sm:$0xff] %vm3050, %v3045
        %3079 = vst.msk [vmem:[%s419 + $0xe0] sm:$0xff] %vm3050, %v3046
        %3080 = vst.msk [vmem:[%s419 + $0xe8] sm:$0xff] %vm3050, %v3047
        %3081 = vst.msk [vmem:[%s419 + $0xf0] sm:$0xff] %vm3050, %v3048
        %3082 = vst.msk [vmem:[%s419 + $0xf8] sm:$0xff] %vm3050, %v3049
        %v3115 = vunpack.c.l.b16 %v1508
        %v3116 = vunpack.c.l.b16 %v1509
        %v3117 = vunpack.c.h.b16 %v1508
        %v3118 = vunpack.c.h.b16 %v1509
        %v3119 = vunpack.c.l.b16 %v1510
        %v3120 = vunpack.c.l.b16 %v1511
        %v3121 = vunpack.c.h.b16 %v1510
        %v3122 = vunpack.c.h.b16 %v1511
        %v3123 = vunpack.c.l.b16 %v1512
        %v3124 = vunpack.c.l.b16 %v1513
        %v3125 = vunpack.c.h.b16 %v1512
        %v3126 = vunpack.c.h.b16 %v1513
        %v3127 = vunpack.c.l.b16 %v1514
        %v3128 = vunpack.c.l.b16 %v1515
        %v3129 = vunpack.c.h.b16 %v1514
        %v3130 = vunpack.c.h.b16 %v1515
        %v3131 = vunpack.c.l.b16 %v1516
        %v3132 = vunpack.c.l.b16 %v1517
        %v3133 = vunpack.c.h.b16 %v1516
        %v3134 = vunpack.c.h.b16 %v1517
        %v3135 = vunpack.c.l.b16 %v1518
        %v3136 = vunpack.c.l.b16 %v1519
        %v3137 = vunpack.c.h.b16 %v1518
        %v3138 = vunpack.c.h.b16 %v1519
        %v3139 = vunpack.c.l.b16 %v1520
        %v3140 = vunpack.c.l.b16 %v1521
        %v3141 = vunpack.c.h.b16 %v1520
        %v3142 = vunpack.c.h.b16 %v1521
        %v3143 = vunpack.c.l.b16 %v1522
        %v3144 = vunpack.c.l.b16 %v1523
        %v3145 = vunpack.c.h.b16 %v1522
        %v3146 = vunpack.c.h.b16 %v1523
        %v3147 = vunpack.c.l.b16 %v1524
        %v3148 = vunpack.c.l.b16 %v1525
        %v3149 = vunpack.c.h.b16 %v1524
        %v3150 = vunpack.c.h.b16 %v1525
        %v3151 = vunpack.c.l.b16 %v1526
        %v3152 = vunpack.c.l.b16 %v1527
        %v3153 = vunpack.c.h.b16 %v1526
        %v3154 = vunpack.c.h.b16 %v1527
        %v3155 = vunpack.c.l.b16 %v1528
        %v3156 = vunpack.c.l.b16 %v1529
        %v3157 = vunpack.c.h.b16 %v1528
        %v3158 = vunpack.c.h.b16 %v1529
        %v3159 = vunpack.c.l.b16 %v1530
        %v3160 = vunpack.c.l.b16 %v1531
        %v3161 = vunpack.c.h.b16 %v1530
        %v3162 = vunpack.c.h.b16 %v1531
        %v3163 = vunpack.c.l.b16 %v1532
        %v3164 = vunpack.c.l.b16 %v1533
        %v3165 = vunpack.c.h.b16 %v1532
        %v3166 = vunpack.c.h.b16 %v1533
        %v3167 = vunpack.c.l.b16 %v1534
        %v3168 = vunpack.c.l.b16 %v1535
        %v3169 = vunpack.c.h.b16 %v1534
        %v3170 = vunpack.c.h.b16 %v1535
        %v3171 = vunpack.c.l.b16 %v1536
        %v3172 = vunpack.c.l.b16 %v1537
        %v3173 = vunpack.c.h.b16 %v1536
        %v3174 = vunpack.c.h.b16 %v1537
        %v3175 = vunpack.c.l.b16 %v1538
        %v3176 = vunpack.c.l.b16 %v1539
        %v3177 = vunpack.c.h.b16 %v1538
        %v3178 = vunpack.c.h.b16 %v1539
        %v3179 = vpack.c.b16 %v3116, %v3115
        %v3180 = vpack.c.b16 %v3118, %v3117
        %v3181 = vpack.c.b16 %v3120, %v3119
        %v3182 = vpack.c.b16 %v3122, %v3121
        %v3183 = vpack.c.b16 %v3124, %v3123
        %v3184 = vpack.c.b16 %v3126, %v3125
        %v3185 = vpack.c.b16 %v3128, %v3127
        %v3186 = vpack.c.b16 %v3130, %v3129
        %v3187 = vpack.c.b16 %v3132, %v3131
        %v3188 = vpack.c.b16 %v3134, %v3133
        %v3189 = vpack.c.b16 %v3136, %v3135
        %v3190 = vpack.c.b16 %v3138, %v3137
        %v3191 = vpack.c.b16 %v3140, %v3139
        %v3192 = vpack.c.b16 %v3142, %v3141
        %v3193 = vpack.c.b16 %v3144, %v3143
        %v3194 = vpack.c.b16 %v3146, %v3145
        %v3195 = vpack.c.b16 %v3148, %v3147
        %v3196 = vpack.c.b16 %v3150, %v3149
        %v3197 = vpack.c.b16 %v3152, %v3151
        %v3198 = vpack.c.b16 %v3154, %v3153
        %v3199 = vpack.c.b16 %v3156, %v3155
        %v3200 = vpack.c.b16 %v3158, %v3157
        %v3201 = vpack.c.b16 %v3160, %v3159
        %v3202 = vpack.c.b16 %v3162, %v3161
        %v3203 = vpack.c.b16 %v3164, %v3163
        %v3204 = vpack.c.b16 %v3166, %v3165
        %v3205 = vpack.c.b16 %v3168, %v3167
        %v3206 = vpack.c.b16 %v3170, %v3169
        %v3207 = vpack.c.b16 %v3172, %v3171
        %v3208 = vpack.c.b16 %v3174, %v3173
        %v3209 = vpack.c.b16 %v3176, %v3175
        %v3210 = vpack.c.b16 %v3178, %v3177
        %3243 = vst [vmem:[%s409] sm:$0xff] %v3179
        %3244 = vst [vmem:[%s409 + $0x8] sm:$0xff] %v3180
        %3245 = vst [vmem:[%s409 + $0x10] sm:$0xff] %v3181
        %3246 = vst [vmem:[%s409 + $0x18] sm:$0xff] %v3182
        %3247 = vst [vmem:[%s409 + $0x20] sm:$0xff] %v3183
        %3248 = vst [vmem:[%s409 + $0x28] sm:$0xff] %v3184
        %3249 = vst [vmem:[%s409 + $0x30] sm:$0xff] %v3185
        %3250 = vst [vmem:[%s409 + $0x38] sm:$0xff] %v3186
        %3251 = vst [vmem:[%s409 + $0x40] sm:$0xff] %v3187
        %3252 = vst [vmem:[%s409 + $0x48] sm:$0xff] %v3188
        %3253 = vst [vmem:[%s409 + $0x50] sm:$0xff] %v3189
        %3254 = vst [vmem:[%s409 + $0x58] sm:$0xff] %v3190
        %3255 = vst [vmem:[%s409 + $0x60] sm:$0xff] %v3191
        %3256 = vst [vmem:[%s409 + $0x68] sm:$0xff] %v3192
        %3257 = vst [vmem:[%s409 + $0x70] sm:$0xff] %v3193
        %3258 = vst [vmem:[%s409 + $0x78] sm:$0xff] %v3194
        %3259 = vst [vmem:[%s409 + $0x80] sm:$0xff] %v3195
        %3260 = vst [vmem:[%s409 + $0x88] sm:$0xff] %v3196
        %3261 = vst [vmem:[%s409 + $0x90] sm:$0xff] %v3197
        %3262 = vst [vmem:[%s409 + $0x98] sm:$0xff] %v3198
        %3263 = vst [vmem:[%s409 + $0xa0] sm:$0xff] %v3199
        %3264 = vst [vmem:[%s409 + $0xa8] sm:$0xff] %v3200
        %3265 = vst [vmem:[%s409 + $0xb0] sm:$0xff] %v3201
        %3266 = vst [vmem:[%s409 + $0xb8] sm:$0xff] %v3202
        %3267 = vst [vmem:[%s409 + $0xc0] sm:$0xff] %v3203
        %3268 = vst [vmem:[%s409 + $0xc8] sm:$0xff] %v3204
        %3269 = vst [vmem:[%s409 + $0xd0] sm:$0xff] %v3205
        %3270 = vst [vmem:[%s409 + $0xd8] sm:$0xff] %v3206
        %3271 = vst [vmem:[%s409 + $0xe0] sm:$0xff] %v3207
        %3272 = vst [vmem:[%s409 + $0xe8] sm:$0xff] %v3208
        %3273 = vst [vmem:[%s409 + $0xf0] sm:$0xff] %v3209
        %3274 = vst [vmem:[%s409 + $0xf8] sm:$0xff] %v3210
        %s3275 = smul.u32 %s33, 256
        %v3276 = vlaneseq
        %v3277 = vshrl.u32 %v3276, 7
        %v3278 = vadd.s32 %v3277, 8
        %v3279 = vadd.s32 %v3277, 16
        %v3280 = vadd.s32 %v3277, 24
        %v3281 = vadd.s32 %v3277, 32
        %v3282 = vadd.s32 %v3277, 40
        %v3283 = vadd.s32 %v3277, 48
        %v3284 = vadd.s32 %v3277, 56
        %v3285 = vadd.s32 %v3277, 64
        %v3286 = vadd.s32 %v3277, 72
        %v3287 = vadd.s32 %v3277, 80
        %v3288 = vadd.s32 %v3277, 88
        %v3289 = vadd.s32 %v3277, 96
        %v3290 = vadd.s32 %v3277, 104
        %v3291 = vadd.s32 %v3277, 112
        %v3292 = vadd.s32 %v3277, 120
        %v3293 = vadd.s32 %v3277, 128
        %v3294 = vadd.s32 %v3277, 136
        %v3295 = vadd.s32 %v3277, 144
        %v3296 = vadd.s32 %v3277, 152
        %v3297 = vadd.s32 %v3277, 160
        %v3298 = vadd.s32 %v3277, 168
        %v3299 = vadd.s32 %v3277, 176
        %v3300 = vadd.s32 %v3277, 184
        %v3301 = vadd.s32 %v3277, 192
        %v3302 = vadd.s32 %v3277, 200
        %v3303 = vadd.s32 %v3277, 208
        %v3304 = vadd.s32 %v3277, 216
        %v3305 = vadd.s32 %v3277, 224
        %v3306 = vadd.s32 %v3277, 232
        %v3307 = vadd.s32 %v3277, 240
        %v3308 = vadd.s32 %v3277, 248
        %v3309 = vstv %s3275
        %v3310 = vadd.s32 %v3309, %v3277
        %v3311 = vadd.s32 %v3309, %v3278
        %v3312 = vadd.s32 %v3309, %v3279
        %v3313 = vadd.s32 %v3309, %v3280
        %v3314 = vadd.s32 %v3309, %v3281
        %v3315 = vadd.s32 %v3309, %v3282
        %v3316 = vadd.s32 %v3309, %v3283
        %v3317 = vadd.s32 %v3309, %v3284
        %v3318 = vadd.s32 %v3309, %v3285
        %v3319 = vadd.s32 %v3309, %v3286
        %v3320 = vadd.s32 %v3309, %v3287
        %v3321 = vadd.s32 %v3309, %v3288
        %v3322 = vadd.s32 %v3309, %v3289
        %v3323 = vadd.s32 %v3309, %v3290
        %v3324 = vadd.s32 %v3309, %v3291
        %v3325 = vadd.s32 %v3309, %v3292
        %v3326 = vadd.s32 %v3309, %v3293
        %v3327 = vadd.s32 %v3309, %v3294
        %v3328 = vadd.s32 %v3309, %v3295
        %v3329 = vadd.s32 %v3309, %v3296
        %v3330 = vadd.s32 %v3309, %v3297
        %v3331 = vadd.s32 %v3309, %v3298
        %v3332 = vadd.s32 %v3309, %v3299
        %v3333 = vadd.s32 %v3309, %v3300
        %v3334 = vadd.s32 %v3309, %v3301
        %v3335 = vadd.s32 %v3309, %v3302
        %v3336 = vadd.s32 %v3309, %v3303
        %v3337 = vadd.s32 %v3309, %v3304
        %v3338 = vadd.s32 %v3309, %v3305
        %v3339 = vadd.s32 %v3309, %v3306
        %v3340 = vadd.s32 %v3309, %v3307
        %v3341 = vadd.s32 %v3309, %v3308
        %s3342 = sld [smem:[#allocation7]]
        %v3343 = vstv %s3342
        %vm3344 = vcmp.lt.s32.totalorder %v3310, %v3343
        %vm3345 = vcmp.lt.s32.totalorder %v3311, %v3343
        %vm3346 = vcmp.lt.s32.totalorder %v3312, %v3343
        %vm3347 = vcmp.lt.s32.totalorder %v3313, %v3343
        %vm3348 = vcmp.lt.s32.totalorder %v3314, %v3343
        %vm3349 = vcmp.lt.s32.totalorder %v3315, %v3343
        %vm3350 = vcmp.lt.s32.totalorder %v3316, %v3343
        %vm3351 = vcmp.lt.s32.totalorder %v3317, %v3343
        %vm3352 = vcmp.lt.s32.totalorder %v3318, %v3343
        %vm3353 = vcmp.lt.s32.totalorder %v3319, %v3343
        %vm3354 = vcmp.lt.s32.totalorder %v3320, %v3343
        %vm3355 = vcmp.lt.s32.totalorder %v3321, %v3343
        %vm3356 = vcmp.lt.s32.totalorder %v3322, %v3343
        %vm3357 = vcmp.lt.s32.totalorder %v3323, %v3343
        %vm3358 = vcmp.lt.s32.totalorder %v3324, %v3343
        %vm3359 = vcmp.lt.s32.totalorder %v3325, %v3343
        %vm3360 = vcmp.lt.s32.totalorder %v3326, %v3343
        %vm3361 = vcmp.lt.s32.totalorder %v3327, %v3343
        %vm3362 = vcmp.lt.s32.totalorder %v3328, %v3343
        %vm3363 = vcmp.lt.s32.totalorder %v3329, %v3343
        %vm3364 = vcmp.lt.s32.totalorder %v3330, %v3343
        %vm3365 = vcmp.lt.s32.totalorder %v3331, %v3343
        %vm3366 = vcmp.lt.s32.totalorder %v3332, %v3343
        %vm3367 = vcmp.lt.s32.totalorder %v3333, %v3343
        %vm3368 = vcmp.lt.s32.totalorder %v3334, %v3343
        %vm3369 = vcmp.lt.s32.totalorder %v3335, %v3343
        %vm3370 = vcmp.lt.s32.totalorder %v3336, %v3343
        %vm3371 = vcmp.lt.s32.totalorder %v3337, %v3343
        %vm3372 = vcmp.lt.s32.totalorder %v3338, %v3343
        %vm3373 = vcmp.lt.s32.totalorder %v3339, %v3343
        %vm3374 = vcmp.lt.s32.totalorder %v3340, %v3343
        %vm3375 = vcmp.lt.s32.totalorder %v3341, %v3343
        %v3376 = vsel %vm3344, %v3018, -inf
        %v3377 = vsel %vm3345, %v3019, -inf
        %v3378 = vsel %vm3346, %v3020, -inf
        %v3379 = vsel %vm3347, %v3021, -inf
        %v3380 = vsel %vm3348, %v3022, -inf
        %v3381 = vsel %vm3349, %v3023, -inf
        %v3382 = vsel %vm3350, %v3024, -inf
        %v3383 = vsel %vm3351, %v3025, -inf
        %v3384 = vsel %vm3352, %v3026, -inf
        %v3385 = vsel %vm3353, %v3027, -inf
        %v3386 = vsel %vm3354, %v3028, -inf
        %v3387 = vsel %vm3355, %v3029, -inf
        %v3388 = vsel %vm3356, %v3030, -inf
        %v3389 = vsel %vm3357, %v3031, -inf
        %v3390 = vsel %vm3358, %v3032, -inf
        %v3391 = vsel %vm3359, %v3033, -inf
        %v3392 = vsel %vm3360, %v3034, -inf
        %v3393 = vsel %vm3361, %v3035, -inf
        %v3394 = vsel %vm3362, %v3036, -inf
        %v3395 = vsel %vm3363, %v3037, -inf
        %v3396 = vsel %vm3364, %v3038, -inf
        %v3397 = vsel %vm3365, %v3039, -inf
        %v3398 = vsel %vm3366, %v3040, -inf
        %v3399 = vsel %vm3367, %v3041, -inf
        %v3400 = vsel %vm3368, %v3042, -inf
        %v3401 = vsel %vm3369, %v3043, -inf
        %v3402 = vsel %vm3370, %v3044, -inf
        %v3403 = vsel %vm3371, %v3045, -inf
        %v3404 = vsel %vm3372, %v3046, -inf
        %v3405 = vsel %vm3373, %v3047, -inf
        %v3406 = vsel %vm3374, %v3048, -inf
        %v3407 = vsel %vm3375, %v3049, -inf
        %v3408 = vld [vmem:[#allocation4] sm:$0x1]
        %v3409 = vmax.f32 %v3376, %v3380
        %v3410 = vmax.f32 %v3377, %v3381
        %v3411 = vmax.f32 %v3378, %v3382
        %v3412 = vmax.f32 %v3379, %v3383
        %v3413 = vmax.f32 %v3409, %v3384
        %v3414 = vmax.f32 %v3410, %v3385
        %v3415 = vmax.f32 %v3411, %v3386
        %v3416 = vmax.f32 %v3412, %v3387
        %v3417 = vmax.f32 %v3413, %v3388
        %v3418 = vmax.f32 %v3414, %v3389
        %v3419 = vmax.f32 %v3415, %v3390
        %v3420 = vmax.f32 %v3416, %v3391
        %v3421 = vmax.f32 %v3417, %v3392
        %v3422 = vmax.f32 %v3418, %v3393
        %v3423 = vmax.f32 %v3419, %v3394
        %v3424 = vmax.f32 %v3420, %v3395
        %v3425 = vmax.f32 %v3421, %v3396
        %v3426 = vmax.f32 %v3422, %v3397
        %v3427 = vmax.f32 %v3423, %v3398
        %v3428 = vmax.f32 %v3424, %v3399
        %v3429 = vmax.f32 %v3425, %v3400
        %v3430 = vmax.f32 %v3426, %v3401
        %v3431 = vmax.f32 %v3427, %v3402
        %v3432 = vmax.f32 %v3428, %v3403
        %v3433 = vmax.f32 %v3429, %v3404
        %v3434 = vmax.f32 %v3430, %v3405
        %v3435 = vmax.f32 %v3431, %v3406
        %v3436 = vmax.f32 %v3432, %v3407
        %v3437 = vmax.f32 %v3433, %v3434
        %v3438 = vmax.f32 %v3435, %v3436
        %v3439 = vmax.f32 %v3437, %v3438
        %v3440 = vrot.slane %v3439, 4
        %v3441 = vmax.f32 %v3439, %v3440
        %v3442 = vrot.slane %v3441, 2
        %v3443 = vmax.f32 %v3441, %v3442
        %v3444 = vrot.slane %v3443, 1
        %v3445 = vmax.f32 %v3443, %v3444
        %v3446 = vmax.f32 %v3408, %v3445
        %v3447 = vsub.f32 %v3408, %v3446
        %v3448 = vmul.f32 %v3447, 1.442695
        %v3449 = vpow.pop %v3448
        %v3451 = vlaneseq
        %v3452 = vshrl.u32 %v3451, 7
        %v3453 = vsub.s32 0, %v3452
        %v3454 = vrot.slane %v3446, %v3453
        %v3456 = vsub.f32 %v3376, %v3454
        %v3457 = vsub.f32 %v3377, %v3454
        %v3458 = vsub.f32 %v3378, %v3454
        %v3459 = vsub.f32 %v3379, %v3454
        %v3460 = vsub.f32 %v3380, %v3454
        %v3461 = vsub.f32 %v3381, %v3454
        %v3462 = vsub.f32 %v3382, %v3454
        %v3463 = vsub.f32 %v3383, %v3454
        %v3464 = vsub.f32 %v3384, %v3454
        %v3465 = vsub.f32 %v3385, %v3454
        %v3466 = vsub.f32 %v3386, %v3454
        %v3467 = vsub.f32 %v3387, %v3454
        %v3468 = vsub.f32 %v3388, %v3454
        %v3469 = vsub.f32 %v3389, %v3454
        %v3470 = vsub.f32 %v3390, %v3454
        %v3471 = vsub.f32 %v3391, %v3454
        %v3472 = vsub.f32 %v3392, %v3454
        %v3473 = vsub.f32 %v3393, %v3454
        %v3474 = vsub.f32 %v3394, %v3454
        %v3475 = vsub.f32 %v3395, %v3454
        %v3476 = vsub.f32 %v3396, %v3454
        %v3477 = vsub.f32 %v3397, %v3454
        %v3478 = vsub.f32 %v3398, %v3454
        %v3479 = vsub.f32 %v3399, %v3454
        %v3480 = vsub.f32 %v3400, %v3454
        %v3481 = vsub.f32 %v3401, %v3454
        %v3482 = vsub.f32 %v3402, %v3454
        %v3483 = vsub.f32 %v3403, %v3454
        %v3484 = vsub.f32 %v3404, %v3454
        %v3485 = vsub.f32 %v3405, %v3454
        %v3486 = vsub.f32 %v3406, %v3454
        %v3487 = vsub.f32 %v3407, %v3454
        %v3488 = vmul.f32 %v3456, 1.442695
        %v3489 = vpow.pop %v3488
        %v3490 = vmul.f32 %v3457, 1.442695
        %v3491 = vpow.pop %v3490
        %v3492 = vmul.f32 %v3458, 1.442695
        %v3493 = vpow.pop %v3492
        %v3494 = vmul.f32 %v3459, 1.442695
        %v3495 = vpow.pop %v3494
        %v3496 = vmul.f32 %v3460, 1.442695
        %v3497 = vpow.pop %v3496
        %v3498 = vmul.f32 %v3461, 1.442695
        %v3499 = vpow.pop %v3498
        %v3500 = vmul.f32 %v3462, 1.442695
        %v3501 = vpow.pop %v3500
        %v3502 = vmul.f32 %v3463, 1.442695
        %v3503 = vpow.pop %v3502
        %v3504 = vmul.f32 %v3464, 1.442695
        %v3505 = vpow.pop %v3504
        %v3506 = vmul.f32 %v3465, 1.442695
        %v3507 = vpow.pop %v3506
        %v3508 = vmul.f32 %v3466, 1.442695
        %v3509 = vpow.pop %v3508
        %v3510 = vmul.f32 %v3467, 1.442695
        %v3511 = vpow.pop %v3510
        %v3512 = vmul.f32 %v3468, 1.442695
        %v3513 = vpow.pop %v3512
        %v3514 = vmul.f32 %v3469, 1.442695
        %v3515 = vpow.pop %v3514
        %v3516 = vmul.f32 %v3470, 1.442695
        %v3517 = vpow.pop %v3516
        %v3518 = vmul.f32 %v3471, 1.442695
        %v3519 = vpow.pop %v3518
        %v3520 = vmul.f32 %v3472, 1.442695
        %v3521 = vpow.pop %v3520
        %v3522 = vmul.f32 %v3473, 1.442695
        %v3523 = vpow.pop %v3522
        %v3524 = vmul.f32 %v3474, 1.442695
        %v3525 = vpow.pop %v3524
        %v3526 = vmul.f32 %v3475, 1.442695
        %v3527 = vpow.pop %v3526
        %v3528 = vmul.f32 %v3476, 1.442695
        %v3529 = vpow.pop %v3528
        %v3530 = vmul.f32 %v3477, 1.442695
        %v3531 = vpow.pop %v3530
        %v3532 = vmul.f32 %v3478, 1.442695
        %v3533 = vpow.pop %v3532
        %v3534 = vmul.f32 %v3479, 1.442695
        %v3535 = vpow.pop %v3534
        %v3536 = vmul.f32 %v3480, 1.442695
        %v3537 = vpow.pop %v3536
        %v3538 = vmul.f32 %v3481, 1.442695
        %v3539 = vpow.pop %v3538
        %v3540 = vmul.f32 %v3482, 1.442695
        %v3541 = vpow.pop %v3540
        %v3542 = vmul.f32 %v3483, 1.442695
        %v3543 = vpow.pop %v3542
        %v3544 = vmul.f32 %v3484, 1.442695
        %v3545 = vpow.pop %v3544
        %v3546 = vmul.f32 %v3485, 1.442695
        %v3547 = vpow.pop %v3546
        %v3548 = vmul.f32 %v3486, 1.442695
        %v3549 = vpow.pop %v3548
        %v3550 = vmul.f32 %v3487, 1.442695
        %v3551 = vpow.pop %v3550
        %v3552 = vpack.c.bf16 %v3491, %v3489
        %v3553 = vpack.c.bf16 %v3495, %v3493
        %v3554 = vpack.c.bf16 %v3499, %v3497
        %v3555 = vpack.c.bf16 %v3503, %v3501
        %v3556 = vpack.c.bf16 %v3507, %v3505
        %v3557 = vpack.c.bf16 %v3511, %v3509
        %v3558 = vpack.c.bf16 %v3515, %v3513
        %v3559 = vpack.c.bf16 %v3519, %v3517
        %v3560 = vpack.c.bf16 %v3523, %v3521
        %v3561 = vpack.c.bf16 %v3527, %v3525
        %v3562 = vpack.c.bf16 %v3531, %v3529
        %v3563 = vpack.c.bf16 %v3535, %v3533
        %v3564 = vpack.c.bf16 %v3539, %v3537
        %v3565 = vpack.c.bf16 %v3543, %v3541
        %v3566 = vpack.c.bf16 %v3547, %v3545
        %v3567 = vpack.c.bf16 %v3551, %v3549
        %vm3568 = vcmask 0
        %3569 = vst.msk [vmem:[#allocation4] sm:$0x1] %vm3568, %v3446
        %v3570 = vld [vmem:[#allocation5] sm:$0x1]
        %v3571 = vmul.f32 %v3449, %v3570
        %v3572 = vsel %vm3050, %v3489, 0.0
        %v3573 = vsel %vm3050, %v3491, 0.0
        %v3574 = vadd.f32 %v3572, %v3573
        %v3575 = vsel %vm3050, %v3493, 0.0
        %v3576 = vadd.f32 %v3574, %v3575
        %v3577 = vsel %vm3050, %v3495, 0.0
        %v3578 = vadd.f32 %v3576, %v3577
        %v3579 = vsel %vm3050, %v3497, 0.0
        %v3580 = vadd.f32 %v3578, %v3579
        %v3581 = vsel %vm3050, %v3499, 0.0
        %v3582 = vadd.f32 %v3580, %v3581
        %v3583 = vsel %vm3050, %v3501, 0.0
        %v3584 = vadd.f32 %v3582, %v3583
        %v3585 = vsel %vm3050, %v3503, 0.0
        %v3586 = vadd.f32 %v3584, %v3585
        %v3587 = vsel %vm3050, %v3505, 0.0
        %v3588 = vadd.f32 %v3586, %v3587
        %v3589 = vsel %vm3050, %v3507, 0.0
        %v3590 = vadd.f32 %v3588, %v3589
        %v3591 = vsel %vm3050, %v3509, 0.0
        %v3592 = vadd.f32 %v3590, %v3591
        %v3593 = vsel %vm3050, %v3511, 0.0
        %v3594 = vadd.f32 %v3592, %v3593
        %v3595 = vsel %vm3050, %v3513, 0.0
        %v3596 = vadd.f32 %v3594, %v3595
        %v3597 = vsel %vm3050, %v3515, 0.0
        %v3598 = vadd.f32 %v3596, %v3597
        %v3599 = vsel %vm3050, %v3517, 0.0
        %v3600 = vadd.f32 %v3598, %v3599
        %v3601 = vsel %vm3050, %v3519, 0.0
        %v3602 = vadd.f32 %v3600, %v3601
        %v3603 = vsel %vm3050, %v3521, 0.0
        %v3604 = vadd.f32 %v3602, %v3603
        %v3605 = vsel %vm3050, %v3523, 0.0
        %v3606 = vadd.f32 %v3604, %v3605
        %v3607 = vsel %vm3050, %v3525, 0.0
        %v3608 = vadd.f32 %v3606, %v3607
        %v3609 = vsel %vm3050, %v3527, 0.0
        %v3610 = vadd.f32 %v3608, %v3609
        %v3611 = vsel %vm3050, %v3529, 0.0
        %v3612 = vadd.f32 %v3610, %v3611
        %v3613 = vsel %vm3050, %v3531, 0.0
        %v3614 = vadd.f32 %v3612, %v3613
        %v3615 = vsel %vm3050, %v3533, 0.0
        %v3616 = vadd.f32 %v3614, %v3615
        %v3617 = vsel %vm3050, %v3535, 0.0
        %v3618 = vadd.f32 %v3616, %v3617
        %v3619 = vsel %vm3050, %v3537, 0.0
        %v3620 = vadd.f32 %v3618, %v3619
        %v3621 = vsel %vm3050, %v3539, 0.0
        %v3622 = vadd.f32 %v3620, %v3621
        %v3623 = vsel %vm3050, %v3541, 0.0
        %v3624 = vadd.f32 %v3622, %v3623
        %v3625 = vsel %vm3050, %v3543, 0.0
        %v3626 = vadd.f32 %v3624, %v3625
        %v3627 = vsel %vm3050, %v3545, 0.0
        %v3628 = vadd.f32 %v3626, %v3627
        %v3629 = vsel %vm3050, %v3547, 0.0
        %v3630 = vadd.f32 %v3628, %v3629
        %v3631 = vsel %vm3050, %v3549, 0.0
        %v3632 = vadd.f32 %v3630, %v3631
        %v3633 = vsel %vm3050, %v3551, 0.0
        %v3634 = vadd.f32 %v3632, %v3633
        %v3635 = vrot.slane %v3634, 4
        %v3636 = vadd.f32 %v3634, %v3635
        %v3637 = vrot.slane %v3636, 2
        %v3638 = vadd.f32 %v3636, %v3637
        %v3639 = vrot.slane %v3638, 1
        %v3640 = vadd.f32 %v3638, %v3639
        %v3641 = vadd.f32 %v3571, %v3640
        %3642 = vst.msk [vmem:[#allocation5] sm:$0x1] %vm3568, %v3641
        %v3643 = vld [vmem:[#allocation2] sm:$0x7]
        %3645 = vset.pattern.permute.xlu0 0
        %3646 = vperm.xlu0 %3645, %v3449
        %v3647 = vpop.permute.xlu0 %3646
        %v3649 = vlaneseq
        %v3650 = vshrl.u32 %v3649, 7
        %v3651 = vsub.s32 0, %v3650
        %v3652 = vrot.slane %v3647, %v3651
        %v3653 = vmul.f32 %v3652, %v3643
        %3654 = vxpose.xlu0.c.b16.start [1/8] %v3552, 128
        %3655 = vxpose.xlu0.c.b16.cont [2/8] %v3553, 128
        %3656 = vxpose.xlu0.c.b16.cont [3/8] %v3554, 128
        %3657 = vxpose.xlu0.c.b16.cont [4/8] %v3555, 128
        %3658 = vxpose.xlu0.c.b16.cont [5/8] %v3556, 128
        %3659 = vxpose.xlu0.c.b16.cont [6/8] %v3557, 128
        %3660 = vxpose.xlu0.c.b16.cont [7/8] %v3558, 128
        %3661 = vxpose.xlu0.c.b16.end [8/8] %v3559, 128
        %v3662 = vpop.trf.xlu0
        %v3663 = vpop.trf.xlu0
        %v3664 = vpop.trf.xlu0
        %v3665 = vpop.trf.xlu0
        %v3666 = vpop.trf.xlu0
        %v3667 = vpop.trf.xlu0
        %v3668 = vpop.trf.xlu0
        %v3669 = vpop.trf.xlu0
        %3670 = vxpose.xlu0.c.b16.start [1/8] %v3560, 128
        %3671 = vxpose.xlu0.c.b16.cont [2/8] %v3561, 128
        %3672 = vxpose.xlu0.c.b16.cont [3/8] %v3562, 128
        %3673 = vxpose.xlu0.c.b16.cont [4/8] %v3563, 128
        %3674 = vxpose.xlu0.c.b16.cont [5/8] %v3564, 128
        %3675 = vxpose.xlu0.c.b16.cont [6/8] %v3565, 128
        %3676 = vxpose.xlu0.c.b16.cont [7/8] %v3566, 128
        %3677 = vxpose.xlu0.c.b16.end [8/8] %v3567, 128
        %v3678 = vpop.trf.xlu0
        %v3679 = vpop.trf.xlu0
        %v3680 = vpop.trf.xlu0
        %v3681 = vpop.trf.xlu0
        %v3682 = vpop.trf.xlu0
        %v3683 = vpop.trf.xlu0
        %v3684 = vpop.trf.xlu0
        %v3685 = vpop.trf.xlu0
        %3686 = vmatprep.subr.bf16.mxu0 %v744
        %3687 = vmatpush1.bf16.msra.mxu0 %v743
        %3688 = vmatprep.subr.bf16.mxu0 %v741
        %3689 = vmatpush1.bf16.msra.mxu0 %v740
        %3690 = vmatprep.subr.bf16.mxu0 %v738
        %3691 = vmatpush1.bf16.msra.mxu0 %v737
        %3692 = vmatprep.subr.bf16.mxu0 %v735
        %3693 = vmatpush1.bf16.msra.mxu0 %v734
        %3694 = vmatprep.subr.bf16.mxu0 %v732
        %3695 = vmatpush1.bf16.msra.mxu0 %v731
        %3696 = vmatprep.subr.bf16.mxu0 %v729
        %3697 = vmatpush1.bf16.msra.mxu0 %v728
        %3698 = vmatprep.subr.bf16.mxu0 %v726
        %3699 = vmatpush1.bf16.msra.mxu0 %v725
        %3700 = vmatprep.subr.bf16.mxu0 %v723
        %3701 = vmatpush1.bf16.msra.mxu0 %v722
        %3702 = vmatprep.subr.bf16.mxu0 %v768
        %3703 = vmatpush2.bf16.msra.mxu0 %v767
        %3704 = vmatprep.subr.bf16.mxu0 %v765
        %3705 = vmatpush2.bf16.msra.mxu0 %v764
        %3706 = vmatprep.subr.bf16.mxu0 %v762
        %3707 = vmatpush2.bf16.msra.mxu0 %v761
        %3708 = vmatprep.subr.bf16.mxu0 %v759
        %3709 = vmatpush2.bf16.msra.mxu0 %v758
        %3710 = vmatprep.subr.bf16.mxu0 %v756
        %3711 = vmatpush2.bf16.msra.mxu0 %v755
        %3712 = vmatprep.subr.bf16.mxu0 %v753
        %3713 = vmatpush2.bf16.msra.mxu0 %v752
        %3714 = vmatprep.subr.bf16.mxu0 %v750
        %3715 = vmatpush2.bf16.msra.mxu0 %v749
        %3716 = vmatprep.subr.bf16.mxu0 %v747
        %3717 = vmatpush2.bf16.msra.mxu0 %v746
        %3718 = vmatprep.mubr.bf16.mxu0 %v3678
        %3719 = vmatmul.mubr.bf16.gmra.mxu0 %v3662
        %v3720 = vpop.f32.mrf.mxu0
        %v3721 = vadd.f32 0.0, %v3720
        %v3722 = vpop.f32.mrf.mxu0
        %v3723 = vadd.f32 0.0, %v3722
        %v3724 = vpop.f32.mrf.mxu0
        %v3725 = vpop.f32.mrf.mxu0
        %3726 = vdwg.mxu0
        %3727 = vmatprep.subr.bf16.mxu0 0
        %3728 = vmatpush1.bf16.msra.mxu0 %v745
        %3729 = vmatprep.subr.bf16.mxu0 0
        %3730 = vmatpush1.bf16.msra.mxu0 %v742
        %3731 = vmatprep.subr.bf16.mxu0 0
        %3732 = vmatpush1.bf16.msra.mxu0 %v739
        %3733 = vmatprep.subr.bf16.mxu0 0
        %3734 = vmatpush1.bf16.msra.mxu0 %v736
        %3735 = vmatprep.subr.bf16.mxu0 0
        %3736 = vmatpush1.bf16.msra.mxu0 %v733
        %3737 = vmatprep.subr.bf16.mxu0 0
        %3738 = vmatpush1.bf16.msra.mxu0 %v730
        %3739 = vmatprep.subr.bf16.mxu0 0
        %3740 = vmatpush1.bf16.msra.mxu0 %v727
        %3741 = vmatprep.subr.bf16.mxu0 0
        %3742 = vmatpush1.bf16.msra.mxu0 %v724
        %3743 = vmatprep.subr.bf16.mxu0 0
        %3744 = vmatpush2.bf16.msra.mxu0 %v769
        %3745 = vmatprep.subr.bf16.mxu0 0
        %3746 = vmatpush2.bf16.msra.mxu0 %v766
        %3747 = vmatprep.subr.bf16.mxu0 0
        %3748 = vmatpush2.bf16.msra.mxu0 %v763
        %3749 = vmatprep.subr.bf16.mxu0 0
        %3750 = vmatpush2.bf16.msra.mxu0 %v760
        %3751 = vmatprep.subr.bf16.mxu0 0
        %3752 = vmatpush2.bf16.msra.mxu0 %v757
        %3753 = vmatprep.subr.bf16.mxu0 0
        %3754 = vmatpush2.bf16.msra.mxu0 %v754
        %3755 = vmatprep.subr.bf16.mxu0 0
        %3756 = vmatpush2.bf16.msra.mxu0 %v751
        %3757 = vmatprep.subr.bf16.mxu0 0
        %3758 = vmatpush2.bf16.msra.mxu0 %v748
        %3759 = vmatprep.mubr.bf16.mxu0 %v3678
        %3760 = vmatmul.mubr.bf16.gmra.mxu0 %v3662
        %v3761 = vpop.f32.mrf.mxu0
        %v3762 = vadd.f32 0.0, %v3761
        %v3763 = vpop.f32.mrf.mxu0
        %v3764 = vpop.f32.mrf.mxu0
        %v3765 = vpop.f32.mrf.mxu0
        %3766 = vdwg.mxu0
        %v3770 = vcombine.low %v3721, %v3723
        %v3772 = vunpack.c.l.s4 1966171168
        %v3773 = vunpack.c.0.s8 %v3772
        %v3774 = vlaneseq
        %v3775 = vshrl.u32 %v3774, 7
        %v3776 = vsub.s32 %v3773, %v3775
        %v3777 = vrot.slane %v3770, %v3776
        %v3779 = vunpack.c.l.s4 1966171168
        %v3780 = vunpack.c.0.s8 %v3779
        %v3781 = vlaneseq
        %v3782 = vshrl.u32 %v3781, 7
        %v3783 = vsub.s32 %v3780, %v3782
        %v3784 = vrot.slane %v3762, %v3783
        %v3785 = vcombine.low %v3777, %v3784
        %v3787 = vunpack.c.l.s4 1966171168
        %v3788 = vunpack.c.0.s8 %v3787
        %v3789 = vlaneseq
        %v3790 = vshrl.u32 %v3789, 7
        %v3791 = vsub.s32 %v3788, %v3790
        %v3792 = vrot.slane %v3785, %v3791
        %v3794 = vadd.f32 %v3653, %v3792
        %v3795 = vlaneseq
        %vm3796 = vcmp.ge.s32.totalorder %v3795, 0
        %vm3797 = vcmp.lt.s32.totalorder %v3795, 384
        %vm3798 = vmand %vm3796, %vm3797
        %3799 = vst.msk [vmem:[#allocation2] sm:$0x7] %vm3798, %v3794
        %v3800 = vld [vmem:[#allocation3] sm:$0x3]
        %v3801 = vmul.f32 %v3652, %v3800
        %3802 = vmatprep.subr.bf16.mxu0 %v1523
        %3803 = vmatpush1.bf16.msra.mxu0 %v1522
        %3804 = vmatprep.subr.bf16.mxu0 %v1521
        %3805 = vmatpush1.bf16.msra.mxu0 %v1520
        %3806 = vmatprep.subr.bf16.mxu0 %v1519
        %3807 = vmatpush1.bf16.msra.mxu0 %v1518
        %3808 = vmatprep.subr.bf16.mxu0 %v1517
        %3809 = vmatpush1.bf16.msra.mxu0 %v1516
        %3810 = vmatprep.subr.bf16.mxu0 %v1515
        %3811 = vmatpush1.bf16.msra.mxu0 %v1514
        %3812 = vmatprep.subr.bf16.mxu0 %v1513
        %3813 = vmatpush1.bf16.msra.mxu0 %v1512
        %3814 = vmatprep.subr.bf16.mxu0 %v1511
        %3815 = vmatpush1.bf16.msra.mxu0 %v1510
        %3816 = vmatprep.subr.bf16.mxu0 %v1509
        %3817 = vmatpush1.bf16.msra.mxu0 %v1508
        %3818 = vmatprep.subr.bf16.mxu0 %v1539
        %3819 = vmatpush2.bf16.msra.mxu0 %v1538
        %3820 = vmatprep.subr.bf16.mxu0 %v1537
        %3821 = vmatpush2.bf16.msra.mxu0 %v1536
        %3822 = vmatprep.subr.bf16.mxu0 %v1535
        %3823 = vmatpush2.bf16.msra.mxu0 %v1534
        %3824 = vmatprep.subr.bf16.mxu0 %v1533
        %3825 = vmatpush2.bf16.msra.mxu0 %v1532
        %3826 = vmatprep.subr.bf16.mxu0 %v1531
        %3827 = vmatpush2.bf16.msra.mxu0 %v1530
        %3828 = vmatprep.subr.bf16.mxu0 %v1529
        %3829 = vmatpush2.bf16.msra.mxu0 %v1528
        %3830 = vmatprep.subr.bf16.mxu0 %v1527
        %3831 = vmatpush2.bf16.msra.mxu0 %v1526
        %3832 = vmatprep.subr.bf16.mxu0 %v1525
        %3833 = vmatpush2.bf16.msra.mxu0 %v1524
        %3834 = vmatprep.mubr.bf16.mxu0 %v3678
        %3835 = vmatmul.mubr.bf16.gmra.mxu0 %v3662
        %v3836 = vpop.f32.mrf.mxu0
        %v3837 = vadd.f32 0.0, %v3836
        %v3838 = vpop.f32.mrf.mxu0
        %v3839 = vadd.f32 0.0, %v3838
        %v3840 = vpop.f32.mrf.mxu0
        %v3841 = vpop.f32.mrf.mxu0
        %3842 = vdwg.mxu0
        %v3845 = vcombine.low %v3837, %v3839
        %v3847 = vunpack.c.l.s4 1966171168
        %v3848 = vunpack.c.0.s8 %v3847
        %v3849 = vlaneseq
        %v3850 = vshrl.u32 %v3849, 7
        %v3851 = vsub.s32 %v3848, %v3850
        %v3852 = vrot.slane %v3845, %v3851
        %v3854 = vunpack.c.l.s4 1966171168
        %v3855 = vunpack.c.0.s8 %v3854
        %v3856 = vlaneseq
        %v3857 = vshrl.u32 %v3856, 7
        %v3858 = vsub.s32 %v3855, %v3857
        %v3859 = vrot.slane %v3852, %v3858
        %v3861 = vadd.f32 %v3801, %v3859
        %vm3862 = vcmp.lt.s32.totalorder %v3795, 256
        %vm3863 = vmand %vm3796, %vm3862
        %3864 = vst.msk [vmem:[#allocation3] sm:$0x3] %vm3863, %v3861
        %p3865 = scmp.eq.s32.totalorder %s33, 3
        // Predicated region
        $region65: #{tpu_custom_call.1} parent=47 // pred_check
          %p3866 = pneg %p3865
        $region66: #{tpu_custom_call.1} parent=47 // pred_check_branch
          %3868 = sbr.rel (%p3866) target = $region68
        $region67: #{tpu_custom_call.1} parent=47 // pred_region
          %v3869 = vld [vmem:[#allocation5] sm:$0x1]
          %v3870 = vrcp.pop %v3869
          %v3871 = vld [vmem:[#allocation2] sm:$0x7]
          %3873 = vset.pattern.permute.xlu0 0
          %3874 = vperm.xlu0 %3873, %v3870
          %v3875 = vpop.permute.xlu0 %3874
          %v3877 = vlaneseq
          %v3878 = vshrl.u32 %v3877, 7
          %v3879 = vsub.s32 0, %v3878
          %v3880 = vrot.slane %v3875, %v3879
          %v3881 = vmul.f32 %v3871, %v3880
          %3882 = vst.msk [vmem:[#allocation16] sm:$0x7] %vm3798, %v3881
          %v3883 = vld [vmem:[#allocation3] sm:$0x3]
          %v3884 = vmul.f32 %v3883, %v3880
          %3885 = vst.msk [vmem:[#allocation18] sm:$0x3] %vm3863, %v3884
        $region68: #{tpu_custom_call.1} parent=47 // pred_fallthru
          _
        %s3886 = smul.u32 32, %s33
        %p3887 = scmp.lt.s32.totalorder %s3886, 127
        %s3888 = scalar_select %p3887, %s3886, 127
        %s3889 = smul.addr %s3888, 8
        %s3890 = scalar_lea.vmem %s8, %s3889
        %s3891 = sand.u32 %s219, 1
        %s3892 = scalar_lea.sflag [#allocation11], %s3891
        %s3893 = sand.u32 %s219, 1
        %s3894 = smul.addr %s3893, 256
        %s3895 = scalar_lea.vmem [#allocation15], %s3894
        // Predicated region
        $region69: #{tpu_custom_call.1} parent=47 // pred_check
          %p3896 = pneg %p203
        $region70: #{tpu_custom_call.1} parent=47 // pred_check_branch
          %3898 = sbr.rel (%p3896) target = $region72
        $region71: #{tpu_custom_call.1} parent=47 // pred_region
          %s3899 = smul.u32 32, %s33
        $region72: #{tpu_custom_call.1} parent=47 // pred_fallthru
          _
        // Predicated region
        $region73: #{tpu_custom_call.1} parent=47 // pred_check
          %p3900 = pneg %p229
        $region74: #{tpu_custom_call.1} parent=47 // pred_check_branch
          %3902 = sbr.rel (%p3900) target = $region76
        $region75: #{tpu_custom_call.1} parent=47 // pred_region
          %s3903 = smul.u32 32, %s33
          %s3905 = ssub.s32 4096, 4096
          %3906 = vsyncadd %s3892, %s3905
          %s3907 = smul.addr %s3903, 2
          %s3908 = smul.addr %s3907, 64
          %s3909 = scalar_lea.hbm %s9, %s3908
          %s3910 = sshll.u32 %s3895, 4
          %s3911 = int_to_ptr.vmem [resolvable:$true] %s3910
          %3916 = dma.vmem_to_hbm [thread:$0]  %s3911, 4096, %s3909, %s3892, 128, 128, 8
        $region76: #{tpu_custom_call.1} parent=47 // pred_fallthru
          _
        // Predicated region
        $region77: #{tpu_custom_call.1} parent=47 // pred_check
          %p3917 = pneg %p250
        $region78: #{tpu_custom_call.1} parent=47 // pred_check_branch
          %3919 = sbr.rel (%p3917) target = $region80
        $region79: #{tpu_custom_call.1} parent=47 // pred_region
          %s3921 = ssub.s32 48, 48
          %3922 = vsyncadd [#allocation17], %s3921
          %s3924 = sshll.u32 [#allocation16], 4
          %s3925 = int_to_ptr.vmem [resolvable:$true] %s3924
          %3927 = dma.vmem_to_hbm [thread:$0]  %s3925, 48, %s10, [#allocation17]
        $region80: #{tpu_custom_call.1} parent=47 // pred_fallthru
          _
        // Predicated region
        $region81: #{tpu_custom_call.1} parent=47 // pred_check
          %p3928 = pneg %p271
        $region82: #{tpu_custom_call.1} parent=47 // pred_check_branch
          %3930 = sbr.rel (%p3928) target = $region84
        $region83: #{tpu_custom_call.1} parent=47 // pred_region
          %s3932 = ssub.s32 32, 32
          %3933 = vsyncadd [#allocation17], %s3932
          %s3935 = sshll.u32 [#allocation18], 4
          %s3936 = int_to_ptr.vmem [resolvable:$true] %s3935
          %3938 = dma.vmem_to_hbm [thread:$0]  %s3936, 32, %s11, [#allocation17]
        $region84: #{tpu_custom_call.1} parent=47 // pred_fallthru
          _
        // Predicated region
        $region85: #{tpu_custom_call.1} parent=47 // pred_check
          %p3939 = pneg %p250
        $region86: #{tpu_custom_call.1} parent=47 // pred_check_branch
          %3941 = sbr.rel (%p3939) target = $region88
        $region87: #{tpu_custom_call.1} parent=47 // pred_region
          %3942 = dma.done [#allocation17], 48
        $region88: #{tpu_custom_call.1} parent=47 // pred_fallthru
          _
        // Predicated region
        $region89: #{tpu_custom_call.1} parent=47 // pred_check
          %p3943 = pneg %p271
        $region90: #{tpu_custom_call.1} parent=47 // pred_check_branch
          %3945 = sbr.rel (%p3943) target = $region92
        $region91: #{tpu_custom_call.1} parent=47 // pred_region
          %3946 = dma.done [#allocation17], 32
        $region92: #{tpu_custom_call.1} parent=47 // pred_fallthru
          _
      $region48: #{tpu_custom_call.1} parent=5 // pred_fallthru
        _
      %p3947 = scmp.le.s32.totalorder 2, %s28
      // Predicated region
      $region93: #{tpu_custom_call.1} parent=5 // pred_check
        %p3948 = pneg %p3947
      $region94: #{tpu_custom_call.1} parent=5 // pred_check_branch
        %3950 = sbr.rel (%p3948) target = $region96
      $region95: #{tpu_custom_call.1} parent=5 // pred_region
        %s3951 = ssub.s32 %s28, 2
        // Predicated region
        $region97: #{tpu_custom_call.1} parent=95 // pred_check
          %p3952 = pneg %p209
        $region98: #{tpu_custom_call.1} parent=95 // pred_check_branch
          %3954 = sbr.rel (%p3952) target = $region100
        $region99: #{tpu_custom_call.1} parent=95 // pred_region
          %s3955 = smul.u32 32, %s34
          %p3956 = scmp.lt.s32.totalorder %s3955, 127
          %s3957 = scalar_select %p3956, %s3955, 127
          %s3958 = smul.addr %s3957, 8
          %s3959 = scalar_lea.vmem %s8, %s3958
        $region100: #{tpu_custom_call.1} parent=95 // pred_fallthru
          _
        // Predicated region
        $region101: #{tpu_custom_call.1} parent=95 // pred_check
          %p3960 = pneg %p235
        $region102: #{tpu_custom_call.1} parent=95 // pred_check_branch
          %3962 = sbr.rel (%p3960) target = $region104
        $region103: #{tpu_custom_call.1} parent=95 // pred_region
          %s3963 = sand.u32 %s220, 1
          %s3964 = scalar_lea.sflag [#allocation11], %s3963
          %s3965 = sand.u32 %s220, 1
          %s3966 = smul.addr %s3965, 256
          %s3967 = scalar_lea.vmem [#allocation15], %s3966
          %3968 = dma.done %s3964, 4096
        $region104: #{tpu_custom_call.1} parent=95 // pred_fallthru
          _
      $region96: #{tpu_custom_call.1} parent=5 // pred_fallthru
        _
    $region6: #{tpu_custom_call.1} parent=1 // loop_footer
      %s32 = sadd.s32 1, %s28
    $region7: #{tpu_custom_call.1} parent=1 // loop_footer_branch
      %27 = sbr.rel target = $region3
    $region8: #{tpu_custom_call.1} parent=1 // loop_exit
      _
    %3969 = vsyncpa [#allocation10], 1
    %s3970 = scalar_lea.sflag [#allocation10], 1
    %3971 = vsyncpa %s3970, 1
    %3972 = vsyncpa [#allocation13], 1
    %3973 = vsyncpa [#allocation11], 1
    %s3974 = scalar_lea.sflag [#allocation11], 1
    %3975 = vsyncpa %s3974, 1
    %3976 = vsyncpa [#allocation17], 1

</llo_original>
